<compile_context>
chip_gen: v5e
topology: v5e:2x2
jax: 0.10.0
libtpu: 0.0.40
codegen_flags: <defaults>
</compile_context>

<pallas_src>
import functools

import jax
import jax.numpy as jnp
from jax import lax
from jax.experimental import pallas as pl
from jax.experimental.pallas import tpu as pltpu


_VMEM_LIMIT = 48 * 1024 * 1024   # > 16/32 MiB scoped defaults, < 64 MiB v7x physical


# ----------------------------------------------------------------------------
# Small helpers (wrapper side)
# ----------------------------------------------------------------------------

def _round_up(x, m):
    return ((x + m - 1) // m) * m


def _pad2(a, rows, cols):
    r, c = a.shape
    if r == rows and c == cols:
        return a
    return jnp.zeros((rows, cols), a.dtype).at[:r, :c].set(a)


def _pick_tile(n_pad, candidates=(512, 256, 128)):
    """Largest 128-multiple tile dividing n_pad, preferring >=2 grid steps
    (keeps the 'parallel' axis shardable across v7x's two TensorCores)."""
    for c in candidates:
        if n_pad % c == 0 and n_pad // c >= 2:
            return c
    for c in candidates:
        if n_pad % c == 0:
            return c
    return n_pad   # unreachable: n_pad is always a multiple of 128


def _pad_clusters(c, k_pad, nz_pad):
    c_pad = _pad2(c, k_pad, nz_pad)
    c_sq = jnp.sum(c_pad * c_pad, axis=1, keepdims=True).reshape(1, k_pad)
    return c_pad, c_sq


# ----------------------------------------------------------------------------
# In-kernel helpers
# ----------------------------------------------------------------------------

def _soft_assign_from_padded(z, c_pad, c_sq_row, inv_v, expo, n_clusters):
    """Student-t soft assignment, MXU-friendly distance form.

    z        : [TM, nz_pad]     latent rows (f32, zero in padded columns)
    c_pad    : [K_PAD, nz_pad]  cluster centers, zero-padded past n_clusters
    c_sq_row : [1, K_PAD]       precomputed ||c||^2 per (padded) cluster
    """
    cross = lax.dot_general(z, c_pad, (((1,), (1,)), ((), ())),
                            preferred_element_type=jnp.float32)     # [TM, K_PAD]
    z_sq = jnp.sum(z * z, axis=1, keepdims=True)                    # [TM, 1]
    dist2 = jnp.maximum(z_sq + c_sq_row - 2.0 * cross, 0.0)
    if inv_v != 1.0:
        dist2 = dist2 * inv_v
    # Student-t kernel term via the EUP reciprocal (free slot); exact division
    # is kept for the row normalization so rows still sum to 1 to f32 rounding.
    q = pl.reciprocal(1.0 + dist2, approx=True)
    if expo != 1.0:          # v == 1 -> exponent is exactly 1: skip exp/log pair
        q = q ** expo
    k_pad = c_pad.shape[0]
    if n_clusters < k_pad:   # mask padded clusters before row normalization
        col = lax.broadcasted_iota(jnp.int32, q.shape, 1)
        q = jnp.where(col < n_clusters, q, 0.0)
    return q / jnp.sum(q, axis=1, keepdims=True)


# ----------------------------------------------------------------------------
# Kernels
# ----------------------------------------------------------------------------

def _ae_kernel(x_ref, w1_ref, b1_ref, w2_ref, b2_ref, w3_ref, b3_ref,
               w4_ref, b4_ref, c_ref, csq_ref, gc1w_ref,
               xbar_ref, dz_ref, q_ref, sup1_ref, *, inv_v, expo, n_clusters):
    """Fused AE chain + q_dnn + GAE layer-1 feature transform on one row tile."""
    x = x_ref[...]                                                   # [TM, n_in]
    h = jnp.maximum(
        jnp.dot(x, w1_ref[...], preferred_element_type=jnp.float32) + b1_ref[...],
        0.0)
    dz = jnp.dot(h, w2_ref[...], preferred_element_type=jnp.float32) + b2_ref[...]
    hd = jnp.maximum(
        jnp.dot(dz, w3_ref[...], preferred_element_type=jnp.float32) + b3_ref[...],
        0.0)
    xbar = jnp.dot(hd, w4_ref[...], preferred_element_type=jnp.float32) + b4_ref[...]

    xbar_ref[...] = xbar.astype(xbar_ref.dtype)
    dz_ref[...] = dz.astype(dz_ref.dtype)
    q_ref[...] = _soft_assign_from_padded(
        dz, c_ref[...], csq_ref[...], inv_v, expo, n_clusters).astype(q_ref.dtype)
    # GAE layer-1 feature transform (x rows are already resident in VMEM here);
    # emitted in bf16 so kernel 2 streams half the bytes and hits the bf16 MXU.
    sup1_ref[...] = jnp.dot(
        x, gc1w_ref[...], preferred_element_type=jnp.float32).astype(sup1_ref.dtype)


def _gcn_agg1_kernel(adj_ref, sup1_ref, w2_ref, sup2_ref, acc_ref, *, tk):
    """support2[i] = relu( sum_k adj[i,k] @ support1[k] ) @ W2.

    adj is tiled (tm, tk) over a K-reduction grid axis; support1 is one
    VMEM-resident block (constant index_map) sliced with pl.ds per K step.
    """
    k = pl.program_id(1)

    @pl.when(k == 0)
    def _():
        acc_ref[...] = jnp.zeros_like(acc_ref)

    start = pl.multiple_of(k * tk, tk)
    acc_ref[...] += jnp.dot(adj_ref[...], sup1_ref[pl.ds(start, tk), :],
                            preferred_element_type=jnp.float32)

    @pl.when(k == pl.num_programs(1) - 1)
    def _():
        h1 = jnp.maximum(acc_ref[...], 0.0)                  # relu(adj @ (x @ W1))
        sup2_ref[...] = jnp.dot(
            h1, w2_ref[...], preferred_element_type=jnp.float32).astype(sup2_ref.dtype)


def _gcn_agg2_kernel(adj_ref, sup2_ref, c_ref, csq_ref, gz_ref, q_ref, acc_ref,
                     *, tk, inv_v, expo, n_clusters):
    """gz[i] = sum_k adj[i,k] @ support2[k]; q_gcn fused at the final K step."""
    k = pl.program_id(1)

    @pl.when(k == 0)
    def _():
        acc_ref[...] = jnp.zeros_like(acc_ref)

    start = pl.multiple_of(k * tk, tk)
    acc_ref[...] += jnp.dot(adj_ref[...], sup2_ref[pl.ds(start, tk), :],
                            preferred_element_type=jnp.float32)

    @pl.when(k == pl.num_programs(1) - 1)
    def _():
        gz = acc_ref[...]
        gz_ref[...] = gz.astype(gz_ref.dtype)
        q_ref[...] = _soft_assign_from_padded(
            gz, c_ref[...], csq_ref[...], inv_v, expo, n_clusters).astype(q_ref.dtype)


def _decoder_kernel(zi_ref, zj_ref, a_ref):
    """a_bar[i,j] = sigmoid(gz_i @ gz_j^T), contraction on last dims (no transpose)."""
    logits = lax.dot_general(zi_ref[...], zj_ref[...], (((1,), (1,)), ((), ())),
                             preferred_element_type=jnp.float32)
    a_ref[...] = jax.nn.sigmoid(logits).astype(a_ref.dtype)


# ----------------------------------------------------------------------------
# Wrapper
# ----------------------------------------------------------------------------

def dcp_dec_forward(x, adj, params, v=1.0):
    N, n_input = x.shape
    n_enc_1 = params["enc1_w"].shape[1]
    n_z = params["z_w"].shape[1]
    n_dec_1 = params["dec1_w"].shape[1]
    h1_dim = params["gc1_w"].shape[1]
    n_clusters = params["dnn_cluster"].shape[0]

    inv_v = 1.0 / float(v)
    expo = (float(v) + 1.0) / 2.0

    # 128-aligned padded sizes: clean (8,128) tiling + lane-dense output slabs.
    # Zero-padded weights keep the math exact; outputs are sliced back below.
    N_pad = _round_up(N, 128)
    nin_pad = _round_up(n_input, 128)
    nz_pad = _round_up(n_z, 128)
    h1_pad = _round_up(h1_dim, 128)
    k_pad = _round_up(n_clusters, 128)

    tm = _pick_tile(N_pad)       # row tile of x / adj / decoder output
    tk = tm                      # adj reduction tile

    # ---- wrapper-side padding / dtype staging -------------------------------
    x_p = _pad2(x, N_pad, n_input)                                    # f32
    adj_p = _pad2(adj, N_pad, N_pad).astype(jnp.bfloat16)             # bf16: halves N^2 traffic

    enc1_w, enc1_b = params["enc1_w"], params["enc1_b"]
    z_w = _pad2(params["z_w"], n_enc_1, nz_pad)
    z_b = _pad2(params["z_b"], 1, nz_pad)
    dec1_w = _pad2(params["dec1_w"], nz_pad, n_dec_1)
    dec1_b = params["dec1_b"]
    xbar_w = _pad2(params["xbar_w"], n_dec_1, nin_pad)
    xbar_b = _pad2(params["xbar_b"], 1, nin_pad)
    gc1_w = _pad2(params["gc1_w"], n_input, h1_pad)
    gc2_w = _pad2(params["gc2_w"], h1_pad, nz_pad)

    dnn_c_pad, dnn_c_sq = _pad_clusters(params["dnn_cluster"], k_pad, nz_pad)
    gcn_c_pad, gcn_c_sq = _pad_clusters(params["gcn_cluster"], k_pad, nz_pad)

    full = lambda i: (0, 0)
    row = lambda i: (i, 0)

    # ---- 1) fused AE + q_dnn + GAE layer-1 feature transform -----------------
    x_bar_p, dz_p, q_dnn_p, sup1 = pl.pallas_call(
        functools.partial(_ae_kernel, inv_v=inv_v, expo=expo, n_clusters=n_clusters),
        out_shape=[
            jax.ShapeDtypeStruct((N_pad, nin_pad), jnp.float32),   # x_bar (padded)
            jax.ShapeDtypeStruct((N_pad, nz_pad), jnp.float32),    # dz (padded)
            jax.ShapeDtypeStruct((N_pad, k_pad), jnp.float32),     # q_dnn (padded)
            jax.ShapeDtypeStruct((N_pad, h1_pad), jnp.bfloat16),   # support1 = x @ gc1_w
        ],
        grid_spec=pltpu.PrefetchScalarGridSpec(
            num_scalar_prefetch=0,
            grid=(N_pad // tm,),
            in_specs=[
                pl.BlockSpec((tm, n_input), row),               # x (streamed)
                pl.BlockSpec((n_input, n_enc_1), full),         # enc1_w (resident)
                pl.BlockSpec((1, n_enc_1), full),               # enc1_b
                pl.BlockSpec((n_enc_1, nz_pad), full),          # z_w
                pl.BlockSpec((1, nz_pad), full),                # z_b
                pl.BlockSpec((nz_pad, n_dec_1), full),          # dec1_w
                pl.BlockSpec((1, n_dec_1), full),               # dec1_b
                pl.BlockSpec((n_dec_1, nin_pad), full),         # xbar_w
                pl.BlockSpec((1, nin_pad), full),               # xbar_b
                pl.BlockSpec((k_pad, nz_pad), full),            # dnn clusters (padded)
                pl.BlockSpec((1, k_pad), full),                 # ||c||^2 row
                pl.BlockSpec((n_input, h1_pad), full),          # gc1_w
            ],
            out_specs=[
                pl.BlockSpec((tm, nin_pad), row),
                pl.BlockSpec((tm, nz_pad), row),
                pl.BlockSpec((tm, k_pad), row),
                pl.BlockSpec((tm, h1_pad), row),
            ],
        ),
        compiler_params=pltpu.CompilerParams(
            dimension_semantics=("parallel",),
            vmem_limit_bytes=_VMEM_LIMIT),
    )(x_p, enc1_w, enc1_b, z_w, z_b, dec1_w, dec1_b, xbar_w, xbar_b,
      dnn_c_pad, dnn_c_sq, gc1_w)

    # ---- 2) GCN aggregation #1: adj @ support1 (resident), relu, @ gc2_w -----
    sup2 = pl.pallas_call(
        functools.partial(_gcn_agg1_kernel, tk=tk),
        out_shape=jax.ShapeDtypeStruct((N_pad, nz_pad), jnp.bfloat16),
        grid_spec=pltpu.PrefetchScalarGridSpec(
            num_scalar_prefetch=0,
            grid=(N_pad // tm, N_pad // tk),
            in_specs=[
                pl.BlockSpec((tm, tk), lambda i, k: (i, k)),            # adj tile (bf16)
                pl.BlockSpec((N_pad, h1_pad), lambda i, k: (0, 0)),     # support1 resident
                pl.BlockSpec((h1_pad, nz_pad), lambda i, k: (0, 0)),    # gc2_w resident
            ],
            out_specs=pl.BlockSpec((tm, nz_pad), lambda i, k: (i, 0)),
            scratch_shapes=[pltpu.VMEM((tm, h1_pad), jnp.float32)],
        ),
        compiler_params=pltpu.CompilerParams(
            dimension_semantics=("parallel", "arbitrary"),
            vmem_limit_bytes=_VMEM_LIMIT),
        cost_estimate=pl.CostEstimate(
            flops=2 * N_pad * N_pad * h1_pad + 2 * N_pad * h1_pad * nz_pad,
            transcendentals=0,
            bytes_accessed=2 * N_pad * N_pad + 2 * N_pad * h1_pad
                           + 4 * h1_pad * nz_pad + 2 * N_pad * nz_pad,
        ),
    )(adj_p, sup1, gc2_w)

    # ---- 3) GCN aggregation #2: adj @ support2 (resident) -> gz, + q_gcn -----
    gz_p, q_gcn_p = pl.pallas_call(
        functools.partial(_gcn_agg2_kernel, tk=tk, inv_v=inv_v, expo=expo,
                          n_clusters=n_clusters),
        out_shape=[
            jax.ShapeDtypeStruct((N_pad, nz_pad), jnp.float32),    # gz (padded)
            jax.ShapeDtypeStruct((N_pad, k_pad), jnp.float32),     # q_gcn (padded)
        ],
        grid_spec=pltpu.PrefetchScalarGridSpec(
            num_scalar_prefetch=0,
            grid=(N_pad // tm, N_pad // tk),
            in_specs=[
                pl.BlockSpec((tm, tk), lambda i, k: (i, k)),            # adj tile (bf16)
                pl.BlockSpec((N_pad, nz_pad), lambda i, k: (0, 0)),     # support2 resident
                pl.BlockSpec((k_pad, nz_pad), lambda i, k: (0, 0)),     # gcn clusters
                pl.BlockSpec((1, k_pad), lambda i, k: (0, 0)),          # ||c||^2 row
            ],
            out_specs=[
                pl.BlockSpec((tm, nz_pad), lambda i, k: (i, 0)),
                pl.BlockSpec((tm, k_pad), lambda i, k: (i, 0)),
            ],
            scratch_shapes=[pltpu.VMEM((tm, nz_pad), jnp.float32)],
        ),
        compiler_params=pltpu.CompilerParams(
            dimension_semantics=("parallel", "arbitrary"),
            vmem_limit_bytes=_VMEM_LIMIT),
        cost_estimate=pl.CostEstimate(
            flops=2 * N_pad * N_pad * nz_pad + 2 * N_pad * k_pad * nz_pad,
            transcendentals=0,
            bytes_accessed=2 * N_pad * N_pad + 2 * N_pad * nz_pad
                           + 4 * N_pad * (nz_pad + k_pad),
        ),
    )(adj_p, sup2, gcn_c_pad, gcn_c_sq)

    # ---- 4) inner-product decoder: a_bar = sigmoid(gz @ gz^T), tiled ---------
    a_bar_p = pl.pallas_call(
        _decoder_kernel,
        out_shape=jax.ShapeDtypeStruct((N_pad, N_pad), jnp.float32),
        grid_spec=pltpu.PrefetchScalarGridSpec(
            num_scalar_prefetch=0,
            grid=(N_pad // tm, N_pad // tm),
            in_specs=[
                pl.BlockSpec((tm, nz_pad), lambda i, j: (i, 0)),
                pl.BlockSpec((tm, nz_pad), lambda i, j: (j, 0)),
            ],
            out_specs=pl.BlockSpec((tm, tm), lambda i, j: (i, j)),
        ),
        compiler_params=pltpu.CompilerParams(
            dimension_semantics=("parallel", "parallel"),
            vmem_limit_bytes=_VMEM_LIMIT),
        cost_estimate=pl.CostEstimate(
            flops=2 * N_pad * N_pad * nz_pad,
            transcendentals=N_pad * N_pad,
            bytes_accessed=4 * (2 * (N_pad // tm) * N_pad * nz_pad + N_pad * N_pad),
        ),
    )(gz_p, gz_p)

    # Slice padded slabs back to the logical shapes.
    x_bar = x_bar_p[:N, :n_input]
    dz = dz_p[:N, :n_z]
    q_dnn = q_dnn_p[:N, :n_clusters]
    gz = gz_p[:N, :n_z]
    q_gcn = q_gcn_p[:N, :n_clusters]
    a_bar = a_bar_p[:N, :N]
    return x_bar, q_dnn, a_bar, q_gcn, dz, gz


# ----------------------------------------------------------------------------
# Parameter construction (deterministic Xavier-normal; replaces torch.load)
# ----------------------------------------------------------------------------

def xavier_normal(key, shape):
    fan_in, fan_out = shape
    std = (2.0 / (fan_in + fan_out)) ** 0.5
    return std * jax.random.normal(key, shape, dtype=jnp.float32)


def init_params(key, n_enc_1, n_dec_1, n_input, n_z, n_clusters, hidden_dim1):
    ks = jax.random.split(key, 8)
    return {
        "enc1_w": xavier_normal(ks[0], (n_input, n_enc_1)),
        "enc1_b": jnp.zeros((1, n_enc_1), jnp.float32),
        "z_w": xavier_normal(ks[1], (n_enc_1, n_z)),
        "z_b": jnp.zeros((1, n_z), jnp.float32),
        "dec1_w": xavier_normal(ks[2], (n_z, n_dec_1)),
        "dec1_b": jnp.zeros((1, n_dec_1), jnp.float32),
        "xbar_w": xavier_normal(ks[3], (n_dec_1, n_input)),
        "xbar_b": jnp.zeros((1, n_input), jnp.float32),
        "gc1_w": xavier_normal(ks[4], (n_input, hidden_dim1)),
        "gc2_w": xavier_normal(ks[5], (hidden_dim1, n_z)),
        "dnn_cluster": xavier_normal(ks[6], (n_clusters, n_z)),
        "gcn_cluster": xavier_normal(ks[7], (n_clusters, n_z)),
    }


# ----------------------------------------------------------------------------
# Pure-JAX reference (for a loose numerical sanity check)
# ----------------------------------------------------------------------------

def dcp_dec_reference(x, adj, params, v=1.0):
    def lin(h, w, b, relu):
        y = h @ w + b
        return jnp.maximum(y, 0.0) if relu else y

    h = lin(x, params["enc1_w"], params["enc1_b"], True)
    dz = lin(h, params["z_w"], params["z_b"], False)
    hd = lin(dz, params["dec1_w"], params["dec1_b"], True)
    x_bar = lin(hd, params["xbar_w"], params["xbar_b"], False)

    h1 = jnp.maximum(adj @ (x @ params["gc1_w"]), 0.0)
    gz = adj @ (h1 @ params["gc2_w"])
    a_bar = jax.nn.sigmoid(gz @ gz.T)

    def soft(z, c):
        d2 = jnp.sum((z[:, None, :] - c[None, :, :]) ** 2, axis=2)
        q = 1.0 / (1.0 + d2 / v)
        q = q ** ((v + 1.0) / 2.0)
        return q / jnp.sum(q, axis=1, keepdims=True)

    return x_bar, soft(dz, params["dnn_cluster"]), a_bar, soft(gz, params["gcn_cluster"]), dz, gz


# ----------------------------------------------------------------------------
# Main
# ----------------------------------------------------------------------------

if __name__ == "__main__":
    # Small shapes consistent with the module: x [N, n_input], adj [N, N].
    # N is deliberately NOT a multiple of 128 to exercise the padding path
    # (the old full-dimension tile fallback is gone).
    N = 300
    n_input = 48
    n_enc_1 = 64
    n_dec_1 = 64
    n_z = 16
    n_clusters = 4
    hidden_dim1 = 96   # 512 in the original GAE; scaled down for the demo
    v = 1.0

    key = jax.random.PRNGKey(0)
    k_x, k_a, k_p = jax.random.split(key, 3)

    x = jax.random.normal(k_x, (N, n_input), dtype=jnp.float32)

    # Symmetric, self-looped, row-normalized adjacency (typical GCN preprocessing).
    a = (jax.random.uniform(k_a, (N, N)) > 0.9).astype(jnp.float32)
    a = jnp.maximum(a, a.T) + jnp.eye(N, dtype=jnp.float32)
    adj = a / jnp.sum(a, axis=1, keepdims=True)

    params = init_params(k_p, n_enc_1, n_dec_1, n_input, n_z, n_clusters, hidden_dim1)

    fwd = jax.jit(functools.partial(dcp_dec_forward, v=v))
    outs = jax.block_until_ready(fwd(x, adj, params))
    x_bar, q_dnn, a_bar, q_gcn, dz, gz = outs

    # Structural checks.
    assert x_bar.shape == (N, n_input)
    assert q_dnn.shape == (N, n_clusters)
    assert a_bar.shape == (N, N)
    assert q_gcn.shape == (N, n_clusters)
    assert dz.shape == (N, n_z)
    assert gz.shape == (N, n_z)
    assert jnp.allclose(jnp.sum(q_dnn, axis=1), 1.0, atol=1e-5)
    assert jnp.allclose(jnp.sum(q_gcn, axis=1), 1.0, atol=1e-5)
    for o in outs:
        assert bool(jnp.all(jnp.isfinite(o)))

    # Loose reference check (tolerances account for bf16 adj/support streaming,
    # the approx EUP reciprocal and MXU accumulation-order differences vs XLA).
    refs = dcp_dec_reference(x, adj, params, v=v)
    names = ("x_bar", "q_dnn", "a_bar", "q_gcn", "dz", "gz")
    for nm, o, r in zip(names, outs, refs):
        assert jnp.allclose(o, r, rtol=5e-2, atol=5e-2), f"mismatch vs reference: {nm}"

    print("KERNEL_OK")
</pallas_src>

<mosaic_0001>
module attributes {stable_mosaic.version = 11 : i64} {
  func.func @_ae_kernel(%arg0: i32, %arg1: memref<128x48xf32, #tpu.memory_space<vmem>>, %arg2: memref<48x64xf32, #tpu.memory_space<vmem>>, %arg3: memref<1x64xf32, #tpu.memory_space<vmem>>, %arg4: memref<64x128xf32, #tpu.memory_space<vmem>>, %arg5: memref<1x128xf32, #tpu.memory_space<vmem>>, %arg6: memref<128x64xf32, #tpu.memory_space<vmem>>, %arg7: memref<1x64xf32, #tpu.memory_space<vmem>>, %arg8: memref<64x128xf32, #tpu.memory_space<vmem>>, %arg9: memref<1x128xf32, #tpu.memory_space<vmem>>, %arg10: memref<128x128xf32, #tpu.memory_space<vmem>>, %arg11: memref<1x128xf32, #tpu.memory_space<vmem>>, %arg12: memref<48x128xf32, #tpu.memory_space<vmem>>, %arg13: memref<128x128xf32, #tpu.memory_space<vmem>>, %arg14: memref<128x128xf32, #tpu.memory_space<vmem>>, %arg15: memref<128x128xf32, #tpu.memory_space<vmem>>, %arg16: memref<128x128xbf16, #tpu.memory_space<vmem>>) attributes {dimension_semantics = [#tpu.dimension_semantics<parallel>], iteration_bounds = array<i64: 3>, scalar_prefetch = 0 : i64, scratch_operands = 0 : i64, tpu.core_type = #tpu.core_type<tc>, window_params = [{transform_indices = @transform_0, window_bounds = array<i64: 128, 48>}, {pipeline_mode = #tpu.pipeline_mode<synchronous>, transform_indices = @transform_1, window_bounds = array<i64: 48, 64>}, {pipeline_mode = #tpu.pipeline_mode<synchronous>, transform_indices = @transform_2, window_bounds = array<i64: 1, 64>}, {pipeline_mode = #tpu.pipeline_mode<synchronous>, transform_indices = @transform_3, window_bounds = array<i64: 64, 128>}, {pipeline_mode = #tpu.pipeline_mode<synchronous>, transform_indices = @transform_4, window_bounds = array<i64: 1, 128>}, {pipeline_mode = #tpu.pipeline_mode<synchronous>, transform_indices = @transform_5, window_bounds = array<i64: 128, 64>}, {pipeline_mode = #tpu.pipeline_mode<synchronous>, transform_indices = @transform_6, window_bounds = array<i64: 1, 64>}, {pipeline_mode = #tpu.pipeline_mode<synchronous>, transform_indices = @transform_7, window_bounds = array<i64: 64, 128>}, {pipeline_mode = #tpu.pipeline_mode<synchronous>, transform_indices = @transform_8, window_bounds = array<i64: 1, 128>}, {pipeline_mode = #tpu.pipeline_mode<synchronous>, transform_indices = @transform_9, window_bounds = array<i64: 128, 128>}, {pipeline_mode = #tpu.pipeline_mode<synchronous>, transform_indices = @transform_10, window_bounds = array<i64: 1, 128>}, {pipeline_mode = #tpu.pipeline_mode<synchronous>, transform_indices = @transform_11, window_bounds = array<i64: 48, 128>}, {transform_indices = @transform_12, window_bounds = array<i64: 128, 128>}, {transform_indices = @transform_13, window_bounds = array<i64: 128, 128>}, {transform_indices = @transform_14, window_bounds = array<i64: 128, 128>}, {transform_indices = @transform_15, window_bounds = array<i64: 128, 128>}]} {
    %c0 = arith.constant 0 : index
    %c0_0 = arith.constant 0 : index
    %0 = vector.load %arg1[%c0, %c0_0] : memref<128x48xf32, #tpu.memory_space<vmem>>, vector<128x48xf32>
    %c0_1 = arith.constant 0 : index
    %c0_2 = arith.constant 0 : index
    %1 = vector.load %arg2[%c0_1, %c0_2] : memref<48x64xf32, #tpu.memory_space<vmem>>, vector<48x64xf32>
    %cst = arith.constant dense<0.000000e+00> : vector<128x64xf32>
    %2 = tpu.matmul %0, %1, %cst {dimension_numbers = #tpu.dot_dimension_numbers<[1], [0], [0], [1], [0, 0, 1, 1], [], []>} : vector<128x48xf32>, vector<48x64xf32>, vector<128x64xf32> -> vector<128x64xf32>
    %c0_3 = arith.constant 0 : index
    %c0_4 = arith.constant 0 : index
    %3 = vector.load %arg3[%c0_3, %c0_4] : memref<1x64xf32, #tpu.memory_space<vmem>>, vector<1x64xf32>
    %4 = vector.broadcast %3 : vector<1x64xf32> to vector<128x64xf32>
    %5 = arith.addf %2, %4 : vector<128x64xf32>
    %cst_5 = arith.constant 0.000000e+00 : f32
    %6 = vector.broadcast %cst_5 : f32 to vector<128x64xf32>
    %7 = arith.maximumf %5, %6 : vector<128x64xf32>
    %c0_6 = arith.constant 0 : index
    %c0_7 = arith.constant 0 : index
    %8 = vector.load %arg4[%c0_6, %c0_7] : memref<64x128xf32, #tpu.memory_space<vmem>>, vector<64x128xf32>
    %cst_8 = arith.constant dense<0.000000e+00> : vector<128x128xf32>
    %9 = tpu.matmul %7, %8, %cst_8 {dimension_numbers = #tpu.dot_dimension_numbers<[1], [0], [0], [1], [0, 0, 1, 1], [], []>} : vector<128x64xf32>, vector<64x128xf32>, vector<128x128xf32> -> vector<128x128xf32>
    %c0_9 = arith.constant 0 : index
    %c0_10 = arith.constant 0 : index
    %10 = vector.load %arg5[%c0_9, %c0_10] : memref<1x128xf32, #tpu.memory_space<vmem>>, vector<1x128xf32>
    %11 = vector.broadcast %10 : vector<1x128xf32> to vector<128x128xf32>
    %12 = arith.addf %9, %11 : vector<128x128xf32>
    %c0_11 = arith.constant 0 : index
    %c0_12 = arith.constant 0 : index
    %13 = vector.load %arg6[%c0_11, %c0_12] : memref<128x64xf32, #tpu.memory_space<vmem>>, vector<128x64xf32>
    %cst_13 = arith.constant dense<0.000000e+00> : vector<128x64xf32>
    %14 = tpu.matmul %12, %13, %cst_13 {dimension_numbers = #tpu.dot_dimension_numbers<[1], [0], [0], [1], [0, 0, 1, 1], [], []>} : vector<128x128xf32>, vector<128x64xf32>, vector<128x64xf32> -> vector<128x64xf32>
    %c0_14 = arith.constant 0 : index
    %c0_15 = arith.constant 0 : index
    %15 = vector.load %arg7[%c0_14, %c0_15] : memref<1x64xf32, #tpu.memory_space<vmem>>, vector<1x64xf32>
    %16 = vector.broadcast %15 : vector<1x64xf32> to vector<128x64xf32>
    %17 = arith.addf %14, %16 : vector<128x64xf32>
    %cst_16 = arith.constant 0.000000e+00 : f32
    %18 = vector.broadcast %cst_16 : f32 to vector<128x64xf32>
    %19 = arith.maximumf %17, %18 : vector<128x64xf32>
    %c0_17 = arith.constant 0 : index
    %c0_18 = arith.constant 0 : index
    %20 = vector.load %arg8[%c0_17, %c0_18] : memref<64x128xf32, #tpu.memory_space<vmem>>, vector<64x128xf32>
    %cst_19 = arith.constant dense<0.000000e+00> : vector<128x128xf32>
    %21 = tpu.matmul %19, %20, %cst_19 {dimension_numbers = #tpu.dot_dimension_numbers<[1], [0], [0], [1], [0, 0, 1, 1], [], []>} : vector<128x64xf32>, vector<64x128xf32>, vector<128x128xf32> -> vector<128x128xf32>
    %c0_20 = arith.constant 0 : index
    %c0_21 = arith.constant 0 : index
    %22 = vector.load %arg9[%c0_20, %c0_21] : memref<1x128xf32, #tpu.memory_space<vmem>>, vector<1x128xf32>
    %23 = vector.broadcast %22 : vector<1x128xf32> to vector<128x128xf32>
    %24 = arith.addf %21, %23 : vector<128x128xf32>
    %c0_22 = arith.constant 0 : index
    %c0_23 = arith.constant 0 : index
    %25 = vector.load %arg13[%c0_22, %c0_23] : memref<128x128xf32, #tpu.memory_space<vmem>>, vector<128x128xf32>
    tpu.vector_store %arg13[%c0_22, %c0_23], %24 {strides = array<i32>} : memref<128x128xf32, #tpu.memory_space<vmem>>, vector<128x128xf32>,
    %c0_24 = arith.constant 0 : index
    %c0_25 = arith.constant 0 : index
    %26 = vector.load %arg14[%c0_24, %c0_25] : memref<128x128xf32, #tpu.memory_space<vmem>>, vector<128x128xf32>
    tpu.vector_store %arg14[%c0_24, %c0_25], %12 {strides = array<i32>} : memref<128x128xf32, #tpu.memory_space<vmem>>, vector<128x128xf32>,
    %c0_26 = arith.constant 0 : index
    %c0_27 = arith.constant 0 : index
    %27 = vector.load %arg10[%c0_26, %c0_27] : memref<128x128xf32, #tpu.memory_space<vmem>>, vector<128x128xf32>
    %c0_28 = arith.constant 0 : index
    %c0_29 = arith.constant 0 : index
    %28 = vector.load %arg11[%c0_28, %c0_29] : memref<1x128xf32, #tpu.memory_space<vmem>>, vector<1x128xf32>
    %cst_30 = arith.constant dense<0.000000e+00> : vector<128x128xf32>
    %29 = tpu.matmul %12, %27, %cst_30 {dimension_numbers = #tpu.dot_dimension_numbers<[1], [1], [0], [0], [0, 0, 1, 0], [], []>} : vector<128x128xf32>, vector<128x128xf32>, vector<128x128xf32> -> vector<128x128xf32>
    %30 = arith.mulf %12, %12 : vector<128x128xf32>
    %cst_31 = arith.constant dense<0.000000e+00> : vector<128xf32>
    %31 = vector.multi_reduction <add>, %30, %cst_31 [1] : vector<128x128xf32> to vector<128xf32>
    %32 = vector.shape_cast %31 : vector<128xf32> to vector<128x1xf32>
    %33 = vector.broadcast %32 : vector<128x1xf32> to vector<128x128xf32>
    %34 = vector.broadcast %28 : vector<1x128xf32> to vector<128x128xf32>
    %35 = arith.addf %33, %34 : vector<128x128xf32>
    %cst_32 = arith.constant 2.000000e+00 : f32
    %36 = vector.broadcast %cst_32 : f32 to vector<128x128xf32>
    %37 = arith.mulf %36, %29 : vector<128x128xf32>
    %38 = arith.subf %35, %37 : vector<128x128xf32>
    %cst_33 = arith.constant 0.000000e+00 : f32
    %39 = vector.broadcast %cst_33 : f32 to vector<128x128xf32>
    %40 = arith.maximumf %38, %39 : vector<128x128xf32>
    %cst_34 = arith.constant 1.000000e+00 : f32
    %41 = vector.broadcast %cst_34 : f32 to vector<128x128xf32>
    %42 = arith.addf %41, %40 : vector<128x128xf32>
    %43 = tpu.reciprocal %42 {approx = true} : vector<128x128xf32> -> vector<128x128xf32>
    %44 = tpu.iota {dimensions = array<i32: 1>} : vector<128x128xi32>
    %c4_i32 = arith.constant 4 : i32
    %45 = vector.broadcast %c4_i32 : i32 to vector<128x128xi32>
    %46 = arith.cmpi slt, %44, %45 : vector<128x128xi32>
    %cst_35 = arith.constant 0.000000e+00 : f32
    %47 = vector.broadcast %cst_35 : f32 to vector<128x128xf32>
    %48 = arith.select %46, %43, %47 : vector<128x128xi1>, vector<128x128xf32>
    %cst_36 = arith.constant dense<0.000000e+00> : vector<128xf32>
    %49 = vector.multi_reduction <add>, %48, %cst_36 [1] : vector<128x128xf32> to vector<128xf32>
    %50 = vector.shape_cast %49 : vector<128xf32> to vector<128x1xf32>
    %51 = vector.broadcast %50 : vector<128x1xf32> to vector<128x128xf32>
    %52 = arith.divf %48, %51 : vector<128x128xf32>
    %c0_37 = arith.constant 0 : index
    %c0_38 = arith.constant 0 : index
    %53 = vector.load %arg15[%c0_37, %c0_38] : memref<128x128xf32, #tpu.memory_space<vmem>>, vector<128x128xf32>
    tpu.vector_store %arg15[%c0_37, %c0_38], %52 {strides = array<i32>} : memref<128x128xf32, #tpu.memory_space<vmem>>, vector<128x128xf32>,
    %c0_39 = arith.constant 0 : index
    %c0_40 = arith.constant 0 : index
    %54 = vector.load %arg12[%c0_39, %c0_40] : memref<48x128xf32, #tpu.memory_space<vmem>>, vector<48x128xf32>
    %cst_41 = arith.constant dense<0.000000e+00> : vector<128x128xf32>
    %55 = tpu.matmul %0, %54, %cst_41 {dimension_numbers = #tpu.dot_dimension_numbers<[1], [0], [0], [1], [0, 0, 1, 1], [], []>} : vector<128x48xf32>, vector<48x128xf32>, vector<128x128xf32> -> vector<128x128xf32>
    %56 = arith.truncf %55 : vector<128x128xf32> to vector<128x128xbf16>
    %c0_42 = arith.constant 0 : index
    %c0_43 = arith.constant 0 : index
    %57 = vector.load %arg16[%c0_42, %c0_43] : memref<128x128xbf16, #tpu.memory_space<vmem>>, vector<128x128xbf16>
    tpu.vector_store %arg16[%c0_42, %c0_43], %56 {strides = array<i32>} : memref<128x128xbf16, #tpu.memory_space<vmem>>, vector<128x128xbf16>,
    return
  }
  func.func @transform_0(%arg0: i32) -> (i32, i32) {
    %c0_i32 = arith.constant 0 : i32
    %c0_i32_0 = arith.constant 0 : i32
    return %arg0, %c0_i32 : i32, i32
  }
  func.func @transform_1(%arg0: i32) -> (i32, i32) {
    %c0_i32 = arith.constant 0 : i32
    %c0_i32_0 = arith.constant 0 : i32
    %c0_i32_1 = arith.constant 0 : i32
    return %c0_i32, %c0_i32_0 : i32, i32
  }
  func.func @transform_2(%arg0: i32) -> (i32, i32) {
    %c0_i32 = arith.constant 0 : i32
    %c0_i32_0 = arith.constant 0 : i32
    %c0_i32_1 = arith.constant 0 : i32
    return %c0_i32, %c0_i32_0 : i32, i32
  }
  func.func @transform_3(%arg0: i32) -> (i32, i32) {
    %c0_i32 = arith.constant 0 : i32
    %c0_i32_0 = arith.constant 0 : i32
    %c0_i32_1 = arith.constant 0 : i32
    return %c0_i32, %c0_i32_0 : i32, i32
  }
  func.func @transform_4(%arg0: i32) -> (i32, i32) {
    %c0_i32 = arith.constant 0 : i32
    %c0_i32_0 = arith.constant 0 : i32
    %c0_i32_1 = arith.constant 0 : i32
    return %c0_i32, %c0_i32_0 : i32, i32
  }
  func.func @transform_5(%arg0: i32) -> (i32, i32) {
    %c0_i32 = arith.constant 0 : i32
    %c0_i32_0 = arith.constant 0 : i32
    %c0_i32_1 = arith.constant 0 : i32
    return %c0_i32, %c0_i32_0 : i32, i32
  }
  func.func @transform_6(%arg0: i32) -> (i32, i32) {
    %c0_i32 = arith.constant 0 : i32
    %c0_i32_0 = arith.constant 0 : i32
    %c0_i32_1 = arith.constant 0 : i32
    return %c0_i32, %c0_i32_0 : i32, i32
  }
  func.func @transform_7(%arg0: i32) -> (i32, i32) {
    %c0_i32 = arith.constant 0 : i32
    %c0_i32_0 = arith.constant 0 : i32
    %c0_i32_1 = arith.constant 0 : i32
    return %c0_i32, %c0_i32_0 : i32, i32
  }
  func.func @transform_8(%arg0: i32) -> (i32, i32) {
    %c0_i32 = arith.constant 0 : i32
    %c0_i32_0 = arith.constant 0 : i32
    %c0_i32_1 = arith.constant 0 : i32
    return %c0_i32, %c0_i32_0 : i32, i32
  }
  func.func @transform_9(%arg0: i32) -> (i32, i32) {
    %c0_i32 = arith.constant 0 : i32
    %c0_i32_0 = arith.constant 0 : i32
    %c0_i32_1 = arith.constant 0 : i32
    return %c0_i32, %c0_i32_0 : i32, i32
  }
  func.func @transform_10(%arg0: i32) -> (i32, i32) {
    %c0_i32 = arith.constant 0 : i32
    %c0_i32_0 = arith.constant 0 : i32
    %c0_i32_1 = arith.constant 0 : i32
    return %c0_i32, %c0_i32_0 : i32, i32
  }
  func.func @transform_11(%arg0: i32) -> (i32, i32) {
    %c0_i32 = arith.constant 0 : i32
    %c0_i32_0 = arith.constant 0 : i32
    %c0_i32_1 = arith.constant 0 : i32
    return %c0_i32, %c0_i32_0 : i32, i32
  }
  func.func @transform_12(%arg0: i32) -> (i32, i32) {
    %c0_i32 = arith.constant 0 : i32
    %c0_i32_0 = arith.constant 0 : i32
    return %arg0, %c0_i32 : i32, i32
  }
  func.func @transform_13(%arg0: i32) -> (i32, i32) {
    %c0_i32 = arith.constant 0 : i32
    %c0_i32_0 = arith.constant 0 : i32
    return %arg0, %c0_i32 : i32, i32
  }
  func.func @transform_14(%arg0: i32) -> (i32, i32) {
    %c0_i32 = arith.constant 0 : i32
    %c0_i32_0 = arith.constant 0 : i32
    return %arg0, %c0_i32 : i32, i32
  }
  func.func @transform_15(%arg0: i32) -> (i32, i32) {
    %c0_i32 = arith.constant 0 : i32
    %c0_i32_0 = arith.constant 0 : i32
    return %arg0, %c0_i32 : i32, i32
  }
}

module attributes {stable_mosaic.version = 11 : i64} {
  func.func @_gcn_agg1_kernel(%arg0: i32, %arg1: i32, %arg2: memref<128x128xbf16, #tpu.memory_space<vmem>>, %arg3: memref<384x128xbf16, #tpu.memory_space<vmem>>, %arg4: memref<128x128xf32, #tpu.memory_space<vmem>>, %arg5: memref<128x128xbf16, #tpu.memory_space<vmem>>, %arg6: memref<128x128xf32, #tpu.memory_space<vmem>>) attributes {dimension_semantics = [#tpu.dimension_semantics<parallel>, #tpu.dimension_semantics<arbitrary>], iteration_bounds = array<i64: 3, 3>, scalar_prefetch = 0 : i64, scratch_operands = 1 : i64, tpu.core_type = #tpu.core_type<tc>, window_params = [{transform_indices = @transform_0, window_bounds = array<i64: 128, 128>}, {pipeline_mode = #tpu.pipeline_mode<synchronous>, transform_indices = @transform_1, window_bounds = array<i64: 384, 128>}, {pipeline_mode = #tpu.pipeline_mode<synchronous>, transform_indices = @transform_2, window_bounds = array<i64: 128, 128>}, {transform_indices = @transform_3, window_bounds = array<i64: 128, 128>}]} {
    %c0_i32 = arith.constant 0 : i32
    %0 = arith.cmpi eq, %arg1, %c0_i32 : i32
    %1 = arith.extui %0 : i1 to i32
    %c0_i32_0 = arith.constant 0 : i32
    %2 = arith.cmpi ne, %1, %c0_i32_0 : i32
    scf.if %2 {
      %cst_8 = arith.constant 0.000000e+00 : f32
      %15 = vector.broadcast %cst_8 : f32 to vector<128x128xf32>
      %c0_9 = arith.constant 0 : index
      %c0_10 = arith.constant 0 : index
      %16 = vector.load %arg6[%c0_9, %c0_10] : memref<128x128xf32, #tpu.memory_space<vmem>>, vector<128x128xf32>
      tpu.vector_store %arg6[%c0_9, %c0_10], %15 {strides = array<i32>} : memref<128x128xf32, #tpu.memory_space<vmem>>, vector<128x128xf32>,
    } else {
    }
    %c128_i32 = arith.constant 128 : i32
    %3 = arith.muli %arg1, %c128_i32 : i32
    %4 = tpu.assume_multiple %3, 128 : i32
    %c0 = arith.constant 0 : index
    %c0_1 = arith.constant 0 : index
    %5 = vector.load %arg6[%c0, %c0_1] : memref<128x128xf32, #tpu.memory_space<vmem>>, vector<128x128xf32>
    %c0_2 = arith.constant 0 : index
    %c0_3 = arith.constant 0 : index
    %6 = vector.load %arg2[%c0_2, %c0_3] : memref<128x128xbf16, #tpu.memory_space<vmem>>, vector<128x128xbf16>
    %7 = arith.index_cast %4 : i32 to index
    %c0_4 = arith.constant 0 : index
    %8 = vector.load %arg3[%7, %c0_4] : memref<384x128xbf16, #tpu.memory_space<vmem>>, vector<128x128xbf16>
    %cst = arith.constant dense<0.000000e+00> : vector<128x128xf32>
    %9 = tpu.matmul %6, %8, %cst {dimension_numbers = #tpu.dot_dimension_numbers<[1], [0], [0], [1], [0, 0, 1, 1], [], []>} : vector<128x128xbf16>, vector<128x128xbf16>, vector<128x128xf32> -> vector<128x128xf32>
    %10 = arith.addf %5, %9 : vector<128x128xf32>
    %c0_5 = arith.constant 0 : index
    %c0_6 = arith.constant 0 : index
    %11 = vector.load %arg6[%c0_5, %c0_6] : memref<128x128xf32, #tpu.memory_space<vmem>>, vector<128x128xf32>
    tpu.vector_store %arg6[%c0_5, %c0_6], %10 {strides = array<i32>} : memref<128x128xf32, #tpu.memory_space<vmem>>, vector<128x128xf32>,
    %c2_i32 = arith.constant 2 : i32
    %12 = arith.cmpi eq, %arg1, %c2_i32 : i32
    %13 = arith.extui %12 : i1 to i32
    %c0_i32_7 = arith.constant 0 : i32
    %14 = arith.cmpi ne, %13, %c0_i32_7 : i32
    scf.if %14 {
      %c0_8 = arith.constant 0 : index
      %c0_9 = arith.constant 0 : index
      %15 = vector.load %arg6[%c0_8, %c0_9] : memref<128x128xf32, #tpu.memory_space<vmem>>, vector<128x128xf32>
      %cst_10 = arith.constant 0.000000e+00 : f32
      %16 = vector.broadcast %cst_10 : f32 to vector<128x128xf32>
      %17 = arith.maximumf %15, %16 : vector<128x128xf32>
      %c0_11 = arith.constant 0 : index
      %c0_12 = arith.constant 0 : index
      %18 = vector.load %arg4[%c0_11, %c0_12] : memref<128x128xf32, #tpu.memory_space<vmem>>, vector<128x128xf32>
      %cst_13 = arith.constant dense<0.000000e+00> : vector<128x128xf32>
      %19 = tpu.matmul %17, %18, %cst_13 {dimension_numbers = #tpu.dot_dimension_numbers<[1], [0], [0], [1], [0, 0, 1, 1], [], []>} : vector<128x128xf32>, vector<128x128xf32>, vector<128x128xf32> -> vector<128x128xf32>
      %20 = arith.truncf %19 : vector<128x128xf32> to vector<128x128xbf16>
      %c0_14 = arith.constant 0 : index
      %c0_15 = arith.constant 0 : index
      %21 = vector.load %arg5[%c0_14, %c0_15] : memref<128x128xbf16, #tpu.memory_space<vmem>>, vector<128x128xbf16>
      tpu.vector_store %arg5[%c0_14, %c0_15], %20 {strides = array<i32>} : memref<128x128xbf16, #tpu.memory_space<vmem>>, vector<128x128xbf16>,
    } else {
    }
    return
  }
  func.func @transform_0(%arg0: i32, %arg1: i32) -> (i32, i32) {
    %c0_i32 = arith.constant 0 : i32
    return %arg0, %arg1 : i32, i32
  }
  func.func @transform_1(%arg0: i32, %arg1: i32) -> (i32, i32) {
    %c0_i32 = arith.constant 0 : i32
    %c0_i32_0 = arith.constant 0 : i32
    %c0_i32_1 = arith.constant 0 : i32
    return %c0_i32, %c0_i32_0 : i32, i32
  }
  func.func @transform_2(%arg0: i32, %arg1: i32) -> (i32, i32) {
    %c0_i32 = arith.constant 0 : i32
    %c0_i32_0 = arith.constant 0 : i32
    %c0_i32_1 = arith.constant 0 : i32
    return %c0_i32, %c0_i32_0 : i32, i32
  }
  func.func @transform_3(%arg0: i32, %arg1: i32) -> (i32, i32) {
    %c0_i32 = arith.constant 0 : i32
    %c0_i32_0 = arith.constant 0 : i32
    return %arg0, %c0_i32 : i32, i32
  }
}

module attributes {stable_mosaic.version = 11 : i64} {
  func.func @_gcn_agg2_kernel(%arg0: i32, %arg1: i32, %arg2: memref<128x128xbf16, #tpu.memory_space<vmem>>, %arg3: memref<384x128xbf16, #tpu.memory_space<vmem>>, %arg4: memref<128x128xf32, #tpu.memory_space<vmem>>, %arg5: memref<1x128xf32, #tpu.memory_space<vmem>>, %arg6: memref<128x128xf32, #tpu.memory_space<vmem>>, %arg7: memref<128x128xf32, #tpu.memory_space<vmem>>, %arg8: memref<128x128xf32, #tpu.memory_space<vmem>>) attributes {dimension_semantics = [#tpu.dimension_semantics<parallel>, #tpu.dimension_semantics<arbitrary>], iteration_bounds = array<i64: 3, 3>, scalar_prefetch = 0 : i64, scratch_operands = 1 : i64, tpu.core_type = #tpu.core_type<tc>, window_params = [{transform_indices = @transform_0, window_bounds = array<i64: 128, 128>}, {pipeline_mode = #tpu.pipeline_mode<synchronous>, transform_indices = @transform_1, window_bounds = array<i64: 384, 128>}, {pipeline_mode = #tpu.pipeline_mode<synchronous>, transform_indices = @transform_2, window_bounds = array<i64: 128, 128>}, {pipeline_mode = #tpu.pipeline_mode<synchronous>, transform_indices = @transform_3, window_bounds = array<i64: 1, 128>}, {transform_indices = @transform_4, window_bounds = array<i64: 128, 128>}, {transform_indices = @transform_5, window_bounds = array<i64: 128, 128>}]} {
    %c0_i32 = arith.constant 0 : i32
    %0 = arith.cmpi eq, %arg1, %c0_i32 : i32
    %1 = arith.extui %0 : i1 to i32
    %c0_i32_0 = arith.constant 0 : i32
    %2 = arith.cmpi ne, %1, %c0_i32_0 : i32
    scf.if %2 {
      %cst_8 = arith.constant 0.000000e+00 : f32
      %15 = vector.broadcast %cst_8 : f32 to vector<128x128xf32>
      %c0_9 = arith.constant 0 : index
      %c0_10 = arith.constant 0 : index
      %16 = vector.load %arg8[%c0_9, %c0_10] : memref<128x128xf32, #tpu.memory_space<vmem>>, vector<128x128xf32>
      tpu.vector_store %arg8[%c0_9, %c0_10], %15 {strides = array<i32>} : memref<128x128xf32, #tpu.memory_space<vmem>>, vector<128x128xf32>,
    } else {
    }
    %c128_i32 = arith.constant 128 : i32
    %3 = arith.muli %arg1, %c128_i32 : i32
    %4 = tpu.assume_multiple %3, 128 : i32
    %c0 = arith.constant 0 : index
    %c0_1 = arith.constant 0 : index
    %5 = vector.load %arg8[%c0, %c0_1] : memref<128x128xf32, #tpu.memory_space<vmem>>, vector<128x128xf32>
    %c0_2 = arith.constant 0 : index
    %c0_3 = arith.constant 0 : index
    %6 = vector.load %arg2[%c0_2, %c0_3] : memref<128x128xbf16, #tpu.memory_space<vmem>>, vector<128x128xbf16>
    %7 = arith.index_cast %4 : i32 to index
    %c0_4 = arith.constant 0 : index
    %8 = vector.load %arg3[%7, %c0_4] : memref<384x128xbf16, #tpu.memory_space<vmem>>, vector<128x128xbf16>
    %cst = arith.constant dense<0.000000e+00> : vector<128x128xf32>
    %9 = tpu.matmul %6, %8, %cst {dimension_numbers = #tpu.dot_dimension_numbers<[1], [0], [0], [1], [0, 0, 1, 1], [], []>} : vector<128x128xbf16>, vector<128x128xbf16>, vector<128x128xf32> -> vector<128x128xf32>
    %10 = arith.addf %5, %9 : vector<128x128xf32>
    %c0_5 = arith.constant 0 : index
    %c0_6 = arith.constant 0 : index
    %11 = vector.load %arg8[%c0_5, %c0_6] : memref<128x128xf32, #tpu.memory_space<vmem>>, vector<128x128xf32>
    tpu.vector_store %arg8[%c0_5, %c0_6], %10 {strides = array<i32>} : memref<128x128xf32, #tpu.memory_space<vmem>>, vector<128x128xf32>,
    %c2_i32 = arith.constant 2 : i32
    %12 = arith.cmpi eq, %arg1, %c2_i32 : i32
    %13 = arith.extui %12 : i1 to i32
    %c0_i32_7 = arith.constant 0 : i32
    %14 = arith.cmpi ne, %13, %c0_i32_7 : i32
    scf.if %14 {
      %c0_8 = arith.constant 0 : index
      %c0_9 = arith.constant 0 : index
      %15 = vector.load %arg8[%c0_8, %c0_9] : memref<128x128xf32, #tpu.memory_space<vmem>>, vector<128x128xf32>
      %c0_10 = arith.constant 0 : index
      %c0_11 = arith.constant 0 : index
      %16 = vector.load %arg6[%c0_10, %c0_11] : memref<128x128xf32, #tpu.memory_space<vmem>>, vector<128x128xf32>
      tpu.vector_store %arg6[%c0_10, %c0_11], %15 {strides = array<i32>} : memref<128x128xf32, #tpu.memory_space<vmem>>, vector<128x128xf32>,
      %c0_12 = arith.constant 0 : index
      %c0_13 = arith.constant 0 : index
      %17 = vector.load %arg4[%c0_12, %c0_13] : memref<128x128xf32, #tpu.memory_space<vmem>>, vector<128x128xf32>
      %c0_14 = arith.constant 0 : index
      %c0_15 = arith.constant 0 : index
      %18 = vector.load %arg5[%c0_14, %c0_15] : memref<1x128xf32, #tpu.memory_space<vmem>>, vector<1x128xf32>
      %cst_16 = arith.constant dense<0.000000e+00> : vector<128x128xf32>
      %19 = tpu.matmul %15, %17, %cst_16 {dimension_numbers = #tpu.dot_dimension_numbers<[1], [1], [0], [0], [0, 0, 1, 0], [], []>} : vector<128x128xf32>, vector<128x128xf32>, vector<128x128xf32> -> vector<128x128xf32>
      %20 = arith.mulf %15, %15 : vector<128x128xf32>
      %cst_17 = arith.constant dense<0.000000e+00> : vector<128xf32>
      %21 = vector.multi_reduction <add>, %20, %cst_17 [1] : vector<128x128xf32> to vector<128xf32>
      %22 = vector.shape_cast %21 : vector<128xf32> to vector<128x1xf32>
      %23 = vector.broadcast %22 : vector<128x1xf32> to vector<128x128xf32>
      %24 = vector.broadcast %18 : vector<1x128xf32> to vector<128x128xf32>
      %25 = arith.addf %23, %24 : vector<128x128xf32>
      %cst_18 = arith.constant 2.000000e+00 : f32
      %26 = vector.broadcast %cst_18 : f32 to vector<128x128xf32>
      %27 = arith.mulf %26, %19 : vector<128x128xf32>
      %28 = arith.subf %25, %27 : vector<128x128xf32>
      %cst_19 = arith.constant 0.000000e+00 : f32
      %29 = vector.broadcast %cst_19 : f32 to vector<128x128xf32>
      %30 = arith.maximumf %28, %29 : vector<128x128xf32>
      %cst_20 = arith.constant 1.000000e+00 : f32
      %31 = vector.broadcast %cst_20 : f32 to vector<128x128xf32>
      %32 = arith.addf %31, %30 : vector<128x128xf32>
      %33 = tpu.reciprocal %32 {approx = true} : vector<128x128xf32> -> vector<128x128xf32>
      %34 = tpu.iota {dimensions = array<i32: 1>} : vector<128x128xi32>
      %c4_i32 = arith.constant 4 : i32
      %35 = vector.broadcast %c4_i32 : i32 to vector<128x128xi32>
      %36 = arith.cmpi slt, %34, %35 : vector<128x128xi32>
      %cst_21 = arith.constant 0.000000e+00 : f32
      %37 = vector.broadcast %cst_21 : f32 to vector<128x128xf32>
      %38 = arith.select %36, %33, %37 : vector<128x128xi1>, vector<128x128xf32>
      %cst_22 = arith.constant dense<0.000000e+00> : vector<128xf32>
      %39 = vector.multi_reduction <add>, %38, %cst_22 [1] : vector<128x128xf32> to vector<128xf32>
      %40 = vector.shape_cast %39 : vector<128xf32> to vector<128x1xf32>
      %41 = vector.broadcast %40 : vector<128x1xf32> to vector<128x128xf32>
      %42 = arith.divf %38, %41 : vector<128x128xf32>
      %c0_23 = arith.constant 0 : index
      %c0_24 = arith.constant 0 : index
      %43 = vector.load %arg7[%c0_23, %c0_24] : memref<128x128xf32, #tpu.memory_space<vmem>>, vector<128x128xf32>
      tpu.vector_store %arg7[%c0_23, %c0_24], %42 {strides = array<i32>} : memref<128x128xf32, #tpu.memory_space<vmem>>, vector<128x128xf32>,
    } else {
    }
    return
  }
  func.func @transform_0(%arg0: i32, %arg1: i32) -> (i32, i32) {
    %c0_i32 = arith.constant 0 : i32
    return %arg0, %arg1 : i32, i32
  }
  func.func @transform_1(%arg0: i32, %arg1: i32) -> (i32, i32) {
    %c0_i32 = arith.constant 0 : i32
    %c0_i32_0 = arith.constant 0 : i32
    %c0_i32_1 = arith.constant 0 : i32
    return %c0_i32, %c0_i32_0 : i32, i32
  }
  func.func @transform_2(%arg0: i32, %arg1: i32) -> (i32, i32) {
    %c0_i32 = arith.constant 0 : i32
    %c0_i32_0 = arith.constant 0 : i32
    %c0_i32_1 = arith.constant 0 : i32
    return %c0_i32, %c0_i32_0 : i32, i32
  }
  func.func @transform_3(%arg0: i32, %arg1: i32) -> (i32, i32) {
    %c0_i32 = arith.constant 0 : i32
    %c0_i32_0 = arith.constant 0 : i32
    %c0_i32_1 = arith.constant 0 : i32
    return %c0_i32, %c0_i32_0 : i32, i32
  }
  func.func @transform_4(%arg0: i32, %arg1: i32) -> (i32, i32) {
    %c0_i32 = arith.constant 0 : i32
    %c0_i32_0 = arith.constant 0 : i32
    return %arg0, %c0_i32 : i32, i32
  }
  func.func @transform_5(%arg0: i32, %arg1: i32) -> (i32, i32) {
    %c0_i32 = arith.constant 0 : i32
    %c0_i32_0 = arith.constant 0 : i32
    return %arg0, %c0_i32 : i32, i32
  }
}

module attributes {stable_mosaic.version = 11 : i64} {
  func.func @_decoder_kernel(%arg0: i32, %arg1: i32, %arg2: memref<128x128xf32, #tpu.memory_space<vmem>>, %arg3: memref<128x128xf32, #tpu.memory_space<vmem>>, %arg4: memref<128x128xf32, #tpu.memory_space<vmem>>) attributes {dimension_semantics = [#tpu.dimension_semantics<parallel>, #tpu.dimension_semantics<parallel>], iteration_bounds = array<i64: 3, 3>, scalar_prefetch = 0 : i64, scratch_operands = 0 : i64, tpu.core_type = #tpu.core_type<tc>, window_params = [{transform_indices = @transform_0, window_bounds = array<i64: 128, 128>}, {transform_indices = @transform_1, window_bounds = array<i64: 128, 128>}, {transform_indices = @transform_2, window_bounds = array<i64: 128, 128>}]} {
    %c0 = arith.constant 0 : index
    %c0_0 = arith.constant 0 : index
    %0 = vector.load %arg2[%c0, %c0_0] : memref<128x128xf32, #tpu.memory_space<vmem>>, vector<128x128xf32>
    %c0_1 = arith.constant 0 : index
    %c0_2 = arith.constant 0 : index
    %1 = vector.load %arg3[%c0_1, %c0_2] : memref<128x128xf32, #tpu.memory_space<vmem>>, vector<128x128xf32>
    %cst = arith.constant dense<0.000000e+00> : vector<128x128xf32>
    %2 = tpu.matmul %0, %1, %cst {dimension_numbers = #tpu.dot_dimension_numbers<[1], [1], [0], [0], [0, 0, 1, 0], [], []>} : vector<128x128xf32>, vector<128x128xf32>, vector<128x128xf32> -> vector<128x128xf32>
    %3 = arith.negf %2 : vector<128x128xf32>
    %4 = math.exp %3 : vector<128x128xf32>
    %cst_3 = arith.constant 1.000000e+00 : f32
    %5 = vector.broadcast %cst_3 : f32 to vector<128x128xf32>
    %6 = arith.addf %5, %4 : vector<128x128xf32>
    %7 = arith.divf %5, %6 : vector<128x128xf32>
    %c0_4 = arith.constant 0 : index
    %c0_5 = arith.constant 0 : index
    %8 = vector.load %arg4[%c0_4, %c0_5] : memref<128x128xf32, #tpu.memory_space<vmem>>, vector<128x128xf32>
    tpu.vector_store %arg4[%c0_4, %c0_5], %7 {strides = array<i32>} : memref<128x128xf32, #tpu.memory_space<vmem>>, vector<128x128xf32>,
    return
  }
  func.func @transform_0(%arg0: i32, %arg1: i32) -> (i32, i32) {
    %c0_i32 = arith.constant 0 : i32
    %c0_i32_0 = arith.constant 0 : i32
    return %arg0, %c0_i32 : i32, i32
  }
  func.func @transform_1(%arg0: i32, %arg1: i32) -> (i32, i32) {
    %c0_i32 = arith.constant 0 : i32
    %c0_i32_0 = arith.constant 0 : i32
    return %arg1, %c0_i32 : i32, i32
  }
  func.func @transform_2(%arg0: i32, %arg1: i32) -> (i32, i32) {
    %c0_i32 = arith.constant 0 : i32
    return %arg0, %arg1 : i32, i32
  }
}

</mosaic_0001>

<llo_original>
// kernel: dcp_dec_forward.5
$region0: #{dcp_dec_forward.5}
  #allocation0 [shape = 'u32[]', space=smem, size = 0x4, offset = 0x4, fixed_abs, tag = 'smem constant byte address 0x4 - core index']
  #allocation1 [shape = 'u32[72,128]{1,0:T(1,128)}', space=vmem, size = 0x9000, scoped, tag = 'internal scratch']
  #allocation2 [shape = 'f32[128,128]{1,0:T(8,128)}', space=vmem, size = 0x10000, scoped, tag = 'scratch operand']
  %s0 = inlined_call_operand.vmem [shape: bf16[384,384], index: 0, kind: input, shape index: {}]
  %s1 = inlined_call_operand.vmem [shape: bf16[384,128], index: 1, kind: input, shape index: {}]
  %s2 = inlined_call_operand.vmem [shape: f32[128,128], index: 2, kind: input, shape index: {}]
  %s3 = inlined_call_operand.vmem [shape: bf16[384,128], index: 3, kind: output, shape index: {}]
  %s4 = sld [smem:[#allocation0]]
  $region94: #{dcp_dec_forward.5} parent=0
    _
  %s6 = ssub.s32 1, %s4
  %s7 = scalar_select 0, %s6, %s4
  $region1: #{dcp_dec_forward.5} parent=0
    #allocation3 [shape = 'u8[65536]{0}', space=vmem, size = 0x10000, scoped, tag = 'input window, operand 0']
    loop: start=0, step=1, limit=11
    $region2: #{dcp_dec_forward.5} parent=1 // loop_pre_header
      _
    $region3: #{dcp_dec_forward.5} parent=1 // loop_header
      %s9 = sphi 0, %s13
      %p10 = scmp.ge.s32.totalorder %s9, 11
      %s16 = sphi 0, %s28
      %s17 = sphi 0, %s24
      %s18 = sphi 0, %s16
      %s19 = sphi 0, %s17
      %s20 = sphi 0, %s18
      %s21 = sphi 0, %s19
      %s33 = sphi 0, %s35
      %s36 = sphi 0, %s33
      %s37 = sphi 0, %s36
      %s53 = sphi 0, %s37
      %s57 = sphi 0, %s57
      %s59 = sphi 0, %s57
      %s60 = sphi 0, %s59
      %s74 = sphi 0, %s60
      %s78 = sphi 0, %s78
      %s80 = sphi 0, %s78
      %s81 = sphi 0, %s80
      %s95 = sphi 0, %s81
      %s101 = sphi 0, %s103
      %s104 = sphi 0, %s101
      %s105 = sphi 0, %s104
      %s121 = sphi 0, %s105
    $region4: #{dcp_dec_forward.5} parent=1 // loop_header_branch
      %12 = sbr.rel (%p10) target = $region8
    $region5: #{dcp_dec_forward.5} parent=1 // loop_body
      %s14 = ssub.s32 %s9, 1
      %s15 = ssub.s32 %s9, 2
      %s22 = sadd.s32 1, %s17
      %p23 = scmp.ge.s32.totalorder %s22, 3
      %s24 = scalar_select %p23, 0, %s22
      %s25 = sadd.s32 1, %s16
      %s26 = scalar_select %p23, %s25, %s16
      %p27 = scmp.ge.s32.totalorder %s26, 3
      %s28 = scalar_select %p27, 0, %s26
      %s29 = ssub.s32 %s16, %s28
      %s30 = ssub.s32 %s17, %s24
      %s31 = sor.u32 %s29, %s30
      %p32 = scmp.eq.s32.totalorder %s31, 0
      %s34 = sadd.s32 %s33, 1
      %s35 = scalar_select %p32, %s33, %s34
      %p38 = pneg %p32
      %p39 = scmp.eq.s32.totalorder %s9, 8
      %p40 = por %p38, %p39
      %p41 = scmp.ne.s32.totalorder %s33, %s36
      %p42 = scmp.eq.s32.totalorder %s9, 0
      %p43 = por %p41, %p42
      %p44 = scmp.ne.s32.totalorder %s33, %s36
      %p45 = scmp.eq.s32.totalorder %s14, 8
      %p46 = por %p44, %p45
      %p47 = scmp.ne.s32.totalorder %s36, %s37
      %p48 = scmp.eq.s32.totalorder %s14, 0
      %p49 = por %p47, %p48
      %p50 = scmp.ne.s32.totalorder %s36, %s37
      %p51 = scmp.eq.s32.totalorder %s15, 8
      %p52 = por %p50, %p51
      %p54 = scmp.ne.s32.totalorder %s37, %s53
      %p55 = scmp.eq.s32.totalorder %s15, 0
      %p56 = por %p54, %p55
      %s58 = sadd.s32 %s57, 1
      %p61 = scmp.eq.s32.totalorder %s9, 8
      %p62 = scmp.ne.s32.totalorder %s57, %s59
      %p63 = scmp.eq.s32.totalorder %s9, 0
      %p64 = por %p62, %p63
      %p65 = scmp.ne.s32.totalorder %s57, %s59
      %p66 = scmp.eq.s32.totalorder %s14, 8
      %p67 = por %p65, %p66
      %p68 = scmp.ne.s32.totalorder %s59, %s60
      %p69 = scmp.eq.s32.totalorder %s14, 0
      %p70 = por %p68, %p69
      %p71 = scmp.ne.s32.totalorder %s59, %s60
      %p72 = scmp.eq.s32.totalorder %s15, 8
      %p73 = por %p71, %p72
      %p75 = scmp.ne.s32.totalorder %s60, %s74
      %p76 = scmp.eq.s32.totalorder %s15, 0
      %p77 = por %p75, %p76
      %s79 = sadd.s32 %s78, 1
      %p82 = scmp.eq.s32.totalorder %s9, 8
      %p83 = scmp.ne.s32.totalorder %s78, %s80
      %p84 = scmp.eq.s32.totalorder %s9, 0
      %p85 = por %p83, %p84
      %p86 = scmp.ne.s32.totalorder %s78, %s80
      %p87 = scmp.eq.s32.totalorder %s14, 8
      %p88 = por %p86, %p87
      %p89 = scmp.ne.s32.totalorder %s80, %s81
      %p90 = scmp.eq.s32.totalorder %s14, 0
      %p91 = por %p89, %p90
      %p92 = scmp.ne.s32.totalorder %s80, %s81
      %p93 = scmp.eq.s32.totalorder %s15, 8
      %p94 = por %p92, %p93
      %p96 = scmp.ne.s32.totalorder %s81, %s95
      %p97 = scmp.eq.s32.totalorder %s15, 0
      %p98 = por %p96, %p97
      %s99 = ssub.s32 %s16, %s28
      %p100 = scmp.eq.s32.totalorder %s99, 0
      %s102 = sadd.s32 %s101, 1
      %s103 = scalar_select %p100, %s101, %s102
      %p106 = pneg %p100
      %p107 = scmp.eq.s32.totalorder %s9, 8
      %p108 = por %p106, %p107
      %p109 = scmp.ne.s32.totalorder %s101, %s104
      %p110 = scmp.eq.s32.totalorder %s9, 0
      %p111 = por %p109, %p110
      %p112 = scmp.ne.s32.totalorder %s101, %s104
      %p113 = scmp.eq.s32.totalorder %s14, 8
      %p114 = por %p112, %p113
      %p115 = scmp.ne.s32.totalorder %s104, %s105
      %p116 = scmp.eq.s32.totalorder %s14, 0
      %p117 = por %p115, %p116
      %p118 = scmp.ne.s32.totalorder %s104, %s105
      %p119 = scmp.eq.s32.totalorder %s15, 8
      %p120 = por %p118, %p119
      %p122 = scmp.ne.s32.totalorder %s105, %s121
      %p123 = scmp.eq.s32.totalorder %s15, 0
      %p124 = por %p122, %p123
      %p125 = scmp.le.s32.totalorder 1, %s9
      %p126 = scmp.lt.s32.totalorder %s9, 10
      %p127 = pnand %p125, %p126
      %p128 = pneg %p127
      // Predicated region
      $region9: #{dcp_dec_forward.5} parent=5 // pred_check
        _
      $region10: #{dcp_dec_forward.5} parent=5 // pred_check_branch
        %130 = sbr.rel (%p127) target = $region12
      $region11: #{dcp_dec_forward.5} parent=5 // pred_region
        %s131 = ssub.s32 %s9, 1
        // Predicated region
        $region13: #{dcp_dec_forward.5} parent=11 // pred_check
          %p132 = pneg %p70
        $region14: #{dcp_dec_forward.5} parent=11 // pred_check_branch
          %134 = sbr.rel (%p132) target = $region16
        $region15: #{dcp_dec_forward.5} parent=11 // pred_region
          _
        $region16: #{dcp_dec_forward.5} parent=11 // pred_fallthru
          _
        // Predicated region
        $region17: #{dcp_dec_forward.5} parent=11 // pred_check
          %p135 = pneg %p91
        $region18: #{dcp_dec_forward.5} parent=11 // pred_check_branch
          %137 = sbr.rel (%p135) target = $region20
        $region19: #{dcp_dec_forward.5} parent=11 // pred_region
          _
        $region20: #{dcp_dec_forward.5} parent=11 // pred_fallthru
          _
      $region12: #{dcp_dec_forward.5} parent=5 // pred_fallthru
        _
      %p138 = scmp.lt.s32.totalorder %s9, 9
      // Predicated region
      $region21: #{dcp_dec_forward.5} parent=5 // pred_check
        %p139 = pneg %p138
      $region22: #{dcp_dec_forward.5} parent=5 // pred_check_branch
        %141 = sbr.rel (%p139) target = $region24
      $region23: #{dcp_dec_forward.5} parent=5 // pred_region
        // Predicated region
        $region25: #{dcp_dec_forward.5} parent=23 // pred_check
          %p142 = pneg %p43
        $region26: #{dcp_dec_forward.5} parent=23 // pred_check_branch
          %144 = sbr.rel (%p142) target = $region28
        $region27: #{dcp_dec_forward.5} parent=23 // pred_region
          %s145 = sand.u32 %s33, 1
          %s146 = sand.u32 %s33, 1
          %s147 = smul.addr %s146, 64
          %s148 = scalar_lea.vmem [#allocation3], %s147
          %s149 = smul.u32 16, %s16
          %s150 = smul.addr %s149, 3
          %s151 = sadd.s32 %s17, %s150
          %s152 = smul.addr %s151, 4
          %s153 = scalar_lea.vmem %s0, %s152
          // Predicated region
          $region29: #{dcp_dec_forward.5} parent=27 // pred_check
            _
          $region30: #{dcp_dec_forward.5} parent=27 // pred_check_branch
            %155 = sbr.rel (0) target = $region32
          $region31: #{dcp_dec_forward.5} parent=27 // pred_region
            // Predicated region
            $region33: #{dcp_dec_forward.5} parent=31 // pred_check
              _
            $region34: #{dcp_dec_forward.5} parent=31 // pred_check_branch
              %157 = sbr.rel target = $region36
            $region35: #{dcp_dec_forward.5} parent=31 // pred_region
              // Predicated region
              $region48: #{dcp_dec_forward.5} parent=35 // pred_check
                _
              $region49: #{dcp_dec_forward.5} parent=35 // pred_check_branch
                %203 = sbr.rel (0) target = $region51
              $region50: #{dcp_dec_forward.5} parent=35 // pred_region
                loop: start=0, step=1, limit=1
                $region52: #{dcp_dec_forward.5} parent=50 // loop_pre_header
                  _
                $region53: #{dcp_dec_forward.5} parent=50 // loop_header
                  %s205 = sphi 0, %s209
                  %p206 = scmp.ge.s32.totalorder %s205, 1
                  %s210 = sphi %s153, %s153
                  %s211 = sphi %s148, %s148
                $region54: #{dcp_dec_forward.5} parent=50 // loop_header_branch
                  %208 = sbr.rel (%p206) target = $region58
                $region55: #{dcp_dec_forward.5} parent=50 // loop_body
                  _
                $region56: #{dcp_dec_forward.5} parent=50 // loop_footer
                  %s209 = sadd.s32 1, %s205
                $region57: #{dcp_dec_forward.5} parent=50 // loop_footer_branch
                  %204 = sbr.rel target = $region53
                $region58: #{dcp_dec_forward.5} parent=50 // loop_exit
                  _
                %s213 = ssub.s32 16, 1
                loop: start=0, step=1, limit=1
                $region59: #{dcp_dec_forward.5} parent=50 // loop_pre_header
                  _
                $region60: #{dcp_dec_forward.5} parent=50 // loop_header
                  %s215 = sphi 0, %s219
                  %p216 = scmp.ge.s32.totalorder %s215, 1
                  %s220 = sphi %s153, %s153
                  %s221 = sphi %s148, %s148
                $region61: #{dcp_dec_forward.5} parent=50 // loop_header_branch
                  %218 = sbr.rel (%p216) target = $region65
                $region62: #{dcp_dec_forward.5} parent=50 // loop_body
                  %v222 = vld [vmem:[%s220] sm:%s213]
                  %223 = vst [vmem:[%s221] sm:%s213] %v222
                  %v224 = vld [vmem:[%s220 + $0xc] sm:%s213]
                  %225 = vst [vmem:[%s221 + $0x4] sm:%s213] %v224
                  %v226 = vld [vmem:[%s220 + $0x18] sm:%s213]
                  %227 = vst [vmem:[%s221 + $0x8] sm:%s213] %v226
                  %v228 = vld [vmem:[%s220 + $0x24] sm:%s213]
                  %229 = vst [vmem:[%s221 + $0xc] sm:%s213] %v228
                  %v230 = vld [vmem:[%s220 + $0x30] sm:%s213]
                  %231 = vst [vmem:[%s221 + $0x10] sm:%s213] %v230
                  %v232 = vld [vmem:[%s220 + $0x3c] sm:%s213]
                  %233 = vst [vmem:[%s221 + $0x14] sm:%s213] %v232
                  %v234 = vld [vmem:[%s220 + $0x48] sm:%s213]
                  %235 = vst [vmem:[%s221 + $0x18] sm:%s213] %v234
                  %v236 = vld [vmem:[%s220 + $0x54] sm:%s213]
                  %237 = vst [vmem:[%s221 + $0x1c] sm:%s213] %v236
                  %v238 = vld [vmem:[%s220 + $0x60] sm:%s213]
                  %239 = vst [vmem:[%s221 + $0x20] sm:%s213] %v238
                  %v240 = vld [vmem:[%s220 + $0x6c] sm:%s213]
                  %241 = vst [vmem:[%s221 + $0x24] sm:%s213] %v240
                  %v242 = vld [vmem:[%s220 + $0x78] sm:%s213]
                  %243 = vst [vmem:[%s221 + $0x28] sm:%s213] %v242
                  %v244 = vld [vmem:[%s220 + $0x84] sm:%s213]
                  %245 = vst [vmem:[%s221 + $0x2c] sm:%s213] %v244
                  %v246 = vld [vmem:[%s220 + $0x90] sm:%s213]
                  %247 = vst [vmem:[%s221 + $0x30] sm:%s213] %v246
                  %v248 = vld [vmem:[%s220 + $0x9c] sm:%s213]
                  %249 = vst [vmem:[%s221 + $0x34] sm:%s213] %v248
                  %v250 = vld [vmem:[%s220 + $0xa8] sm:%s213]
                  %251 = vst [vmem:[%s221 + $0x38] sm:%s213] %v250
                  %v252 = vld [vmem:[%s220 + $0xb4] sm:%s213]
                  %253 = vst [vmem:[%s221 + $0x3c] sm:%s213] %v252
                $region63: #{dcp_dec_forward.5} parent=50 // loop_footer
                  %s219 = sadd.s32 1, %s215
                $region64: #{dcp_dec_forward.5} parent=50 // loop_footer_branch
                  %214 = sbr.rel target = $region60
                $region65: #{dcp_dec_forward.5} parent=50 // loop_exit
                  _
              $region51: #{dcp_dec_forward.5} parent=35 // pred_fallthru
                _
            $region36: #{dcp_dec_forward.5} parent=31 // pred_fallthru
              _
            // Predicated region
            $region37: #{dcp_dec_forward.5} parent=31 // pred_check
              _
            $region38: #{dcp_dec_forward.5} parent=31 // pred_check_branch
              %159 = sbr.rel (0) target = $region40
            $region39: #{dcp_dec_forward.5} parent=31 // pred_region
              %s161 = ssub.s32 16, 1
              loop: start=0, step=1, limit=1
              $region41: #{dcp_dec_forward.5} parent=39 // loop_pre_header
                _
              $region42: #{dcp_dec_forward.5} parent=39 // loop_header
                %s163 = sphi 0, %s167
                %p164 = scmp.ge.s32.totalorder %s163, 1
                %s168 = sphi %s153, %s153
                %s169 = sphi %s148, %s148
              $region43: #{dcp_dec_forward.5} parent=39 // loop_header_branch
                %166 = sbr.rel (%p164) target = $region47
              $region44: #{dcp_dec_forward.5} parent=39 // loop_body
                %v170 = vld [vmem:[%s168] sm:%s161]
                %171 = vst [vmem:[%s169] sm:%s161] %v170
                %v172 = vld [vmem:[%s168 + $0xc] sm:%s161]
                %173 = vst [vmem:[%s169 + $0x4] sm:%s161] %v172
                %v174 = vld [vmem:[%s168 + $0x18] sm:%s161]
                %175 = vst [vmem:[%s169 + $0x8] sm:%s161] %v174
                %v176 = vld [vmem:[%s168 + $0x24] sm:%s161]
                %177 = vst [vmem:[%s169 + $0xc] sm:%s161] %v176
                %v178 = vld [vmem:[%s168 + $0x30] sm:%s161]
                %179 = vst [vmem:[%s169 + $0x10] sm:%s161] %v178
                %v180 = vld [vmem:[%s168 + $0x3c] sm:%s161]
                %181 = vst [vmem:[%s169 + $0x14] sm:%s161] %v180
                %v182 = vld [vmem:[%s168 + $0x48] sm:%s161]
                %183 = vst [vmem:[%s169 + $0x18] sm:%s161] %v182
                %v184 = vld [vmem:[%s168 + $0x54] sm:%s161]
                %185 = vst [vmem:[%s169 + $0x1c] sm:%s161] %v184
                %v186 = vld [vmem:[%s168 + $0x60] sm:%s161]
                %187 = vst [vmem:[%s169 + $0x20] sm:%s161] %v186
                %v188 = vld [vmem:[%s168 + $0x6c] sm:%s161]
                %189 = vst [vmem:[%s169 + $0x24] sm:%s161] %v188
                %v190 = vld [vmem:[%s168 + $0x78] sm:%s161]
                %191 = vst [vmem:[%s169 + $0x28] sm:%s161] %v190
                %v192 = vld [vmem:[%s168 + $0x84] sm:%s161]
                %193 = vst [vmem:[%s169 + $0x2c] sm:%s161] %v192
                %v194 = vld [vmem:[%s168 + $0x90] sm:%s161]
                %195 = vst [vmem:[%s169 + $0x30] sm:%s161] %v194
                %v196 = vld [vmem:[%s168 + $0x9c] sm:%s161]
                %197 = vst [vmem:[%s169 + $0x34] sm:%s161] %v196
                %v198 = vld [vmem:[%s168 + $0xa8] sm:%s161]
                %199 = vst [vmem:[%s169 + $0x38] sm:%s161] %v198
                %v200 = vld [vmem:[%s168 + $0xb4] sm:%s161]
                %201 = vst [vmem:[%s169 + $0x3c] sm:%s161] %v200
              $region45: #{dcp_dec_forward.5} parent=39 // loop_footer
                %s167 = sadd.s32 1, %s163
              $region46: #{dcp_dec_forward.5} parent=39 // loop_footer_branch
                %162 = sbr.rel target = $region42
              $region47: #{dcp_dec_forward.5} parent=39 // loop_exit
                _
            $region40: #{dcp_dec_forward.5} parent=31 // pred_fallthru
              _
          $region32: #{dcp_dec_forward.5} parent=27 // pred_fallthru
            _
          %254 = vnop
        $region28: #{dcp_dec_forward.5} parent=23 // pred_fallthru
          _
      $region24: #{dcp_dec_forward.5} parent=5 // pred_fallthru
        _
      %p255 = scmp.le.s32.totalorder 1, %s9
      %p256 = scmp.lt.s32.totalorder %s9, 10
      %p257 = pnand %p255, %p256
      %p258 = pneg %p257
      // Predicated region
      $region66: #{dcp_dec_forward.5} parent=5 // pred_check
        _
      $region67: #{dcp_dec_forward.5} parent=5 // pred_check_branch
        %260 = sbr.rel (%p257) target = $region69
      $region68: #{dcp_dec_forward.5} parent=5 // pred_region
        %s261 = ssub.s32 %s9, 1
        %s262 = sand.u32 %s36, 1
        %s263 = sand.u32 %s36, 1
        %s264 = smul.addr %s263, 64
        %s265 = scalar_lea.vmem [#allocation3], %s264
        // Predicated region
        $region70: #{dcp_dec_forward.5} parent=68 // pred_check
          %p266 = pneg %p49
        $region71: #{dcp_dec_forward.5} parent=68 // pred_check_branch
          %268 = sbr.rel (%p266) target = $region73
        $region72: #{dcp_dec_forward.5} parent=68 // pred_region
          _
        $region73: #{dcp_dec_forward.5} parent=68 // pred_fallthru
          _
        %s269 = sand.u32 %s36, 1
        %s270 = sand.u32 %s36, 1
        %s271 = smul.addr %s270, 64
        %s272 = scalar_lea.vmem [#allocation3], %s271
        %p273 = pneg %p49
        %p274 = pneg %p46
        %p275 = pneg %p70
        %p276 = pneg %p67
        %p277 = pneg %p91
        %p278 = pneg %p88
        %p279 = pneg %p117
        %p280 = pneg %p114
        %s281 = smul.u32 16, %s18
        %p282 = scmp.lt.s32.totalorder %s281, 47
        %s283 = scalar_select %p282, %s281, 47
        %s284 = smul.addr %s283, 4
        %s285 = scalar_lea.vmem %s3, %s284
        %s286 = smul.u32 16, %s18
        %s287 = smul.u32 16, %s18
        %p288 = scmp.lt.s32.totalorder %s287, 47
        %s289 = scalar_select %p288, %s287, 47
        %s290 = smul.addr %s289, 4
        %s291 = scalar_lea.vmem %s3, %s290
        %s292 = smul.u32 16, %s18
        %p293 = scmp.eq.s32.totalorder %s19, 0
        // Predicated region
        $region74: #{dcp_dec_forward.5} parent=68 // pred_check
          %p294 = pneg %p293
        $region75: #{dcp_dec_forward.5} parent=68 // pred_check_branch
          %296 = sbr.rel (%p294) target = $region77
        $region76: #{dcp_dec_forward.5} parent=68 // pred_region
          %297 = vst [vmem:[#allocation2] sm:$0xff] 0.0
          %298 = vst [vmem:[#allocation2 + $0x8] sm:$0xff] 0.0
          %299 = vst [vmem:[#allocation2 + $0x10] sm:$0xff] 0.0
          %300 = vst [vmem:[#allocation2 + $0x18] sm:$0xff] 0.0
          %301 = vst [vmem:[#allocation2 + $0x20] sm:$0xff] 0.0
          %302 = vst [vmem:[#allocation2 + $0x28] sm:$0xff] 0.0
          %303 = vst [vmem:[#allocation2 + $0x30] sm:$0xff] 0.0
          %304 = vst [vmem:[#allocation2 + $0x38] sm:$0xff] 0.0
          %305 = vst [vmem:[#allocation2 + $0x40] sm:$0xff] 0.0
          %306 = vst [vmem:[#allocation2 + $0x48] sm:$0xff] 0.0
          %307 = vst [vmem:[#allocation2 + $0x50] sm:$0xff] 0.0
          %308 = vst [vmem:[#allocation2 + $0x58] sm:$0xff] 0.0
          %309 = vst [vmem:[#allocation2 + $0x60] sm:$0xff] 0.0
          %310 = vst [vmem:[#allocation2 + $0x68] sm:$0xff] 0.0
          %311 = vst [vmem:[#allocation2 + $0x70] sm:$0xff] 0.0
          %312 = vst [vmem:[#allocation2 + $0x78] sm:$0xff] 0.0
        $region77: #{dcp_dec_forward.5} parent=68 // pred_fallthru
          _
        %s313 = smul.u32 %s19, 128
        %v314 = vld [vmem:[#allocation2] sm:$0xff]
        %v315 = vld [vmem:[#allocation2 + $0x8] sm:$0xff]
        %v316 = vld [vmem:[#allocation2 + $0x10] sm:$0xff]
        %v317 = vld [vmem:[#allocation2 + $0x18] sm:$0xff]
        %v318 = vld [vmem:[#allocation2 + $0x20] sm:$0xff]
        %v319 = vld [vmem:[#allocation2 + $0x28] sm:$0xff]
        %v320 = vld [vmem:[#allocation2 + $0x30] sm:$0xff]
        %v321 = vld [vmem:[#allocation2 + $0x38] sm:$0xff]
        %v322 = vld [vmem:[#allocation2 + $0x40] sm:$0xff]
        %v323 = vld [vmem:[#allocation2 + $0x48] sm:$0xff]
        %v324 = vld [vmem:[#allocation2 + $0x50] sm:$0xff]
        %v325 = vld [vmem:[#allocation2 + $0x58] sm:$0xff]
        %v326 = vld [vmem:[#allocation2 + $0x60] sm:$0xff]
        %v327 = vld [vmem:[#allocation2 + $0x68] sm:$0xff]
        %v328 = vld [vmem:[#allocation2 + $0x70] sm:$0xff]
        %v329 = vld [vmem:[#allocation2 + $0x78] sm:$0xff]
        %v330 = vld [vmem:[%s265] sm:$0xf]
        %v331 = vld [vmem:[%s265 + $0x4] sm:$0xf]
        %v332 = vld [vmem:[%s265 + $0x8] sm:$0xf]
        %v333 = vld [vmem:[%s265 + $0xc] sm:$0xf]
        %v334 = vld [vmem:[%s265 + $0x10] sm:$0xf]
        %v335 = vld [vmem:[%s265 + $0x14] sm:$0xf]
        %v336 = vld [vmem:[%s265 + $0x18] sm:$0xf]
        %v337 = vld [vmem:[%s265 + $0x1c] sm:$0xf]
        %v338 = vld [vmem:[%s265 + $0x20] sm:$0xf]
        %v339 = vld [vmem:[%s265 + $0x24] sm:$0xf]
        %v340 = vld [vmem:[%s265 + $0x28] sm:$0xf]
        %v341 = vld [vmem:[%s265 + $0x2c] sm:$0xf]
        %v342 = vld [vmem:[%s265 + $0x30] sm:$0xf]
        %v343 = vld [vmem:[%s265 + $0x34] sm:$0xf]
        %v344 = vld [vmem:[%s265 + $0x38] sm:$0xf]
        %v345 = vld [vmem:[%s265 + $0x3c] sm:$0xf]
        %s346 = sshra.s32 %s313, 3
        %s347 = sand.u32 %s313, 7
        %s348 = smul.addr %s346, 4
        %s349 = scalar_lea.vmem %s1, %s348
        %v350 = vld [vmem:[%s349] sm:$0xf]
        %v351 = vld [vmem:[%s349 + $0x4] sm:$0xf]
        %v352 = vld [vmem:[%s349 + $0x8] sm:$0xf]
        %v353 = vld [vmem:[%s349 + $0xc] sm:$0xf]
        %v354 = vld [vmem:[%s349 + $0x10] sm:$0xf]
        %v355 = vld [vmem:[%s349 + $0x14] sm:$0xf]
        %v356 = vld [vmem:[%s349 + $0x18] sm:$0xf]
        %v357 = vld [vmem:[%s349 + $0x1c] sm:$0xf]
        %v358 = vld [vmem:[%s349 + $0x20] sm:$0xf]
        %v359 = vld [vmem:[%s349 + $0x24] sm:$0xf]
        %v360 = vld [vmem:[%s349 + $0x28] sm:$0xf]
        %v361 = vld [vmem:[%s349 + $0x2c] sm:$0xf]
        %v362 = vld [vmem:[%s349 + $0x30] sm:$0xf]
        %v363 = vld [vmem:[%s349 + $0x34] sm:$0xf]
        %v364 = vld [vmem:[%s349 + $0x38] sm:$0xf]
        %v365 = vld [vmem:[%s349 + $0x3c] sm:$0xf]
        %v382 = vunpack.c.l.b16 %v330
        %v383 = vunpack.c.l.b16 %v331
        %v384 = vunpack.c.l.b16 %v332
        %v385 = vunpack.c.l.b16 %v333
        %v386 = vunpack.c.l.b16 %v334
        %v387 = vunpack.c.l.b16 %v335
        %v388 = vunpack.c.l.b16 %v336
        %v389 = vunpack.c.l.b16 %v337
        %v390 = vunpack.c.l.b16 %v338
        %v391 = vunpack.c.l.b16 %v339
        %v392 = vunpack.c.l.b16 %v340
        %v393 = vunpack.c.l.b16 %v341
        %v394 = vunpack.c.l.b16 %v342
        %v395 = vunpack.c.l.b16 %v343
        %v396 = vunpack.c.l.b16 %v344
        %v397 = vunpack.c.l.b16 %v345
        %v398 = vpack.c.b16 %v383, %v382
        %v399 = vpack.c.b16 %v385, %v384
        %v400 = vpack.c.b16 %v387, %v386
        %v401 = vpack.c.b16 %v389, %v388
        %v402 = vpack.c.b16 %v391, %v390
        %v403 = vpack.c.b16 %v393, %v392
        %v404 = vpack.c.b16 %v395, %v394
        %v405 = vpack.c.b16 %v397, %v396
        %v430 = vunpack.c.l.b16 %v350
        %v431 = vunpack.c.l.b16 %v351
        %v432 = vunpack.c.l.b16 %v352
        %v433 = vunpack.c.l.b16 %v353
        %v434 = vunpack.c.l.b16 %v354
        %v435 = vunpack.c.l.b16 %v355
        %v436 = vunpack.c.l.b16 %v356
        %v437 = vunpack.c.l.b16 %v357
        %v438 = vunpack.c.l.b16 %v358
        %v439 = vunpack.c.l.b16 %v359
        %v440 = vunpack.c.l.b16 %v360
        %v441 = vunpack.c.l.b16 %v361
        %v442 = vunpack.c.l.b16 %v362
        %v443 = vunpack.c.l.b16 %v363
        %v444 = vunpack.c.l.b16 %v364
        %v445 = vunpack.c.l.b16 %v365
        %v446 = vpack.c.b16 %v431, %v430
        %v447 = vpack.c.b16 %v433, %v432
        %v448 = vpack.c.b16 %v435, %v434
        %v449 = vpack.c.b16 %v437, %v436
        %v450 = vpack.c.b16 %v439, %v438
        %v451 = vpack.c.b16 %v441, %v440
        %v452 = vpack.c.b16 %v443, %v442
        %v453 = vpack.c.b16 %v445, %v444
        %462 = vmatpush.bf16.msra.mxu0 %v453
        %463 = vmatpush.bf16.msra.mxu0 %v452
        %464 = vmatpush.bf16.msra.mxu0 %v451
        %465 = vmatpush.bf16.msra.mxu0 %v450
        %466 = vmatpush.bf16.msra.mxu0 %v449
        %467 = vmatpush.bf16.msra.mxu0 %v448
        %468 = vmatpush.bf16.msra.mxu0 %v447
        %469 = vmatpush.bf16.msra.mxu0 %v446
        %470 = vmatmul.bf16.gmra.mxu0 %v398
        %v471 = vpop.f32.mrf.mxu0
        %v472 = vadd.f32 0.0, %v471
        %v473 = vpop.f32.mrf.mxu0
        %v474 = vadd.f32 0.0, %v473
        %475 = vmatmul.bf16.gmra.mxu0 %v399
        %v476 = vpop.f32.mrf.mxu0
        %v477 = vadd.f32 0.0, %v476
        %v478 = vpop.f32.mrf.mxu0
        %v479 = vadd.f32 0.0, %v478
        %480 = vmatmul.bf16.gmra.mxu0 %v400
        %v481 = vpop.f32.mrf.mxu0
        %v482 = vadd.f32 0.0, %v481
        %v483 = vpop.f32.mrf.mxu0
        %v484 = vadd.f32 0.0, %v483
        %485 = vmatmul.bf16.gmra.mxu0 %v401
        %v486 = vpop.f32.mrf.mxu0
        %v487 = vadd.f32 0.0, %v486
        %v488 = vpop.f32.mrf.mxu0
        %v489 = vadd.f32 0.0, %v488
        %490 = vmatmul.bf16.gmra.mxu0 %v402
        %v491 = vpop.f32.mrf.mxu0
        %v492 = vadd.f32 0.0, %v491
        %v493 = vpop.f32.mrf.mxu0
        %v494 = vadd.f32 0.0, %v493
        %495 = vmatmul.bf16.gmra.mxu0 %v403
        %v496 = vpop.f32.mrf.mxu0
        %v497 = vadd.f32 0.0, %v496
        %v498 = vpop.f32.mrf.mxu0
        %v499 = vadd.f32 0.0, %v498
        %500 = vmatmul.bf16.gmra.mxu0 %v404
        %v501 = vpop.f32.mrf.mxu0
        %v502 = vadd.f32 0.0, %v501
        %v503 = vpop.f32.mrf.mxu0
        %v504 = vadd.f32 0.0, %v503
        %505 = vmatmul.bf16.gmra.mxu0 %v405
        %v506 = vpop.f32.mrf.mxu0
        %v507 = vadd.f32 0.0, %v506
        %v508 = vpop.f32.mrf.mxu0
        %v509 = vadd.f32 0.0, %v508
        %510 = vdwg.mxu0
        %v511 = vadd.f32 %v314, %v472
        %v512 = vadd.f32 %v315, %v474
        %v513 = vadd.f32 %v316, %v477
        %v514 = vadd.f32 %v317, %v479
        %v515 = vadd.f32 %v318, %v482
        %v516 = vadd.f32 %v319, %v484
        %v517 = vadd.f32 %v320, %v487
        %v518 = vadd.f32 %v321, %v489
        %v519 = vadd.f32 %v322, %v492
        %v520 = vadd.f32 %v323, %v494
        %v521 = vadd.f32 %v324, %v497
        %v522 = vadd.f32 %v325, %v499
        %v523 = vadd.f32 %v326, %v502
        %v524 = vadd.f32 %v327, %v504
        %v525 = vadd.f32 %v328, %v507
        %v526 = vadd.f32 %v329, %v509
        %527 = vst [vmem:[#allocation2] sm:$0xff] %v511
        %528 = vst [vmem:[#allocation2 + $0x8] sm:$0xff] %v512
        %529 = vst [vmem:[#allocation2 + $0x10] sm:$0xff] %v513
        %530 = vst [vmem:[#allocation2 + $0x18] sm:$0xff] %v514
        %531 = vst [vmem:[#allocation2 + $0x20] sm:$0xff] %v515
        %532 = vst [vmem:[#allocation2 + $0x28] sm:$0xff] %v516
        %533 = vst [vmem:[#allocation2 + $0x30] sm:$0xff] %v517
        %534 = vst [vmem:[#allocation2 + $0x38] sm:$0xff] %v518
        %535 = vst [vmem:[#allocation2 + $0x40] sm:$0xff] %v519
        %536 = vst [vmem:[#allocation2 + $0x48] sm:$0xff] %v520
        %537 = vst [vmem:[#allocation2 + $0x50] sm:$0xff] %v521
        %538 = vst [vmem:[#allocation2 + $0x58] sm:$0xff] %v522
        %539 = vst [vmem:[#allocation2 + $0x60] sm:$0xff] %v523
        %540 = vst [vmem:[#allocation2 + $0x68] sm:$0xff] %v524
        %541 = vst [vmem:[#allocation2 + $0x70] sm:$0xff] %v525
        %542 = vst [vmem:[#allocation2 + $0x78] sm:$0xff] %v526
        %p543 = scmp.eq.s32.totalorder %s19, 2
        // Predicated region
        $region78: #{dcp_dec_forward.5} parent=68 // pred_check
          %p544 = pneg %p543
        $region79: #{dcp_dec_forward.5} parent=68 // pred_check_branch
          %546 = sbr.rel (%p544) target = $region81
        $region80: #{dcp_dec_forward.5} parent=68 // pred_region
          %v547 = vld [vmem:[#allocation2] sm:$0xff]
          %v548 = vld [vmem:[#allocation2 + $0x8] sm:$0xff]
          %v549 = vld [vmem:[#allocation2 + $0x10] sm:$0xff]
          %v550 = vld [vmem:[#allocation2 + $0x18] sm:$0xff]
          %v551 = vld [vmem:[#allocation2 + $0x20] sm:$0xff]
          %v552 = vld [vmem:[#allocation2 + $0x28] sm:$0xff]
          %v553 = vld [vmem:[#allocation2 + $0x30] sm:$0xff]
          %v554 = vld [vmem:[#allocation2 + $0x38] sm:$0xff]
          %v555 = vld [vmem:[#allocation2 + $0x40] sm:$0xff]
          %v556 = vld [vmem:[#allocation2 + $0x48] sm:$0xff]
          %v557 = vld [vmem:[#allocation2 + $0x50] sm:$0xff]
          %v558 = vld [vmem:[#allocation2 + $0x58] sm:$0xff]
          %v559 = vld [vmem:[#allocation2 + $0x60] sm:$0xff]
          %v560 = vld [vmem:[#allocation2 + $0x68] sm:$0xff]
          %v561 = vld [vmem:[#allocation2 + $0x70] sm:$0xff]
          %v562 = vld [vmem:[#allocation2 + $0x78] sm:$0xff]
          %v563 = vmax.f32 %v547, 0.0
          %v564 = vmax.f32 %v548, 0.0
          %v565 = vmax.f32 %v549, 0.0
          %v566 = vmax.f32 %v550, 0.0
          %v567 = vmax.f32 %v551, 0.0
          %v568 = vmax.f32 %v552, 0.0
          %v569 = vmax.f32 %v553, 0.0
          %v570 = vmax.f32 %v554, 0.0
          %v571 = vmax.f32 %v555, 0.0
          %v572 = vmax.f32 %v556, 0.0
          %v573 = vmax.f32 %v557, 0.0
          %v574 = vmax.f32 %v558, 0.0
          %v575 = vmax.f32 %v559, 0.0
          %v576 = vmax.f32 %v560, 0.0
          %v577 = vmax.f32 %v561, 0.0
          %v578 = vmax.f32 %v562, 0.0
          %v579 = vld [vmem:[%s2] sm:$0xff]
          %v580 = vld [vmem:[%s2 + $0x8] sm:$0xff]
          %v581 = vld [vmem:[%s2 + $0x10] sm:$0xff]
          %v582 = vld [vmem:[%s2 + $0x18] sm:$0xff]
          %v583 = vld [vmem:[%s2 + $0x20] sm:$0xff]
          %v584 = vld [vmem:[%s2 + $0x28] sm:$0xff]
          %v585 = vld [vmem:[%s2 + $0x30] sm:$0xff]
          %v586 = vld [vmem:[%s2 + $0x38] sm:$0xff]
          %v587 = vld [vmem:[%s2 + $0x40] sm:$0xff]
          %v588 = vld [vmem:[%s2 + $0x48] sm:$0xff]
          %v589 = vld [vmem:[%s2 + $0x50] sm:$0xff]
          %v590 = vld [vmem:[%s2 + $0x58] sm:$0xff]
          %v591 = vld [vmem:[%s2 + $0x60] sm:$0xff]
          %v592 = vld [vmem:[%s2 + $0x68] sm:$0xff]
          %v593 = vld [vmem:[%s2 + $0x70] sm:$0xff]
          %v594 = vld [vmem:[%s2 + $0x78] sm:$0xff]
          %595 = vmatpush.msra.mxu0 %v594
          %596 = vmatpush.msra.mxu0 %v593
          %597 = vmatpush.msra.mxu0 %v592
          %598 = vmatpush.msra.mxu0 %v591
          %599 = vmatpush.msra.mxu0 %v590
          %600 = vmatpush.msra.mxu0 %v589
          %601 = vmatpush.msra.mxu0 %v588
          %602 = vmatpush.msra.mxu0 %v587
          %603 = vmatpush.msra.mxu0 %v586
          %604 = vmatpush.msra.mxu0 %v585
          %605 = vmatpush.msra.mxu0 %v584
          %606 = vmatpush.msra.mxu0 %v583
          %607 = vmatpush.msra.mxu0 %v582
          %608 = vmatpush.msra.mxu0 %v581
          %609 = vmatpush.msra.mxu0 %v580
          %610 = vmatpush.msra.mxu0 %v579
          %611 = vmatmul.f32.gmra.mxu0 %v563
          %v612 = vpop.f32.mrf.mxu0
          %v613 = vadd.f32 0.0, %v612
          %614 = vmatmul.f32.gmra.mxu0 %v564
          %v615 = vpop.f32.mrf.mxu0
          %v616 = vadd.f32 0.0, %v615
          %617 = vmatmul.f32.gmra.mxu0 %v565
          %v618 = vpop.f32.mrf.mxu0
          %v619 = vadd.f32 0.0, %v618
          %620 = vmatmul.f32.gmra.mxu0 %v566
          %v621 = vpop.f32.mrf.mxu0
          %v622 = vadd.f32 0.0, %v621
          %623 = vmatmul.f32.gmra.mxu0 %v567
          %v624 = vpop.f32.mrf.mxu0
          %v625 = vadd.f32 0.0, %v624
          %626 = vmatmul.f32.gmra.mxu0 %v568
          %v627 = vpop.f32.mrf.mxu0
          %v628 = vadd.f32 0.0, %v627
          %629 = vmatmul.f32.gmra.mxu0 %v569
          %v630 = vpop.f32.mrf.mxu0
          %v631 = vadd.f32 0.0, %v630
          %632 = vmatmul.f32.gmra.mxu0 %v570
          %v633 = vpop.f32.mrf.mxu0
          %v634 = vadd.f32 0.0, %v633
          %635 = vmatmul.f32.gmra.mxu0 %v571
          %v636 = vpop.f32.mrf.mxu0
          %v637 = vadd.f32 0.0, %v636
          %638 = vmatmul.f32.gmra.mxu0 %v572
          %v639 = vpop.f32.mrf.mxu0
          %v640 = vadd.f32 0.0, %v639
          %641 = vmatmul.f32.gmra.mxu0 %v573
          %v642 = vpop.f32.mrf.mxu0
          %v643 = vadd.f32 0.0, %v642
          %644 = vmatmul.f32.gmra.mxu0 %v574
          %v645 = vpop.f32.mrf.mxu0
          %v646 = vadd.f32 0.0, %v645
          %647 = vmatmul.f32.gmra.mxu0 %v575
          %v648 = vpop.f32.mrf.mxu0
          %v649 = vadd.f32 0.0, %v648
          %650 = vmatmul.f32.gmra.mxu0 %v576
          %v651 = vpop.f32.mrf.mxu0
          %v652 = vadd.f32 0.0, %v651
          %653 = vmatmul.f32.gmra.mxu0 %v577
          %v654 = vpop.f32.mrf.mxu0
          %v655 = vadd.f32 0.0, %v654
          %656 = vmatmul.f32.gmra.mxu0 %v578
          %v657 = vpop.f32.mrf.mxu0
          %v658 = vadd.f32 0.0, %v657
          %659 = vdwg.mxu0
          %v660 = vpack.c.bf16 %v613, %v613
          %v661 = vpack.c.bf16 %v616, %v616
          %v662 = vpack.c.bf16 %v619, %v619
          %v663 = vpack.c.bf16 %v622, %v622
          %v664 = vpack.c.bf16 %v625, %v625
          %v665 = vpack.c.bf16 %v628, %v628
          %v666 = vpack.c.bf16 %v631, %v631
          %v667 = vpack.c.bf16 %v634, %v634
          %v668 = vpack.c.bf16 %v637, %v637
          %v669 = vpack.c.bf16 %v640, %v640
          %v670 = vpack.c.bf16 %v643, %v643
          %v671 = vpack.c.bf16 %v646, %v646
          %v672 = vpack.c.bf16 %v649, %v649
          %v673 = vpack.c.bf16 %v652, %v652
          %v674 = vpack.c.bf16 %v655, %v655
          %v675 = vpack.c.bf16 %v658, %v658
          %676 = vst [vmem:[%s291] sm:$0xf] %v660
          %677 = vst [vmem:[%s291 + $0x4] sm:$0xf] %v661
          %678 = vst [vmem:[%s291 + $0x8] sm:$0xf] %v662
          %679 = vst [vmem:[%s291 + $0xc] sm:$0xf] %v663
          %680 = vst [vmem:[%s291 + $0x10] sm:$0xf] %v664
          %681 = vst [vmem:[%s291 + $0x14] sm:$0xf] %v665
          %682 = vst [vmem:[%s291 + $0x18] sm:$0xf] %v666
          %683 = vst [vmem:[%s291 + $0x1c] sm:$0xf] %v667
          %684 = vst [vmem:[%s291 + $0x20] sm:$0xf] %v668
          %685 = vst [vmem:[%s291 + $0x24] sm:$0xf] %v669
          %686 = vst [vmem:[%s291 + $0x28] sm:$0xf] %v670
          %687 = vst [vmem:[%s291 + $0x2c] sm:$0xf] %v671
          %688 = vst [vmem:[%s291 + $0x30] sm:$0xf] %v672
          %689 = vst [vmem:[%s291 + $0x34] sm:$0xf] %v673
          %690 = vst [vmem:[%s291 + $0x38] sm:$0xf] %v674
          %691 = vst [vmem:[%s291 + $0x3c] sm:$0xf] %v675
        $region81: #{dcp_dec_forward.5} parent=68 // pred_fallthru
          _
        %s692 = smul.u32 16, %s18
        %p693 = scmp.lt.s32.totalorder %s692, 47
        %s694 = scalar_select %p693, %s692, 47
        %s695 = smul.addr %s694, 4
        %s696 = scalar_lea.vmem %s3, %s695
        // Predicated region
        $region82: #{dcp_dec_forward.5} parent=68 // pred_check
          %p697 = pneg %p114
        $region83: #{dcp_dec_forward.5} parent=68 // pred_check_branch
          %699 = sbr.rel (%p697) target = $region85
        $region84: #{dcp_dec_forward.5} parent=68 // pred_region
          %s700 = smul.u32 16, %s18
        $region85: #{dcp_dec_forward.5} parent=68 // pred_fallthru
          _
      $region69: #{dcp_dec_forward.5} parent=5 // pred_fallthru
        _
      %p701 = scmp.le.s32.totalorder 2, %s9
      // Predicated region
      $region86: #{dcp_dec_forward.5} parent=5 // pred_check
        %p702 = pneg %p701
      $region87: #{dcp_dec_forward.5} parent=5 // pred_check_branch
        %704 = sbr.rel (%p702) target = $region89
      $region88: #{dcp_dec_forward.5} parent=5 // pred_region
        %s705 = ssub.s32 %s9, 2
        // Predicated region
        $region90: #{dcp_dec_forward.5} parent=88 // pred_check
          %p706 = pneg %p120
        $region91: #{dcp_dec_forward.5} parent=88 // pred_check_branch
          %708 = sbr.rel (%p706) target = $region93
        $region92: #{dcp_dec_forward.5} parent=88 // pred_region
          %s709 = smul.u32 16, %s20
          %p710 = scmp.lt.s32.totalorder %s709, 47
          %s711 = scalar_select %p710, %s709, 47
          %s712 = smul.addr %s711, 4
          %s713 = scalar_lea.vmem %s3, %s712
        $region93: #{dcp_dec_forward.5} parent=88 // pred_fallthru
          _
      $region89: #{dcp_dec_forward.5} parent=5 // pred_fallthru
        _
    $region6: #{dcp_dec_forward.5} parent=1 // loop_footer
      %s13 = sadd.s32 1, %s9
    $region7: #{dcp_dec_forward.5} parent=1 // loop_footer_branch
      %8 = sbr.rel target = $region3
    $region8: #{dcp_dec_forward.5} parent=1 // loop_exit
      _

// kernel: dcp_dec_forward.6
$region0: #{dcp_dec_forward.6}
  #allocation0 [shape = 'u32[]', space=smem, size = 0x4, offset = 0x4, fixed_abs, tag = 'smem constant byte address 0x4 - core index']
  #allocation1 [shape = 'u32[72,128]{1,0:T(1,128)}', space=vmem, size = 0x9000, scoped, tag = 'internal scratch']
  #allocation2 [shape = 'f32[128,128]{1,0:T(8,128)}', space=vmem, size = 0x10000, scoped, tag = 'scratch operand']
  %s0 = inlined_call_operand.vmem [shape: bf16[384,384], index: 0, kind: input, shape index: {}]
  %s1 = inlined_call_operand.vmem [shape: bf16[384,128], index: 1, kind: input, shape index: {}]
  %s2 = inlined_call_operand.vmem [shape: f32[128,128], index: 2, kind: input, shape index: {}]
  %s3 = inlined_call_operand.vmem [shape: f32[1,128], index: 3, kind: input, shape index: {}]
  %s4 = inlined_call_operand.vmem [shape: f32[384,128], index: 4, kind: output, shape index: {0}]
  %s5 = inlined_call_operand.vmem [shape: f32[384,128], index: 5, kind: output, shape index: {1}]
  %6 = xla_tuple %s4, %s5
  %s7 = sld [smem:[#allocation0]]
  $region106: #{dcp_dec_forward.6} parent=0
    _
  %s9 = ssub.s32 1, %s7
  %s10 = scalar_select 0, %s9, %s7
  $region1: #{dcp_dec_forward.6} parent=0
    #allocation3 [shape = 'u8[65536]{0}', space=vmem, size = 0x10000, scoped, tag = 'input window, operand 0']
    loop: start=0, step=1, limit=11
    $region2: #{dcp_dec_forward.6} parent=1 // loop_pre_header
      _
    $region3: #{dcp_dec_forward.6} parent=1 // loop_header
      %s12 = sphi 0, %s16
      %p13 = scmp.ge.s32.totalorder %s12, 11
      %s19 = sphi 0, %s31
      %s20 = sphi 0, %s27
      %s21 = sphi 0, %s19
      %s22 = sphi 0, %s20
      %s23 = sphi 0, %s21
      %s24 = sphi 0, %s22
      %s36 = sphi 0, %s38
      %s39 = sphi 0, %s36
      %s40 = sphi 0, %s39
      %s56 = sphi 0, %s40
      %s60 = sphi 0, %s60
      %s62 = sphi 0, %s60
      %s63 = sphi 0, %s62
      %s77 = sphi 0, %s63
      %s81 = sphi 0, %s81
      %s83 = sphi 0, %s81
      %s84 = sphi 0, %s83
      %s98 = sphi 0, %s84
      %s102 = sphi 0, %s102
      %s104 = sphi 0, %s102
      %s105 = sphi 0, %s104
      %s119 = sphi 0, %s105
      %s125 = sphi 0, %s127
      %s128 = sphi 0, %s125
      %s129 = sphi 0, %s128
      %s145 = sphi 0, %s129
      %s151 = sphi 0, %s153
      %s154 = sphi 0, %s151
      %s155 = sphi 0, %s154
      %s171 = sphi 0, %s155
    $region4: #{dcp_dec_forward.6} parent=1 // loop_header_branch
      %15 = sbr.rel (%p13) target = $region8
    $region5: #{dcp_dec_forward.6} parent=1 // loop_body
      %s17 = ssub.s32 %s12, 1
      %s18 = ssub.s32 %s12, 2
      %s25 = sadd.s32 1, %s20
      %p26 = scmp.ge.s32.totalorder %s25, 3
      %s27 = scalar_select %p26, 0, %s25
      %s28 = sadd.s32 1, %s19
      %s29 = scalar_select %p26, %s28, %s19
      %p30 = scmp.ge.s32.totalorder %s29, 3
      %s31 = scalar_select %p30, 0, %s29
      %s32 = ssub.s32 %s19, %s31
      %s33 = ssub.s32 %s20, %s27
      %s34 = sor.u32 %s32, %s33
      %p35 = scmp.eq.s32.totalorder %s34, 0
      %s37 = sadd.s32 %s36, 1
      %s38 = scalar_select %p35, %s36, %s37
      %p41 = pneg %p35
      %p42 = scmp.eq.s32.totalorder %s12, 8
      %p43 = por %p41, %p42
      %p44 = scmp.ne.s32.totalorder %s36, %s39
      %p45 = scmp.eq.s32.totalorder %s12, 0
      %p46 = por %p44, %p45
      %p47 = scmp.ne.s32.totalorder %s36, %s39
      %p48 = scmp.eq.s32.totalorder %s17, 8
      %p49 = por %p47, %p48
      %p50 = scmp.ne.s32.totalorder %s39, %s40
      %p51 = scmp.eq.s32.totalorder %s17, 0
      %p52 = por %p50, %p51
      %p53 = scmp.ne.s32.totalorder %s39, %s40
      %p54 = scmp.eq.s32.totalorder %s18, 8
      %p55 = por %p53, %p54
      %p57 = scmp.ne.s32.totalorder %s40, %s56
      %p58 = scmp.eq.s32.totalorder %s18, 0
      %p59 = por %p57, %p58
      %s61 = sadd.s32 %s60, 1
      %p64 = scmp.eq.s32.totalorder %s12, 8
      %p65 = scmp.ne.s32.totalorder %s60, %s62
      %p66 = scmp.eq.s32.totalorder %s12, 0
      %p67 = por %p65, %p66
      %p68 = scmp.ne.s32.totalorder %s60, %s62
      %p69 = scmp.eq.s32.totalorder %s17, 8
      %p70 = por %p68, %p69
      %p71 = scmp.ne.s32.totalorder %s62, %s63
      %p72 = scmp.eq.s32.totalorder %s17, 0
      %p73 = por %p71, %p72
      %p74 = scmp.ne.s32.totalorder %s62, %s63
      %p75 = scmp.eq.s32.totalorder %s18, 8
      %p76 = por %p74, %p75
      %p78 = scmp.ne.s32.totalorder %s63, %s77
      %p79 = scmp.eq.s32.totalorder %s18, 0
      %p80 = por %p78, %p79
      %s82 = sadd.s32 %s81, 1
      %p85 = scmp.eq.s32.totalorder %s12, 8
      %p86 = scmp.ne.s32.totalorder %s81, %s83
      %p87 = scmp.eq.s32.totalorder %s12, 0
      %p88 = por %p86, %p87
      %p89 = scmp.ne.s32.totalorder %s81, %s83
      %p90 = scmp.eq.s32.totalorder %s17, 8
      %p91 = por %p89, %p90
      %p92 = scmp.ne.s32.totalorder %s83, %s84
      %p93 = scmp.eq.s32.totalorder %s17, 0
      %p94 = por %p92, %p93
      %p95 = scmp.ne.s32.totalorder %s83, %s84
      %p96 = scmp.eq.s32.totalorder %s18, 8
      %p97 = por %p95, %p96
      %p99 = scmp.ne.s32.totalorder %s84, %s98
      %p100 = scmp.eq.s32.totalorder %s18, 0
      %p101 = por %p99, %p100
      %s103 = sadd.s32 %s102, 1
      %p106 = scmp.eq.s32.totalorder %s12, 8
      %p107 = scmp.ne.s32.totalorder %s102, %s104
      %p108 = scmp.eq.s32.totalorder %s12, 0
      %p109 = por %p107, %p108
      %p110 = scmp.ne.s32.totalorder %s102, %s104
      %p111 = scmp.eq.s32.totalorder %s17, 8
      %p112 = por %p110, %p111
      %p113 = scmp.ne.s32.totalorder %s104, %s105
      %p114 = scmp.eq.s32.totalorder %s17, 0
      %p115 = por %p113, %p114
      %p116 = scmp.ne.s32.totalorder %s104, %s105
      %p117 = scmp.eq.s32.totalorder %s18, 8
      %p118 = por %p116, %p117
      %p120 = scmp.ne.s32.totalorder %s105, %s119
      %p121 = scmp.eq.s32.totalorder %s18, 0
      %p122 = por %p120, %p121
      %s123 = ssub.s32 %s19, %s31
      %p124 = scmp.eq.s32.totalorder %s123, 0
      %s126 = sadd.s32 %s125, 1
      %s127 = scalar_select %p124, %s125, %s126
      %p130 = pneg %p124
      %p131 = scmp.eq.s32.totalorder %s12, 8
      %p132 = por %p130, %p131
      %p133 = scmp.ne.s32.totalorder %s125, %s128
      %p134 = scmp.eq.s32.totalorder %s12, 0
      %p135 = por %p133, %p134
      %p136 = scmp.ne.s32.totalorder %s125, %s128
      %p137 = scmp.eq.s32.totalorder %s17, 8
      %p138 = por %p136, %p137
      %p139 = scmp.ne.s32.totalorder %s128, %s129
      %p140 = scmp.eq.s32.totalorder %s17, 0
      %p141 = por %p139, %p140
      %p142 = scmp.ne.s32.totalorder %s128, %s129
      %p143 = scmp.eq.s32.totalorder %s18, 8
      %p144 = por %p142, %p143
      %p146 = scmp.ne.s32.totalorder %s129, %s145
      %p147 = scmp.eq.s32.totalorder %s18, 0
      %p148 = por %p146, %p147
      %s149 = ssub.s32 %s19, %s31
      %p150 = scmp.eq.s32.totalorder %s149, 0
      %s152 = sadd.s32 %s151, 1
      %s153 = scalar_select %p150, %s151, %s152
      %p156 = pneg %p150
      %p157 = scmp.eq.s32.totalorder %s12, 8
      %p158 = por %p156, %p157
      %p159 = scmp.ne.s32.totalorder %s151, %s154
      %p160 = scmp.eq.s32.totalorder %s12, 0
      %p161 = por %p159, %p160
      %p162 = scmp.ne.s32.totalorder %s151, %s154
      %p163 = scmp.eq.s32.totalorder %s17, 8
      %p164 = por %p162, %p163
      %p165 = scmp.ne.s32.totalorder %s154, %s155
      %p166 = scmp.eq.s32.totalorder %s17, 0
      %p167 = por %p165, %p166
      %p168 = scmp.ne.s32.totalorder %s154, %s155
      %p169 = scmp.eq.s32.totalorder %s18, 8
      %p170 = por %p168, %p169
      %p172 = scmp.ne.s32.totalorder %s155, %s171
      %p173 = scmp.eq.s32.totalorder %s18, 0
      %p174 = por %p172, %p173
      %p175 = scmp.le.s32.totalorder 1, %s12
      %p176 = scmp.lt.s32.totalorder %s12, 10
      %p177 = pnand %p175, %p176
      %p178 = pneg %p177
      // Predicated region
      $region9: #{dcp_dec_forward.6} parent=5 // pred_check
        _
      $region10: #{dcp_dec_forward.6} parent=5 // pred_check_branch
        %180 = sbr.rel (%p177) target = $region12
      $region11: #{dcp_dec_forward.6} parent=5 // pred_region
        %s181 = ssub.s32 %s12, 1
        // Predicated region
        $region13: #{dcp_dec_forward.6} parent=11 // pred_check
          %p182 = pneg %p73
        $region14: #{dcp_dec_forward.6} parent=11 // pred_check_branch
          %184 = sbr.rel (%p182) target = $region16
        $region15: #{dcp_dec_forward.6} parent=11 // pred_region
          _
        $region16: #{dcp_dec_forward.6} parent=11 // pred_fallthru
          _
        // Predicated region
        $region17: #{dcp_dec_forward.6} parent=11 // pred_check
          %p185 = pneg %p94
        $region18: #{dcp_dec_forward.6} parent=11 // pred_check_branch
          %187 = sbr.rel (%p185) target = $region20
        $region19: #{dcp_dec_forward.6} parent=11 // pred_region
          _
        $region20: #{dcp_dec_forward.6} parent=11 // pred_fallthru
          _
        // Predicated region
        $region21: #{dcp_dec_forward.6} parent=11 // pred_check
          %p188 = pneg %p115
        $region22: #{dcp_dec_forward.6} parent=11 // pred_check_branch
          %190 = sbr.rel (%p188) target = $region24
        $region23: #{dcp_dec_forward.6} parent=11 // pred_region
          _
        $region24: #{dcp_dec_forward.6} parent=11 // pred_fallthru
          _
      $region12: #{dcp_dec_forward.6} parent=5 // pred_fallthru
        _
      %p191 = scmp.lt.s32.totalorder %s12, 9
      // Predicated region
      $region25: #{dcp_dec_forward.6} parent=5 // pred_check
        %p192 = pneg %p191
      $region26: #{dcp_dec_forward.6} parent=5 // pred_check_branch
        %194 = sbr.rel (%p192) target = $region28
      $region27: #{dcp_dec_forward.6} parent=5 // pred_region
        // Predicated region
        $region29: #{dcp_dec_forward.6} parent=27 // pred_check
          %p195 = pneg %p46
        $region30: #{dcp_dec_forward.6} parent=27 // pred_check_branch
          %197 = sbr.rel (%p195) target = $region32
        $region31: #{dcp_dec_forward.6} parent=27 // pred_region
          %s198 = sand.u32 %s36, 1
          %s199 = sand.u32 %s36, 1
          %s200 = smul.addr %s199, 64
          %s201 = scalar_lea.vmem [#allocation3], %s200
          %s202 = smul.u32 16, %s19
          %s203 = smul.addr %s202, 3
          %s204 = sadd.s32 %s20, %s203
          %s205 = smul.addr %s204, 4
          %s206 = scalar_lea.vmem %s0, %s205
          // Predicated region
          $region33: #{dcp_dec_forward.6} parent=31 // pred_check
            _
          $region34: #{dcp_dec_forward.6} parent=31 // pred_check_branch
            %208 = sbr.rel (0) target = $region36
          $region35: #{dcp_dec_forward.6} parent=31 // pred_region
            // Predicated region
            $region37: #{dcp_dec_forward.6} parent=35 // pred_check
              _
            $region38: #{dcp_dec_forward.6} parent=35 // pred_check_branch
              %210 = sbr.rel target = $region40
            $region39: #{dcp_dec_forward.6} parent=35 // pred_region
              // Predicated region
              $region52: #{dcp_dec_forward.6} parent=39 // pred_check
                _
              $region53: #{dcp_dec_forward.6} parent=39 // pred_check_branch
                %256 = sbr.rel (0) target = $region55
              $region54: #{dcp_dec_forward.6} parent=39 // pred_region
                loop: start=0, step=1, limit=1
                $region56: #{dcp_dec_forward.6} parent=54 // loop_pre_header
                  _
                $region57: #{dcp_dec_forward.6} parent=54 // loop_header
                  %s258 = sphi 0, %s262
                  %p259 = scmp.ge.s32.totalorder %s258, 1
                  %s263 = sphi %s206, %s206
                  %s264 = sphi %s201, %s201
                $region58: #{dcp_dec_forward.6} parent=54 // loop_header_branch
                  %261 = sbr.rel (%p259) target = $region62
                $region59: #{dcp_dec_forward.6} parent=54 // loop_body
                  _
                $region60: #{dcp_dec_forward.6} parent=54 // loop_footer
                  %s262 = sadd.s32 1, %s258
                $region61: #{dcp_dec_forward.6} parent=54 // loop_footer_branch
                  %257 = sbr.rel target = $region57
                $region62: #{dcp_dec_forward.6} parent=54 // loop_exit
                  _
                %s266 = ssub.s32 16, 1
                loop: start=0, step=1, limit=1
                $region63: #{dcp_dec_forward.6} parent=54 // loop_pre_header
                  _
                $region64: #{dcp_dec_forward.6} parent=54 // loop_header
                  %s268 = sphi 0, %s272
                  %p269 = scmp.ge.s32.totalorder %s268, 1
                  %s273 = sphi %s206, %s206
                  %s274 = sphi %s201, %s201
                $region65: #{dcp_dec_forward.6} parent=54 // loop_header_branch
                  %271 = sbr.rel (%p269) target = $region69
                $region66: #{dcp_dec_forward.6} parent=54 // loop_body
                  %v275 = vld [vmem:[%s273] sm:%s266]
                  %276 = vst [vmem:[%s274] sm:%s266] %v275
                  %v277 = vld [vmem:[%s273 + $0xc] sm:%s266]
                  %278 = vst [vmem:[%s274 + $0x4] sm:%s266] %v277
                  %v279 = vld [vmem:[%s273 + $0x18] sm:%s266]
                  %280 = vst [vmem:[%s274 + $0x8] sm:%s266] %v279
                  %v281 = vld [vmem:[%s273 + $0x24] sm:%s266]
                  %282 = vst [vmem:[%s274 + $0xc] sm:%s266] %v281
                  %v283 = vld [vmem:[%s273 + $0x30] sm:%s266]
                  %284 = vst [vmem:[%s274 + $0x10] sm:%s266] %v283
                  %v285 = vld [vmem:[%s273 + $0x3c] sm:%s266]
                  %286 = vst [vmem:[%s274 + $0x14] sm:%s266] %v285
                  %v287 = vld [vmem:[%s273 + $0x48] sm:%s266]
                  %288 = vst [vmem:[%s274 + $0x18] sm:%s266] %v287
                  %v289 = vld [vmem:[%s273 + $0x54] sm:%s266]
                  %290 = vst [vmem:[%s274 + $0x1c] sm:%s266] %v289
                  %v291 = vld [vmem:[%s273 + $0x60] sm:%s266]
                  %292 = vst [vmem:[%s274 + $0x20] sm:%s266] %v291
                  %v293 = vld [vmem:[%s273 + $0x6c] sm:%s266]
                  %294 = vst [vmem:[%s274 + $0x24] sm:%s266] %v293
                  %v295 = vld [vmem:[%s273 + $0x78] sm:%s266]
                  %296 = vst [vmem:[%s274 + $0x28] sm:%s266] %v295
                  %v297 = vld [vmem:[%s273 + $0x84] sm:%s266]
                  %298 = vst [vmem:[%s274 + $0x2c] sm:%s266] %v297
                  %v299 = vld [vmem:[%s273 + $0x90] sm:%s266]
                  %300 = vst [vmem:[%s274 + $0x30] sm:%s266] %v299
                  %v301 = vld [vmem:[%s273 + $0x9c] sm:%s266]
                  %302 = vst [vmem:[%s274 + $0x34] sm:%s266] %v301
                  %v303 = vld [vmem:[%s273 + $0xa8] sm:%s266]
                  %304 = vst [vmem:[%s274 + $0x38] sm:%s266] %v303
                  %v305 = vld [vmem:[%s273 + $0xb4] sm:%s266]
                  %306 = vst [vmem:[%s274 + $0x3c] sm:%s266] %v305
                $region67: #{dcp_dec_forward.6} parent=54 // loop_footer
                  %s272 = sadd.s32 1, %s268
                $region68: #{dcp_dec_forward.6} parent=54 // loop_footer_branch
                  %267 = sbr.rel target = $region64
                $region69: #{dcp_dec_forward.6} parent=54 // loop_exit
                  _
              $region55: #{dcp_dec_forward.6} parent=39 // pred_fallthru
                _
            $region40: #{dcp_dec_forward.6} parent=35 // pred_fallthru
              _
            // Predicated region
            $region41: #{dcp_dec_forward.6} parent=35 // pred_check
              _
            $region42: #{dcp_dec_forward.6} parent=35 // pred_check_branch
              %212 = sbr.rel (0) target = $region44
            $region43: #{dcp_dec_forward.6} parent=35 // pred_region
              %s214 = ssub.s32 16, 1
              loop: start=0, step=1, limit=1
              $region45: #{dcp_dec_forward.6} parent=43 // loop_pre_header
                _
              $region46: #{dcp_dec_forward.6} parent=43 // loop_header
                %s216 = sphi 0, %s220
                %p217 = scmp.ge.s32.totalorder %s216, 1
                %s221 = sphi %s206, %s206
                %s222 = sphi %s201, %s201
              $region47: #{dcp_dec_forward.6} parent=43 // loop_header_branch
                %219 = sbr.rel (%p217) target = $region51
              $region48: #{dcp_dec_forward.6} parent=43 // loop_body
                %v223 = vld [vmem:[%s221] sm:%s214]
                %224 = vst [vmem:[%s222] sm:%s214] %v223
                %v225 = vld [vmem:[%s221 + $0xc] sm:%s214]
                %226 = vst [vmem:[%s222 + $0x4] sm:%s214] %v225
                %v227 = vld [vmem:[%s221 + $0x18] sm:%s214]
                %228 = vst [vmem:[%s222 + $0x8] sm:%s214] %v227
                %v229 = vld [vmem:[%s221 + $0x24] sm:%s214]
                %230 = vst [vmem:[%s222 + $0xc] sm:%s214] %v229
                %v231 = vld [vmem:[%s221 + $0x30] sm:%s214]
                %232 = vst [vmem:[%s222 + $0x10] sm:%s214] %v231
                %v233 = vld [vmem:[%s221 + $0x3c] sm:%s214]
                %234 = vst [vmem:[%s222 + $0x14] sm:%s214] %v233
                %v235 = vld [vmem:[%s221 + $0x48] sm:%s214]
                %236 = vst [vmem:[%s222 + $0x18] sm:%s214] %v235
                %v237 = vld [vmem:[%s221 + $0x54] sm:%s214]
                %238 = vst [vmem:[%s222 + $0x1c] sm:%s214] %v237
                %v239 = vld [vmem:[%s221 + $0x60] sm:%s214]
                %240 = vst [vmem:[%s222 + $0x20] sm:%s214] %v239
                %v241 = vld [vmem:[%s221 + $0x6c] sm:%s214]
                %242 = vst [vmem:[%s222 + $0x24] sm:%s214] %v241
                %v243 = vld [vmem:[%s221 + $0x78] sm:%s214]
                %244 = vst [vmem:[%s222 + $0x28] sm:%s214] %v243
                %v245 = vld [vmem:[%s221 + $0x84] sm:%s214]
                %246 = vst [vmem:[%s222 + $0x2c] sm:%s214] %v245
                %v247 = vld [vmem:[%s221 + $0x90] sm:%s214]
                %248 = vst [vmem:[%s222 + $0x30] sm:%s214] %v247
                %v249 = vld [vmem:[%s221 + $0x9c] sm:%s214]
                %250 = vst [vmem:[%s222 + $0x34] sm:%s214] %v249
                %v251 = vld [vmem:[%s221 + $0xa8] sm:%s214]
                %252 = vst [vmem:[%s222 + $0x38] sm:%s214] %v251
                %v253 = vld [vmem:[%s221 + $0xb4] sm:%s214]
                %254 = vst [vmem:[%s222 + $0x3c] sm:%s214] %v253
              $region49: #{dcp_dec_forward.6} parent=43 // loop_footer
                %s220 = sadd.s32 1, %s216
              $region50: #{dcp_dec_forward.6} parent=43 // loop_footer_branch
                %215 = sbr.rel target = $region46
              $region51: #{dcp_dec_forward.6} parent=43 // loop_exit
                _
            $region44: #{dcp_dec_forward.6} parent=35 // pred_fallthru
              _
          $region36: #{dcp_dec_forward.6} parent=31 // pred_fallthru
            _
          %307 = vnop
        $region32: #{dcp_dec_forward.6} parent=27 // pred_fallthru
          _
      $region28: #{dcp_dec_forward.6} parent=5 // pred_fallthru
        _
      %p308 = scmp.le.s32.totalorder 1, %s12
      %p309 = scmp.lt.s32.totalorder %s12, 10
      %p310 = pnand %p308, %p309
      %p311 = pneg %p310
      // Predicated region
      $region70: #{dcp_dec_forward.6} parent=5 // pred_check
        _
      $region71: #{dcp_dec_forward.6} parent=5 // pred_check_branch
        %313 = sbr.rel (%p310) target = $region73
      $region72: #{dcp_dec_forward.6} parent=5 // pred_region
        %s314 = ssub.s32 %s12, 1
        %s315 = sand.u32 %s39, 1
        %s316 = sand.u32 %s39, 1
        %s317 = smul.addr %s316, 64
        %s318 = scalar_lea.vmem [#allocation3], %s317
        // Predicated region
        $region74: #{dcp_dec_forward.6} parent=72 // pred_check
          %p319 = pneg %p52
        $region75: #{dcp_dec_forward.6} parent=72 // pred_check_branch
          %321 = sbr.rel (%p319) target = $region77
        $region76: #{dcp_dec_forward.6} parent=72 // pred_region
          _
        $region77: #{dcp_dec_forward.6} parent=72 // pred_fallthru
          _
        %s322 = sand.u32 %s39, 1
        %s323 = sand.u32 %s39, 1
        %s324 = smul.addr %s323, 64
        %s325 = scalar_lea.vmem [#allocation3], %s324
        %p326 = pneg %p52
        %p327 = pneg %p49
        %p328 = pneg %p73
        %p329 = pneg %p70
        %p330 = pneg %p94
        %p331 = pneg %p91
        %p332 = pneg %p115
        %p333 = pneg %p112
        %p334 = pneg %p141
        %p335 = pneg %p138
        %s336 = smul.u32 16, %s21
        %p337 = scmp.lt.s32.totalorder %s336, 47
        %s338 = scalar_select %p337, %s336, 47
        %s339 = smul.addr %s338, 8
        %s340 = scalar_lea.vmem %s4, %s339
        %p341 = pneg %p167
        %p342 = pneg %p164
        %s343 = smul.u32 16, %s21
        %p344 = scmp.lt.s32.totalorder %s343, 47
        %s345 = scalar_select %p344, %s343, 47
        %s346 = smul.addr %s345, 8
        %s347 = scalar_lea.vmem %s5, %s346
        %s348 = smul.u32 16, %s21
        %s349 = smul.u32 16, %s21
        %p350 = scmp.lt.s32.totalorder %s349, 47
        %s351 = scalar_select %p350, %s349, 47
        %s352 = smul.addr %s351, 8
        %s353 = scalar_lea.vmem %s4, %s352
        %s354 = smul.u32 16, %s21
        %s355 = smul.u32 16, %s21
        %p356 = scmp.lt.s32.totalorder %s355, 47
        %s357 = scalar_select %p356, %s355, 47
        %s358 = smul.addr %s357, 8
        %s359 = scalar_lea.vmem %s5, %s358
        %s360 = smul.u32 16, %s21
        %p361 = scmp.eq.s32.totalorder %s22, 0
        // Predicated region
        $region78: #{dcp_dec_forward.6} parent=72 // pred_check
          %p362 = pneg %p361
        $region79: #{dcp_dec_forward.6} parent=72 // pred_check_branch
          %364 = sbr.rel (%p362) target = $region81
        $region80: #{dcp_dec_forward.6} parent=72 // pred_region
          %365 = vst [vmem:[#allocation2] sm:$0xff] 0.0
          %366 = vst [vmem:[#allocation2 + $0x8] sm:$0xff] 0.0
          %367 = vst [vmem:[#allocation2 + $0x10] sm:$0xff] 0.0
          %368 = vst [vmem:[#allocation2 + $0x18] sm:$0xff] 0.0
          %369 = vst [vmem:[#allocation2 + $0x20] sm:$0xff] 0.0
          %370 = vst [vmem:[#allocation2 + $0x28] sm:$0xff] 0.0
          %371 = vst [vmem:[#allocation2 + $0x30] sm:$0xff] 0.0
          %372 = vst [vmem:[#allocation2 + $0x38] sm:$0xff] 0.0
          %373 = vst [vmem:[#allocation2 + $0x40] sm:$0xff] 0.0
          %374 = vst [vmem:[#allocation2 + $0x48] sm:$0xff] 0.0
          %375 = vst [vmem:[#allocation2 + $0x50] sm:$0xff] 0.0
          %376 = vst [vmem:[#allocation2 + $0x58] sm:$0xff] 0.0
          %377 = vst [vmem:[#allocation2 + $0x60] sm:$0xff] 0.0
          %378 = vst [vmem:[#allocation2 + $0x68] sm:$0xff] 0.0
          %379 = vst [vmem:[#allocation2 + $0x70] sm:$0xff] 0.0
          %380 = vst [vmem:[#allocation2 + $0x78] sm:$0xff] 0.0
        $region81: #{dcp_dec_forward.6} parent=72 // pred_fallthru
          _
        %s381 = smul.u32 %s22, 128
        %v382 = vld [vmem:[#allocation2] sm:$0xff]
        %v383 = vld [vmem:[#allocation2 + $0x8] sm:$0xff]
        %v384 = vld [vmem:[#allocation2 + $0x10] sm:$0xff]
        %v385 = vld [vmem:[#allocation2 + $0x18] sm:$0xff]
        %v386 = vld [vmem:[#allocation2 + $0x20] sm:$0xff]
        %v387 = vld [vmem:[#allocation2 + $0x28] sm:$0xff]
        %v388 = vld [vmem:[#allocation2 + $0x30] sm:$0xff]
        %v389 = vld [vmem:[#allocation2 + $0x38] sm:$0xff]
        %v390 = vld [vmem:[#allocation2 + $0x40] sm:$0xff]
        %v391 = vld [vmem:[#allocation2 + $0x48] sm:$0xff]
        %v392 = vld [vmem:[#allocation2 + $0x50] sm:$0xff]
        %v393 = vld [vmem:[#allocation2 + $0x58] sm:$0xff]
        %v394 = vld [vmem:[#allocation2 + $0x60] sm:$0xff]
        %v395 = vld [vmem:[#allocation2 + $0x68] sm:$0xff]
        %v396 = vld [vmem:[#allocation2 + $0x70] sm:$0xff]
        %v397 = vld [vmem:[#allocation2 + $0x78] sm:$0xff]
        %v398 = vld [vmem:[%s318] sm:$0xf]
        %v399 = vld [vmem:[%s318 + $0x4] sm:$0xf]
        %v400 = vld [vmem:[%s318 + $0x8] sm:$0xf]
        %v401 = vld [vmem:[%s318 + $0xc] sm:$0xf]
        %v402 = vld [vmem:[%s318 + $0x10] sm:$0xf]
        %v403 = vld [vmem:[%s318 + $0x14] sm:$0xf]
        %v404 = vld [vmem:[%s318 + $0x18] sm:$0xf]
        %v405 = vld [vmem:[%s318 + $0x1c] sm:$0xf]
        %v406 = vld [vmem:[%s318 + $0x20] sm:$0xf]
        %v407 = vld [vmem:[%s318 + $0x24] sm:$0xf]
        %v408 = vld [vmem:[%s318 + $0x28] sm:$0xf]
        %v409 = vld [vmem:[%s318 + $0x2c] sm:$0xf]
        %v410 = vld [vmem:[%s318 + $0x30] sm:$0xf]
        %v411 = vld [vmem:[%s318 + $0x34] sm:$0xf]
        %v412 = vld [vmem:[%s318 + $0x38] sm:$0xf]
        %v413 = vld [vmem:[%s318 + $0x3c] sm:$0xf]
        %s414 = sshra.s32 %s381, 3
        %s415 = sand.u32 %s381, 7
        %s416 = smul.addr %s414, 4
        %s417 = scalar_lea.vmem %s1, %s416
        %v418 = vld [vmem:[%s417] sm:$0xf]
        %v419 = vld [vmem:[%s417 + $0x4] sm:$0xf]
        %v420 = vld [vmem:[%s417 + $0x8] sm:$0xf]
        %v421 = vld [vmem:[%s417 + $0xc] sm:$0xf]
        %v422 = vld [vmem:[%s417 + $0x10] sm:$0xf]
        %v423 = vld [vmem:[%s417 + $0x14] sm:$0xf]
        %v424 = vld [vmem:[%s417 + $0x18] sm:$0xf]
        %v425 = vld [vmem:[%s417 + $0x1c] sm:$0xf]
        %v426 = vld [vmem:[%s417 + $0x20] sm:$0xf]
        %v427 = vld [vmem:[%s417 + $0x24] sm:$0xf]
        %v428 = vld [vmem:[%s417 + $0x28] sm:$0xf]
        %v429 = vld [vmem:[%s417 + $0x2c] sm:$0xf]
        %v430 = vld [vmem:[%s417 + $0x30] sm:$0xf]
        %v431 = vld [vmem:[%s417 + $0x34] sm:$0xf]
        %v432 = vld [vmem:[%s417 + $0x38] sm:$0xf]
        %v433 = vld [vmem:[%s417 + $0x3c] sm:$0xf]
        %v450 = vunpack.c.l.b16 %v398
        %v451 = vunpack.c.l.b16 %v399
        %v452 = vunpack.c.l.b16 %v400
        %v453 = vunpack.c.l.b16 %v401
        %v454 = vunpack.c.l.b16 %v402
        %v455 = vunpack.c.l.b16 %v403
        %v456 = vunpack.c.l.b16 %v404
        %v457 = vunpack.c.l.b16 %v405
        %v458 = vunpack.c.l.b16 %v406
        %v459 = vunpack.c.l.b16 %v407
        %v460 = vunpack.c.l.b16 %v408
        %v461 = vunpack.c.l.b16 %v409
        %v462 = vunpack.c.l.b16 %v410
        %v463 = vunpack.c.l.b16 %v411
        %v464 = vunpack.c.l.b16 %v412
        %v465 = vunpack.c.l.b16 %v413
        %v466 = vpack.c.b16 %v451, %v450
        %v467 = vpack.c.b16 %v453, %v452
        %v468 = vpack.c.b16 %v455, %v454
        %v469 = vpack.c.b16 %v457, %v456
        %v470 = vpack.c.b16 %v459, %v458
        %v471 = vpack.c.b16 %v461, %v460
        %v472 = vpack.c.b16 %v463, %v462
        %v473 = vpack.c.b16 %v465, %v464
        %v498 = vunpack.c.l.b16 %v418
        %v499 = vunpack.c.l.b16 %v419
        %v500 = vunpack.c.l.b16 %v420
        %v501 = vunpack.c.l.b16 %v421
        %v502 = vunpack.c.l.b16 %v422
        %v503 = vunpack.c.l.b16 %v423
        %v504 = vunpack.c.l.b16 %v424
        %v505 = vunpack.c.l.b16 %v425
        %v506 = vunpack.c.l.b16 %v426
        %v507 = vunpack.c.l.b16 %v427
        %v508 = vunpack.c.l.b16 %v428
        %v509 = vunpack.c.l.b16 %v429
        %v510 = vunpack.c.l.b16 %v430
        %v511 = vunpack.c.l.b16 %v431
        %v512 = vunpack.c.l.b16 %v432
        %v513 = vunpack.c.l.b16 %v433
        %v514 = vpack.c.b16 %v499, %v498
        %v515 = vpack.c.b16 %v501, %v500
        %v516 = vpack.c.b16 %v503, %v502
        %v517 = vpack.c.b16 %v505, %v504
        %v518 = vpack.c.b16 %v507, %v506
        %v519 = vpack.c.b16 %v509, %v508
        %v520 = vpack.c.b16 %v511, %v510
        %v521 = vpack.c.b16 %v513, %v512
        %530 = vmatpush.bf16.msra.mxu0 %v521
        %531 = vmatpush.bf16.msra.mxu0 %v520
        %532 = vmatpush.bf16.msra.mxu0 %v519
        %533 = vmatpush.bf16.msra.mxu0 %v518
        %534 = vmatpush.bf16.msra.mxu0 %v517
        %535 = vmatpush.bf16.msra.mxu0 %v516
        %536 = vmatpush.bf16.msra.mxu0 %v515
        %537 = vmatpush.bf16.msra.mxu0 %v514
        %538 = vmatmul.bf16.gmra.mxu0 %v466
        %v539 = vpop.f32.mrf.mxu0
        %v540 = vadd.f32 0.0, %v539
        %v541 = vpop.f32.mrf.mxu0
        %v542 = vadd.f32 0.0, %v541
        %543 = vmatmul.bf16.gmra.mxu0 %v467
        %v544 = vpop.f32.mrf.mxu0
        %v545 = vadd.f32 0.0, %v544
        %v546 = vpop.f32.mrf.mxu0
        %v547 = vadd.f32 0.0, %v546
        %548 = vmatmul.bf16.gmra.mxu0 %v468
        %v549 = vpop.f32.mrf.mxu0
        %v550 = vadd.f32 0.0, %v549
        %v551 = vpop.f32.mrf.mxu0
        %v552 = vadd.f32 0.0, %v551
        %553 = vmatmul.bf16.gmra.mxu0 %v469
        %v554 = vpop.f32.mrf.mxu0
        %v555 = vadd.f32 0.0, %v554
        %v556 = vpop.f32.mrf.mxu0
        %v557 = vadd.f32 0.0, %v556
        %558 = vmatmul.bf16.gmra.mxu0 %v470
        %v559 = vpop.f32.mrf.mxu0
        %v560 = vadd.f32 0.0, %v559
        %v561 = vpop.f32.mrf.mxu0
        %v562 = vadd.f32 0.0, %v561
        %563 = vmatmul.bf16.gmra.mxu0 %v471
        %v564 = vpop.f32.mrf.mxu0
        %v565 = vadd.f32 0.0, %v564
        %v566 = vpop.f32.mrf.mxu0
        %v567 = vadd.f32 0.0, %v566
        %568 = vmatmul.bf16.gmra.mxu0 %v472
        %v569 = vpop.f32.mrf.mxu0
        %v570 = vadd.f32 0.0, %v569
        %v571 = vpop.f32.mrf.mxu0
        %v572 = vadd.f32 0.0, %v571
        %573 = vmatmul.bf16.gmra.mxu0 %v473
        %v574 = vpop.f32.mrf.mxu0
        %v575 = vadd.f32 0.0, %v574
        %v576 = vpop.f32.mrf.mxu0
        %v577 = vadd.f32 0.0, %v576
        %578 = vdwg.mxu0
        %v579 = vadd.f32 %v382, %v540
        %v580 = vadd.f32 %v383, %v542
        %v581 = vadd.f32 %v384, %v545
        %v582 = vadd.f32 %v385, %v547
        %v583 = vadd.f32 %v386, %v550
        %v584 = vadd.f32 %v387, %v552
        %v585 = vadd.f32 %v388, %v555
        %v586 = vadd.f32 %v389, %v557
        %v587 = vadd.f32 %v390, %v560
        %v588 = vadd.f32 %v391, %v562
        %v589 = vadd.f32 %v392, %v565
        %v590 = vadd.f32 %v393, %v567
        %v591 = vadd.f32 %v394, %v570
        %v592 = vadd.f32 %v395, %v572
        %v593 = vadd.f32 %v396, %v575
        %v594 = vadd.f32 %v397, %v577
        %595 = vst [vmem:[#allocation2] sm:$0xff] %v579
        %596 = vst [vmem:[#allocation2 + $0x8] sm:$0xff] %v580
        %597 = vst [vmem:[#allocation2 + $0x10] sm:$0xff] %v581
        %598 = vst [vmem:[#allocation2 + $0x18] sm:$0xff] %v582
        %599 = vst [vmem:[#allocation2 + $0x20] sm:$0xff] %v583
        %600 = vst [vmem:[#allocation2 + $0x28] sm:$0xff] %v584
        %601 = vst [vmem:[#allocation2 + $0x30] sm:$0xff] %v585
        %602 = vst [vmem:[#allocation2 + $0x38] sm:$0xff] %v586
        %603 = vst [vmem:[#allocation2 + $0x40] sm:$0xff] %v587
        %604 = vst [vmem:[#allocation2 + $0x48] sm:$0xff] %v588
        %605 = vst [vmem:[#allocation2 + $0x50] sm:$0xff] %v589
        %606 = vst [vmem:[#allocation2 + $0x58] sm:$0xff] %v590
        %607 = vst [vmem:[#allocation2 + $0x60] sm:$0xff] %v591
        %608 = vst [vmem:[#allocation2 + $0x68] sm:$0xff] %v592
        %609 = vst [vmem:[#allocation2 + $0x70] sm:$0xff] %v593
        %610 = vst [vmem:[#allocation2 + $0x78] sm:$0xff] %v594
        %p611 = scmp.eq.s32.totalorder %s22, 2
        // Predicated region
        $region82: #{dcp_dec_forward.6} parent=72 // pred_check
          %p612 = pneg %p611
        $region83: #{dcp_dec_forward.6} parent=72 // pred_check_branch
          %614 = sbr.rel (%p612) target = $region85
        $region84: #{dcp_dec_forward.6} parent=72 // pred_region
          %v615 = vld [vmem:[#allocation2] sm:$0xff]
          %v616 = vld [vmem:[#allocation2 + $0x8] sm:$0xff]
          %v617 = vld [vmem:[#allocation2 + $0x10] sm:$0xff]
          %v618 = vld [vmem:[#allocation2 + $0x18] sm:$0xff]
          %v619 = vld [vmem:[#allocation2 + $0x20] sm:$0xff]
          %v620 = vld [vmem:[#allocation2 + $0x28] sm:$0xff]
          %v621 = vld [vmem:[#allocation2 + $0x30] sm:$0xff]
          %v622 = vld [vmem:[#allocation2 + $0x38] sm:$0xff]
          %v623 = vld [vmem:[#allocation2 + $0x40] sm:$0xff]
          %v624 = vld [vmem:[#allocation2 + $0x48] sm:$0xff]
          %v625 = vld [vmem:[#allocation2 + $0x50] sm:$0xff]
          %v626 = vld [vmem:[#allocation2 + $0x58] sm:$0xff]
          %v627 = vld [vmem:[#allocation2 + $0x60] sm:$0xff]
          %v628 = vld [vmem:[#allocation2 + $0x68] sm:$0xff]
          %v629 = vld [vmem:[#allocation2 + $0x70] sm:$0xff]
          %v630 = vld [vmem:[#allocation2 + $0x78] sm:$0xff]
          %631 = vst [vmem:[%s353] sm:$0xff] %v615
          %632 = vst [vmem:[%s353 + $0x8] sm:$0xff] %v616
          %633 = vst [vmem:[%s353 + $0x10] sm:$0xff] %v617
          %634 = vst [vmem:[%s353 + $0x18] sm:$0xff] %v618
          %635 = vst [vmem:[%s353 + $0x20] sm:$0xff] %v619
          %636 = vst [vmem:[%s353 + $0x28] sm:$0xff] %v620
          %637 = vst [vmem:[%s353 + $0x30] sm:$0xff] %v621
          %638 = vst [vmem:[%s353 + $0x38] sm:$0xff] %v622
          %639 = vst [vmem:[%s353 + $0x40] sm:$0xff] %v623
          %640 = vst [vmem:[%s353 + $0x48] sm:$0xff] %v624
          %641 = vst [vmem:[%s353 + $0x50] sm:$0xff] %v625
          %642 = vst [vmem:[%s353 + $0x58] sm:$0xff] %v626
          %643 = vst [vmem:[%s353 + $0x60] sm:$0xff] %v627
          %644 = vst [vmem:[%s353 + $0x68] sm:$0xff] %v628
          %645 = vst [vmem:[%s353 + $0x70] sm:$0xff] %v629
          %646 = vst [vmem:[%s353 + $0x78] sm:$0xff] %v630
          %v647 = vld [vmem:[%s2] sm:$0xff]
          %v648 = vld [vmem:[%s2 + $0x8] sm:$0xff]
          %v649 = vld [vmem:[%s2 + $0x10] sm:$0xff]
          %v650 = vld [vmem:[%s2 + $0x18] sm:$0xff]
          %v651 = vld [vmem:[%s2 + $0x20] sm:$0xff]
          %v652 = vld [vmem:[%s2 + $0x28] sm:$0xff]
          %v653 = vld [vmem:[%s2 + $0x30] sm:$0xff]
          %v654 = vld [vmem:[%s2 + $0x38] sm:$0xff]
          %v655 = vld [vmem:[%s2 + $0x40] sm:$0xff]
          %v656 = vld [vmem:[%s2 + $0x48] sm:$0xff]
          %v657 = vld [vmem:[%s2 + $0x50] sm:$0xff]
          %v658 = vld [vmem:[%s2 + $0x58] sm:$0xff]
          %v659 = vld [vmem:[%s2 + $0x60] sm:$0xff]
          %v660 = vld [vmem:[%s2 + $0x68] sm:$0xff]
          %v661 = vld [vmem:[%s2 + $0x70] sm:$0xff]
          %v662 = vld [vmem:[%s2 + $0x78] sm:$0xff]
          %v663 = vld [vmem:[%s3] sm:$0x1]
          %664 = vmatpush.xpose.msra.mxu0 %v662
          %665 = vmatpush.xpose.msra.mxu0 %v661
          %666 = vmatpush.xpose.msra.mxu0 %v660
          %667 = vmatpush.xpose.msra.mxu0 %v659
          %668 = vmatpush.xpose.msra.mxu0 %v658
          %669 = vmatpush.xpose.msra.mxu0 %v657
          %670 = vmatpush.xpose.msra.mxu0 %v656
          %671 = vmatpush.xpose.msra.mxu0 %v655
          %672 = vmatpush.xpose.msra.mxu0 %v654
          %673 = vmatpush.xpose.msra.mxu0 %v653
          %674 = vmatpush.xpose.msra.mxu0 %v652
          %675 = vmatpush.xpose.msra.mxu0 %v651
          %676 = vmatpush.xpose.msra.mxu0 %v650
          %677 = vmatpush.xpose.msra.mxu0 %v649
          %678 = vmatpush.xpose.msra.mxu0 %v648
          %679 = vmatpush.xpose.msra.mxu0 %v647
          %680 = vmatmul.f32.gmra.mxu0 %v615
          %v681 = vpop.f32.mrf.mxu0
          %v682 = vadd.f32 0.0, %v681
          %683 = vmatmul.f32.gmra.mxu0 %v616
          %v684 = vpop.f32.mrf.mxu0
          %v685 = vadd.f32 0.0, %v684
          %686 = vmatmul.f32.gmra.mxu0 %v617
          %v687 = vpop.f32.mrf.mxu0
          %v688 = vadd.f32 0.0, %v687
          %689 = vmatmul.f32.gmra.mxu0 %v618
          %v690 = vpop.f32.mrf.mxu0
          %v691 = vadd.f32 0.0, %v690
          %692 = vmatmul.f32.gmra.mxu0 %v619
          %v693 = vpop.f32.mrf.mxu0
          %v694 = vadd.f32 0.0, %v693
          %695 = vmatmul.f32.gmra.mxu0 %v620
          %v696 = vpop.f32.mrf.mxu0
          %v697 = vadd.f32 0.0, %v696
          %698 = vmatmul.f32.gmra.mxu0 %v621
          %v699 = vpop.f32.mrf.mxu0
          %v700 = vadd.f32 0.0, %v699
          %701 = vmatmul.f32.gmra.mxu0 %v622
          %v702 = vpop.f32.mrf.mxu0
          %v703 = vadd.f32 0.0, %v702
          %704 = vmatmul.f32.gmra.mxu0 %v623
          %v705 = vpop.f32.mrf.mxu0
          %v706 = vadd.f32 0.0, %v705
          %707 = vmatmul.f32.gmra.mxu0 %v624
          %v708 = vpop.f32.mrf.mxu0
          %v709 = vadd.f32 0.0, %v708
          %710 = vmatmul.f32.gmra.mxu0 %v625
          %v711 = vpop.f32.mrf.mxu0
          %v712 = vadd.f32 0.0, %v711
          %713 = vmatmul.f32.gmra.mxu0 %v626
          %v714 = vpop.f32.mrf.mxu0
          %v715 = vadd.f32 0.0, %v714
          %716 = vmatmul.f32.gmra.mxu0 %v627
          %v717 = vpop.f32.mrf.mxu0
          %v718 = vadd.f32 0.0, %v717
          %719 = vmatmul.f32.gmra.mxu0 %v628
          %v720 = vpop.f32.mrf.mxu0
          %v721 = vadd.f32 0.0, %v720
          %722 = vmatmul.f32.gmra.mxu0 %v629
          %v723 = vpop.f32.mrf.mxu0
          %v724 = vadd.f32 0.0, %v723
          %725 = vmatmul.f32.gmra.mxu0 %v630
          %v726 = vpop.f32.mrf.mxu0
          %v727 = vadd.f32 0.0, %v726
          %728 = vdwg.mxu0
          %v729 = vmul.f32 %v615, %v615
          %v730 = vmul.f32 %v616, %v616
          %v731 = vmul.f32 %v617, %v617
          %v732 = vmul.f32 %v618, %v618
          %v733 = vmul.f32 %v619, %v619
          %v734 = vmul.f32 %v620, %v620
          %v735 = vmul.f32 %v621, %v621
          %v736 = vmul.f32 %v622, %v622
          %v737 = vmul.f32 %v623, %v623
          %v738 = vmul.f32 %v624, %v624
          %v739 = vmul.f32 %v625, %v625
          %v740 = vmul.f32 %v626, %v626
          %v741 = vmul.f32 %v627, %v627
          %v742 = vmul.f32 %v628, %v628
          %v743 = vmul.f32 %v629, %v629
          %v744 = vmul.f32 %v630, %v630
          %745 = vadd.xlane.f32.xlu0 %v729
          %v746 = vpop.xlane.xlu0 %745
          %747 = vadd.xlane.f32.xlu0 %v730
          %v748 = vpop.xlane.xlu0 %747
          %749 = vadd.xlane.f32.xlu0 %v731
          %v750 = vpop.xlane.xlu0 %749
          %751 = vadd.xlane.f32.xlu0 %v732
          %v752 = vpop.xlane.xlu0 %751
          %753 = vadd.xlane.f32.xlu0 %v733
          %v754 = vpop.xlane.xlu0 %753
          %755 = vadd.xlane.f32.xlu0 %v734
          %v756 = vpop.xlane.xlu0 %755
          %757 = vadd.xlane.f32.xlu0 %v735
          %v758 = vpop.xlane.xlu0 %757
          %759 = vadd.xlane.f32.xlu0 %v736
          %v760 = vpop.xlane.xlu0 %759
          %761 = vadd.xlane.f32.xlu0 %v737
          %v762 = vpop.xlane.xlu0 %761
          %763 = vadd.xlane.f32.xlu0 %v738
          %v764 = vpop.xlane.xlu0 %763
          %765 = vadd.xlane.f32.xlu0 %v739
          %v766 = vpop.xlane.xlu0 %765
          %767 = vadd.xlane.f32.xlu0 %v740
          %v768 = vpop.xlane.xlu0 %767
          %769 = vadd.xlane.f32.xlu0 %v741
          %v770 = vpop.xlane.xlu0 %769
          %771 = vadd.xlane.f32.xlu0 %v742
          %v772 = vpop.xlane.xlu0 %771
          %773 = vadd.xlane.f32.xlu0 %v743
          %v774 = vpop.xlane.xlu0 %773
          %775 = vadd.xlane.f32.xlu0 %v744
          %v776 = vpop.xlane.xlu0 %775
          %v778 = vperm.slane %v663, 0
          %v780 = vadd.f32 %v746, %v778
          %v781 = vadd.f32 %v748, %v778
          %v782 = vadd.f32 %v750, %v778
          %v783 = vadd.f32 %v752, %v778
          %v784 = vadd.f32 %v754, %v778
          %v785 = vadd.f32 %v756, %v778
          %v786 = vadd.f32 %v758, %v778
          %v787 = vadd.f32 %v760, %v778
          %v788 = vadd.f32 %v762, %v778
          %v789 = vadd.f32 %v764, %v778
          %v790 = vadd.f32 %v766, %v778
          %v791 = vadd.f32 %v768, %v778
          %v792 = vadd.f32 %v770, %v778
          %v793 = vadd.f32 %v772, %v778
          %v794 = vadd.f32 %v774, %v778
          %v795 = vadd.f32 %v776, %v778
          %v796 = vmul.f32 %v682, 2.0
          %v797 = vmul.f32 %v685, 2.0
          %v798 = vmul.f32 %v688, 2.0
          %v799 = vmul.f32 %v691, 2.0
          %v800 = vmul.f32 %v694, 2.0
          %v801 = vmul.f32 %v697, 2.0
          %v802 = vmul.f32 %v700, 2.0
          %v803 = vmul.f32 %v703, 2.0
          %v804 = vmul.f32 %v706, 2.0
          %v805 = vmul.f32 %v709, 2.0
          %v806 = vmul.f32 %v712, 2.0
          %v807 = vmul.f32 %v715, 2.0
          %v808 = vmul.f32 %v718, 2.0
          %v809 = vmul.f32 %v721, 2.0
          %v810 = vmul.f32 %v724, 2.0
          %v811 = vmul.f32 %v727, 2.0
          %v812 = vsub.f32 %v780, %v796
          %v813 = vsub.f32 %v781, %v797
          %v814 = vsub.f32 %v782, %v798
          %v815 = vsub.f32 %v783, %v799
          %v816 = vsub.f32 %v784, %v800
          %v817 = vsub.f32 %v785, %v801
          %v818 = vsub.f32 %v786, %v802
          %v819 = vsub.f32 %v787, %v803
          %v820 = vsub.f32 %v788, %v804
          %v821 = vsub.f32 %v789, %v805
          %v822 = vsub.f32 %v790, %v806
          %v823 = vsub.f32 %v791, %v807
          %v824 = vsub.f32 %v792, %v808
          %v825 = vsub.f32 %v793, %v809
          %v826 = vsub.f32 %v794, %v810
          %v827 = vsub.f32 %v795, %v811
          %v828 = vmax.f32 %v812, 0.0
          %v829 = vmax.f32 %v813, 0.0
          %v830 = vmax.f32 %v814, 0.0
          %v831 = vmax.f32 %v815, 0.0
          %v832 = vmax.f32 %v816, 0.0
          %v833 = vmax.f32 %v817, 0.0
          %v834 = vmax.f32 %v818, 0.0
          %v835 = vmax.f32 %v819, 0.0
          %v836 = vmax.f32 %v820, 0.0
          %v837 = vmax.f32 %v821, 0.0
          %v838 = vmax.f32 %v822, 0.0
          %v839 = vmax.f32 %v823, 0.0
          %v840 = vmax.f32 %v824, 0.0
          %v841 = vmax.f32 %v825, 0.0
          %v842 = vmax.f32 %v826, 0.0
          %v843 = vmax.f32 %v827, 0.0
          %v844 = vadd.f32 %v828, 1.0
          %v845 = vadd.f32 %v829, 1.0
          %v846 = vadd.f32 %v830, 1.0
          %v847 = vadd.f32 %v831, 1.0
          %v848 = vadd.f32 %v832, 1.0
          %v849 = vadd.f32 %v833, 1.0
          %v850 = vadd.f32 %v834, 1.0
          %v851 = vadd.f32 %v835, 1.0
          %v852 = vadd.f32 %v836, 1.0
          %v853 = vadd.f32 %v837, 1.0
          %v854 = vadd.f32 %v838, 1.0
          %v855 = vadd.f32 %v839, 1.0
          %v856 = vadd.f32 %v840, 1.0
          %v857 = vadd.f32 %v841, 1.0
          %v858 = vadd.f32 %v842, 1.0
          %v859 = vadd.f32 %v843, 1.0
          %v860 = vrcp.pop %v844
          %v861 = vrcp.pop %v845
          %v862 = vrcp.pop %v846
          %v863 = vrcp.pop %v847
          %v864 = vrcp.pop %v848
          %v865 = vrcp.pop %v849
          %v866 = vrcp.pop %v850
          %v867 = vrcp.pop %v851
          %v868 = vrcp.pop %v852
          %v869 = vrcp.pop %v853
          %v870 = vrcp.pop %v854
          %v871 = vrcp.pop %v855
          %v872 = vrcp.pop %v856
          %v873 = vrcp.pop %v857
          %v874 = vrcp.pop %v858
          %v875 = vrcp.pop %v859
          %v876 = vlaneseq
          %v877 = vand.u32 %v876, 127
          %vm878 = vcmp.lt.s32.totalorder %v877, 4
          %v879 = vsel %vm878, %v860, 0.0
          %v880 = vsel %vm878, %v861, 0.0
          %v881 = vsel %vm878, %v862, 0.0
          %v882 = vsel %vm878, %v863, 0.0
          %v883 = vsel %vm878, %v864, 0.0
          %v884 = vsel %vm878, %v865, 0.0
          %v885 = vsel %vm878, %v866, 0.0
          %v886 = vsel %vm878, %v867, 0.0
          %v887 = vsel %vm878, %v868, 0.0
          %v888 = vsel %vm878, %v869, 0.0
          %v889 = vsel %vm878, %v870, 0.0
          %v890 = vsel %vm878, %v871, 0.0
          %v891 = vsel %vm878, %v872, 0.0
          %v892 = vsel %vm878, %v873, 0.0
          %v893 = vsel %vm878, %v874, 0.0
          %v894 = vsel %vm878, %v875, 0.0
          %895 = vadd.xlane.f32.xlu0 %v879
          %v896 = vpop.xlane.xlu0 %895
          %897 = vadd.xlane.f32.xlu0 %v880
          %v898 = vpop.xlane.xlu0 %897
          %899 = vadd.xlane.f32.xlu0 %v881
          %v900 = vpop.xlane.xlu0 %899
          %901 = vadd.xlane.f32.xlu0 %v882
          %v902 = vpop.xlane.xlu0 %901
          %903 = vadd.xlane.f32.xlu0 %v883
          %v904 = vpop.xlane.xlu0 %903
          %905 = vadd.xlane.f32.xlu0 %v884
          %v906 = vpop.xlane.xlu0 %905
          %907 = vadd.xlane.f32.xlu0 %v885
          %v908 = vpop.xlane.xlu0 %907
          %909 = vadd.xlane.f32.xlu0 %v886
          %v910 = vpop.xlane.xlu0 %909
          %911 = vadd.xlane.f32.xlu0 %v887
          %v912 = vpop.xlane.xlu0 %911
          %913 = vadd.xlane.f32.xlu0 %v888
          %v914 = vpop.xlane.xlu0 %913
          %915 = vadd.xlane.f32.xlu0 %v889
          %v916 = vpop.xlane.xlu0 %915
          %917 = vadd.xlane.f32.xlu0 %v890
          %v918 = vpop.xlane.xlu0 %917
          %919 = vadd.xlane.f32.xlu0 %v891
          %v920 = vpop.xlane.xlu0 %919
          %921 = vadd.xlane.f32.xlu0 %v892
          %v922 = vpop.xlane.xlu0 %921
          %923 = vadd.xlane.f32.xlu0 %v893
          %v924 = vpop.xlane.xlu0 %923
          %925 = vadd.xlane.f32.xlu0 %v894
          %v926 = vpop.xlane.xlu0 %925
          %v927 = vrcp.pop %v896
          %v928 = vmul.f32 %v896, %v927
          %v929 = vsub.f32 1.0, %v928
          %v930 = vmul.f32 %v927, %v929
          %v931 = vadd.f32 %v927, %v930
          %vm932 = vweird.f32 %v896
          %vm933 = vweird.f32 %v927
          %vm934 = vmor %vm932, %vm933
          %v935 = vsel %vm934, %v927, %v931
          %v936 = vand.u32 2147483647, %v896
          %vm937 = vcmp.eq.f32.partialorder %v936, 8.507059e+37
          %v938 = vand.u32 %v896, 2147483648
          %v939 = vor.u32 1.1754944e-38, %v938
          %v940 = vsel %vm937, %v939, %v935
          %v941 = vmul.f32 %v879, %v940
          %v942 = vrcp.pop %v898
          %v943 = vmul.f32 %v898, %v942
          %v944 = vsub.f32 1.0, %v943
          %v945 = vmul.f32 %v942, %v944
          %v946 = vadd.f32 %v942, %v945
          %vm947 = vweird.f32 %v898
          %vm948 = vweird.f32 %v942
          %vm949 = vmor %vm947, %vm948
          %v950 = vsel %vm949, %v942, %v946
          %v951 = vand.u32 2147483647, %v898
          %vm952 = vcmp.eq.f32.partialorder %v951, 8.507059e+37
          %v953 = vand.u32 %v898, 2147483648
          %v954 = vor.u32 1.1754944e-38, %v953
          %v955 = vsel %vm952, %v954, %v950
          %v956 = vmul.f32 %v880, %v955
          %v957 = vrcp.pop %v900
          %v958 = vmul.f32 %v900, %v957
          %v959 = vsub.f32 1.0, %v958
          %v960 = vmul.f32 %v957, %v959
          %v961 = vadd.f32 %v957, %v960
          %vm962 = vweird.f32 %v900
          %vm963 = vweird.f32 %v957
          %vm964 = vmor %vm962, %vm963
          %v965 = vsel %vm964, %v957, %v961
          %v966 = vand.u32 2147483647, %v900
          %vm967 = vcmp.eq.f32.partialorder %v966, 8.507059e+37
          %v968 = vand.u32 %v900, 2147483648
          %v969 = vor.u32 1.1754944e-38, %v968
          %v970 = vsel %vm967, %v969, %v965
          %v971 = vmul.f32 %v881, %v970
          %v972 = vrcp.pop %v902
          %v973 = vmul.f32 %v902, %v972
          %v974 = vsub.f32 1.0, %v973
          %v975 = vmul.f32 %v972, %v974
          %v976 = vadd.f32 %v972, %v975
          %vm977 = vweird.f32 %v902
          %vm978 = vweird.f32 %v972
          %vm979 = vmor %vm977, %vm978
          %v980 = vsel %vm979, %v972, %v976
          %v981 = vand.u32 2147483647, %v902
          %vm982 = vcmp.eq.f32.partialorder %v981, 8.507059e+37
          %v983 = vand.u32 %v902, 2147483648
          %v984 = vor.u32 1.1754944e-38, %v983
          %v985 = vsel %vm982, %v984, %v980
          %v986 = vmul.f32 %v882, %v985
          %v987 = vrcp.pop %v904
          %v988 = vmul.f32 %v904, %v987
          %v989 = vsub.f32 1.0, %v988
          %v990 = vmul.f32 %v987, %v989
          %v991 = vadd.f32 %v987, %v990
          %vm992 = vweird.f32 %v904
          %vm993 = vweird.f32 %v987
          %vm994 = vmor %vm992, %vm993
          %v995 = vsel %vm994, %v987, %v991
          %v996 = vand.u32 2147483647, %v904
          %vm997 = vcmp.eq.f32.partialorder %v996, 8.507059e+37
          %v998 = vand.u32 %v904, 2147483648
          %v999 = vor.u32 1.1754944e-38, %v998
          %v1000 = vsel %vm997, %v999, %v995
          %v1001 = vmul.f32 %v883, %v1000
          %v1002 = vrcp.pop %v906
          %v1003 = vmul.f32 %v906, %v1002
          %v1004 = vsub.f32 1.0, %v1003
          %v1005 = vmul.f32 %v1002, %v1004
          %v1006 = vadd.f32 %v1002, %v1005
          %vm1007 = vweird.f32 %v906
          %vm1008 = vweird.f32 %v1002
          %vm1009 = vmor %vm1007, %vm1008
          %v1010 = vsel %vm1009, %v1002, %v1006
          %v1011 = vand.u32 2147483647, %v906
          %vm1012 = vcmp.eq.f32.partialorder %v1011, 8.507059e+37
          %v1013 = vand.u32 %v906, 2147483648
          %v1014 = vor.u32 1.1754944e-38, %v1013
          %v1015 = vsel %vm1012, %v1014, %v1010
          %v1016 = vmul.f32 %v884, %v1015
          %v1017 = vrcp.pop %v908
          %v1018 = vmul.f32 %v908, %v1017
          %v1019 = vsub.f32 1.0, %v1018
          %v1020 = vmul.f32 %v1017, %v1019
          %v1021 = vadd.f32 %v1017, %v1020
          %vm1022 = vweird.f32 %v908
          %vm1023 = vweird.f32 %v1017
          %vm1024 = vmor %vm1022, %vm1023
          %v1025 = vsel %vm1024, %v1017, %v1021
          %v1026 = vand.u32 2147483647, %v908
          %vm1027 = vcmp.eq.f32.partialorder %v1026, 8.507059e+37
          %v1028 = vand.u32 %v908, 2147483648
          %v1029 = vor.u32 1.1754944e-38, %v1028
          %v1030 = vsel %vm1027, %v1029, %v1025
          %v1031 = vmul.f32 %v885, %v1030
          %v1032 = vrcp.pop %v910
          %v1033 = vmul.f32 %v910, %v1032
          %v1034 = vsub.f32 1.0, %v1033
          %v1035 = vmul.f32 %v1032, %v1034
          %v1036 = vadd.f32 %v1032, %v1035
          %vm1037 = vweird.f32 %v910
          %vm1038 = vweird.f32 %v1032
          %vm1039 = vmor %vm1037, %vm1038
          %v1040 = vsel %vm1039, %v1032, %v1036
          %v1041 = vand.u32 2147483647, %v910
          %vm1042 = vcmp.eq.f32.partialorder %v1041, 8.507059e+37
          %v1043 = vand.u32 %v910, 2147483648
          %v1044 = vor.u32 1.1754944e-38, %v1043
          %v1045 = vsel %vm1042, %v1044, %v1040
          %v1046 = vmul.f32 %v886, %v1045
          %v1047 = vrcp.pop %v912
          %v1048 = vmul.f32 %v912, %v1047
          %v1049 = vsub.f32 1.0, %v1048
          %v1050 = vmul.f32 %v1047, %v1049
          %v1051 = vadd.f32 %v1047, %v1050
          %vm1052 = vweird.f32 %v912
          %vm1053 = vweird.f32 %v1047
          %vm1054 = vmor %vm1052, %vm1053
          %v1055 = vsel %vm1054, %v1047, %v1051
          %v1056 = vand.u32 2147483647, %v912
          %vm1057 = vcmp.eq.f32.partialorder %v1056, 8.507059e+37
          %v1058 = vand.u32 %v912, 2147483648
          %v1059 = vor.u32 1.1754944e-38, %v1058
          %v1060 = vsel %vm1057, %v1059, %v1055
          %v1061 = vmul.f32 %v887, %v1060
          %v1062 = vrcp.pop %v914
          %v1063 = vmul.f32 %v914, %v1062
          %v1064 = vsub.f32 1.0, %v1063
          %v1065 = vmul.f32 %v1062, %v1064
          %v1066 = vadd.f32 %v1062, %v1065
          %vm1067 = vweird.f32 %v914
          %vm1068 = vweird.f32 %v1062
          %vm1069 = vmor %vm1067, %vm1068
          %v1070 = vsel %vm1069, %v1062, %v1066
          %v1071 = vand.u32 2147483647, %v914
          %vm1072 = vcmp.eq.f32.partialorder %v1071, 8.507059e+37
          %v1073 = vand.u32 %v914, 2147483648
          %v1074 = vor.u32 1.1754944e-38, %v1073
          %v1075 = vsel %vm1072, %v1074, %v1070
          %v1076 = vmul.f32 %v888, %v1075
          %v1077 = vrcp.pop %v916
          %v1078 = vmul.f32 %v916, %v1077
          %v1079 = vsub.f32 1.0, %v1078
          %v1080 = vmul.f32 %v1077, %v1079
          %v1081 = vadd.f32 %v1077, %v1080
          %vm1082 = vweird.f32 %v916
          %vm1083 = vweird.f32 %v1077
          %vm1084 = vmor %vm1082, %vm1083
          %v1085 = vsel %vm1084, %v1077, %v1081
          %v1086 = vand.u32 2147483647, %v916
          %vm1087 = vcmp.eq.f32.partialorder %v1086, 8.507059e+37
          %v1088 = vand.u32 %v916, 2147483648
          %v1089 = vor.u32 1.1754944e-38, %v1088
          %v1090 = vsel %vm1087, %v1089, %v1085
          %v1091 = vmul.f32 %v889, %v1090
          %v1092 = vrcp.pop %v918
          %v1093 = vmul.f32 %v918, %v1092
          %v1094 = vsub.f32 1.0, %v1093
          %v1095 = vmul.f32 %v1092, %v1094
          %v1096 = vadd.f32 %v1092, %v1095
          %vm1097 = vweird.f32 %v918
          %vm1098 = vweird.f32 %v1092
          %vm1099 = vmor %vm1097, %vm1098
          %v1100 = vsel %vm1099, %v1092, %v1096
          %v1101 = vand.u32 2147483647, %v918
          %vm1102 = vcmp.eq.f32.partialorder %v1101, 8.507059e+37
          %v1103 = vand.u32 %v918, 2147483648
          %v1104 = vor.u32 1.1754944e-38, %v1103
          %v1105 = vsel %vm1102, %v1104, %v1100
          %v1106 = vmul.f32 %v890, %v1105
          %v1107 = vrcp.pop %v920
          %v1108 = vmul.f32 %v920, %v1107
          %v1109 = vsub.f32 1.0, %v1108
          %v1110 = vmul.f32 %v1107, %v1109
          %v1111 = vadd.f32 %v1107, %v1110
          %vm1112 = vweird.f32 %v920
          %vm1113 = vweird.f32 %v1107
          %vm1114 = vmor %vm1112, %vm1113
          %v1115 = vsel %vm1114, %v1107, %v1111
          %v1116 = vand.u32 2147483647, %v920
          %vm1117 = vcmp.eq.f32.partialorder %v1116, 8.507059e+37
          %v1118 = vand.u32 %v920, 2147483648
          %v1119 = vor.u32 1.1754944e-38, %v1118
          %v1120 = vsel %vm1117, %v1119, %v1115
          %v1121 = vmul.f32 %v891, %v1120
          %v1122 = vrcp.pop %v922
          %v1123 = vmul.f32 %v922, %v1122
          %v1124 = vsub.f32 1.0, %v1123
          %v1125 = vmul.f32 %v1122, %v1124
          %v1126 = vadd.f32 %v1122, %v1125
          %vm1127 = vweird.f32 %v922
          %vm1128 = vweird.f32 %v1122
          %vm1129 = vmor %vm1127, %vm1128
          %v1130 = vsel %vm1129, %v1122, %v1126
          %v1131 = vand.u32 2147483647, %v922
          %vm1132 = vcmp.eq.f32.partialorder %v1131, 8.507059e+37
          %v1133 = vand.u32 %v922, 2147483648
          %v1134 = vor.u32 1.1754944e-38, %v1133
          %v1135 = vsel %vm1132, %v1134, %v1130
          %v1136 = vmul.f32 %v892, %v1135
          %v1137 = vrcp.pop %v924
          %v1138 = vmul.f32 %v924, %v1137
          %v1139 = vsub.f32 1.0, %v1138
          %v1140 = vmul.f32 %v1137, %v1139
          %v1141 = vadd.f32 %v1137, %v1140
          %vm1142 = vweird.f32 %v924
          %vm1143 = vweird.f32 %v1137
          %vm1144 = vmor %vm1142, %vm1143
          %v1145 = vsel %vm1144, %v1137, %v1141
          %v1146 = vand.u32 2147483647, %v924
          %vm1147 = vcmp.eq.f32.partialorder %v1146, 8.507059e+37
          %v1148 = vand.u32 %v924, 2147483648
          %v1149 = vor.u32 1.1754944e-38, %v1148
          %v1150 = vsel %vm1147, %v1149, %v1145
          %v1151 = vmul.f32 %v893, %v1150
          %v1152 = vrcp.pop %v926
          %v1153 = vmul.f32 %v926, %v1152
          %v1154 = vsub.f32 1.0, %v1153
          %v1155 = vmul.f32 %v1152, %v1154
          %v1156 = vadd.f32 %v1152, %v1155
          %vm1157 = vweird.f32 %v926
          %vm1158 = vweird.f32 %v1152
          %vm1159 = vmor %vm1157, %vm1158
          %v1160 = vsel %vm1159, %v1152, %v1156
          %v1161 = vand.u32 2147483647, %v926
          %vm1162 = vcmp.eq.f32.partialorder %v1161, 8.507059e+37
          %v1163 = vand.u32 %v926, 2147483648
          %v1164 = vor.u32 1.1754944e-38, %v1163
          %v1165 = vsel %vm1162, %v1164, %v1160
          %v1166 = vmul.f32 %v894, %v1165
          %1167 = vst [vmem:[%s359] sm:$0xff] %v941
          %1168 = vst [vmem:[%s359 + $0x8] sm:$0xff] %v956
          %1169 = vst [vmem:[%s359 + $0x10] sm:$0xff] %v971
          %1170 = vst [vmem:[%s359 + $0x18] sm:$0xff] %v986
          %1171 = vst [vmem:[%s359 + $0x20] sm:$0xff] %v1001
          %1172 = vst [vmem:[%s359 + $0x28] sm:$0xff] %v1016
          %1173 = vst [vmem:[%s359 + $0x30] sm:$0xff] %v1031
          %1174 = vst [vmem:[%s359 + $0x38] sm:$0xff] %v1046
          %1175 = vst [vmem:[%s359 + $0x40] sm:$0xff] %v1061
          %1176 = vst [vmem:[%s359 + $0x48] sm:$0xff] %v1076
          %1177 = vst [vmem:[%s359 + $0x50] sm:$0xff] %v1091
          %1178 = vst [vmem:[%s359 + $0x58] sm:$0xff] %v1106
          %1179 = vst [vmem:[%s359 + $0x60] sm:$0xff] %v1121
          %1180 = vst [vmem:[%s359 + $0x68] sm:$0xff] %v1136
          %1181 = vst [vmem:[%s359 + $0x70] sm:$0xff] %v1151
          %1182 = vst [vmem:[%s359 + $0x78] sm:$0xff] %v1166
        $region85: #{dcp_dec_forward.6} parent=72 // pred_fallthru
          _
        %s1183 = smul.u32 16, %s21
        %p1184 = scmp.lt.s32.totalorder %s1183, 47
        %s1185 = scalar_select %p1184, %s1183, 47
        %s1186 = smul.addr %s1185, 8
        %s1187 = scalar_lea.vmem %s4, %s1186
        %s1188 = smul.u32 16, %s21
        %p1189 = scmp.lt.s32.totalorder %s1188, 47
        %s1190 = scalar_select %p1189, %s1188, 47
        %s1191 = smul.addr %s1190, 8
        %s1192 = scalar_lea.vmem %s5, %s1191
        // Predicated region
        $region86: #{dcp_dec_forward.6} parent=72 // pred_check
          %p1193 = pneg %p138
        $region87: #{dcp_dec_forward.6} parent=72 // pred_check_branch
          %1195 = sbr.rel (%p1193) target = $region89
        $region88: #{dcp_dec_forward.6} parent=72 // pred_region
          %s1196 = smul.u32 16, %s21
        $region89: #{dcp_dec_forward.6} parent=72 // pred_fallthru
          _
        // Predicated region
        $region90: #{dcp_dec_forward.6} parent=72 // pred_check
          %p1197 = pneg %p164
        $region91: #{dcp_dec_forward.6} parent=72 // pred_check_branch
          %1199 = sbr.rel (%p1197) target = $region93
        $region92: #{dcp_dec_forward.6} parent=72 // pred_region
          %s1200 = smul.u32 16, %s21
        $region93: #{dcp_dec_forward.6} parent=72 // pred_fallthru
          _
      $region73: #{dcp_dec_forward.6} parent=5 // pred_fallthru
        _
      %p1201 = scmp.le.s32.totalorder 2, %s12
      // Predicated region
      $region94: #{dcp_dec_forward.6} parent=5 // pred_check
        %p1202 = pneg %p1201
      $region95: #{dcp_dec_forward.6} parent=5 // pred_check_branch
        %1204 = sbr.rel (%p1202) target = $region97
      $region96: #{dcp_dec_forward.6} parent=5 // pred_region
        %s1205 = ssub.s32 %s12, 2
        // Predicated region
        $region98: #{dcp_dec_forward.6} parent=96 // pred_check
          %p1206 = pneg %p144
        $region99: #{dcp_dec_forward.6} parent=96 // pred_check_branch
          %1208 = sbr.rel (%p1206) target = $region101
        $region100: #{dcp_dec_forward.6} parent=96 // pred_region
          %s1209 = smul.u32 16, %s23
          %p1210 = scmp.lt.s32.totalorder %s1209, 47
          %s1211 = scalar_select %p1210, %s1209, 47
          %s1212 = smul.addr %s1211, 8
          %s1213 = scalar_lea.vmem %s4, %s1212
        $region101: #{dcp_dec_forward.6} parent=96 // pred_fallthru
          _
        // Predicated region
        $region102: #{dcp_dec_forward.6} parent=96 // pred_check
          %p1214 = pneg %p170
        $region103: #{dcp_dec_forward.6} parent=96 // pred_check_branch
          %1216 = sbr.rel (%p1214) target = $region105
        $region104: #{dcp_dec_forward.6} parent=96 // pred_region
          %s1217 = smul.u32 16, %s23
          %p1218 = scmp.lt.s32.totalorder %s1217, 47
          %s1219 = scalar_select %p1218, %s1217, 47
          %s1220 = smul.addr %s1219, 8
          %s1221 = scalar_lea.vmem %s5, %s1220
        $region105: #{dcp_dec_forward.6} parent=96 // pred_fallthru
          _
      $region97: #{dcp_dec_forward.6} parent=5 // pred_fallthru
        _
    $region6: #{dcp_dec_forward.6} parent=1 // loop_footer
      %s16 = sadd.s32 1, %s12
    $region7: #{dcp_dec_forward.6} parent=1 // loop_footer_branch
      %11 = sbr.rel target = $region3
    $region8: #{dcp_dec_forward.6} parent=1 // loop_exit
      _

// kernel: dcp_dec_forward.4
$region0: #{dcp_dec_forward.4}
  #allocation0 [shape = 'u32[]', space=smem, size = 0x4, offset = 0x4, fixed_abs, tag = 'smem constant byte address 0x4 - core index']
  #allocation1 [shape = 'u32[72,128]{1,0:T(1,128)}', space=vmem, size = 0x9000, scoped, tag = 'internal scratch']
  %s0 = inlined_call_operand.vmem [shape: f32[384,48], index: 0, kind: input, shape index: {}]
  %s1 = inlined_call_operand.vmem [shape: f32[48,64], index: 1, kind: input, shape index: {}]
  %s2 = inlined_call_operand.vmem [shape: f32[1,64], index: 2, kind: input, shape index: {}]
  %s3 = inlined_call_operand.vmem [shape: f32[64,128], index: 3, kind: input, shape index: {}]
  %s4 = inlined_call_operand.vmem [shape: f32[1,128], index: 4, kind: input, shape index: {}]
  %s5 = inlined_call_operand.vmem [shape: f32[128,64], index: 5, kind: input, shape index: {}]
  %s6 = inlined_call_operand.vmem [shape: f32[1,64], index: 6, kind: input, shape index: {}]
  %s7 = inlined_call_operand.vmem [shape: f32[64,128], index: 7, kind: input, shape index: {}]
  %s8 = inlined_call_operand.vmem [shape: f32[1,128], index: 8, kind: input, shape index: {}]
  %s9 = inlined_call_operand.vmem [shape: f32[128,128], index: 9, kind: input, shape index: {}]
  %s10 = inlined_call_operand.vmem [shape: f32[1,128], index: 10, kind: input, shape index: {}]
  %s11 = inlined_call_operand.vmem [shape: f32[48,128], index: 11, kind: input, shape index: {}]
  %s12 = inlined_call_operand.vmem [shape: f32[384,128], index: 12, kind: output, shape index: {0}]
  %s13 = inlined_call_operand.vmem [shape: f32[384,128], index: 13, kind: output, shape index: {1}]
  %s14 = inlined_call_operand.vmem [shape: f32[384,128], index: 14, kind: output, shape index: {2}]
  %s15 = inlined_call_operand.vmem [shape: bf16[384,128], index: 15, kind: output, shape index: {3}]
  %16 = xla_tuple %s12, %s13, %s14, %s15
  %s17 = sld [smem:[#allocation0]]
  $region105: #{dcp_dec_forward.4} parent=0
    _
  %s19 = ssub.s32 1, %s17
  %s20 = scalar_select 0, %s19, %s17
  loop: start=0, step=1, limit=5
  $region2: #{dcp_dec_forward.4} parent=0 // loop_pre_header
    _
  $region3: #{dcp_dec_forward.4} parent=0 // loop_header
    %s22 = sphi 0, %s26
    %p23 = scmp.ge.s32.totalorder %s22, 5
    %s32 = sphi 0, %s34
    %s35 = sphi 0, %s32
    %s36 = sphi 0, %s35
    %s52 = sphi 0, %s36
    %s56 = sphi 0, %s56
    %s58 = sphi 0, %s56
    %s59 = sphi 0, %s58
    %s73 = sphi 0, %s59
    %s77 = sphi 0, %s77
    %s79 = sphi 0, %s77
    %s80 = sphi 0, %s79
    %s94 = sphi 0, %s80
    %s98 = sphi 0, %s98
    %s100 = sphi 0, %s98
    %s101 = sphi 0, %s100
    %s115 = sphi 0, %s101
    %s119 = sphi 0, %s119
    %s121 = sphi 0, %s119
    %s122 = sphi 0, %s121
    %s136 = sphi 0, %s122
    %s140 = sphi 0, %s140
    %s142 = sphi 0, %s140
    %s143 = sphi 0, %s142
    %s157 = sphi 0, %s143
    %s161 = sphi 0, %s161
    %s163 = sphi 0, %s161
    %s164 = sphi 0, %s163
    %s178 = sphi 0, %s164
    %s182 = sphi 0, %s182
    %s184 = sphi 0, %s182
    %s185 = sphi 0, %s184
    %s199 = sphi 0, %s185
    %s203 = sphi 0, %s203
    %s205 = sphi 0, %s203
    %s206 = sphi 0, %s205
    %s220 = sphi 0, %s206
    %s224 = sphi 0, %s224
    %s226 = sphi 0, %s224
    %s227 = sphi 0, %s226
    %s241 = sphi 0, %s227
    %s245 = sphi 0, %s245
    %s247 = sphi 0, %s245
    %s248 = sphi 0, %s247
    %s262 = sphi 0, %s248
    %s266 = sphi 0, %s266
    %s268 = sphi 0, %s266
    %s269 = sphi 0, %s268
    %s283 = sphi 0, %s269
    %s289 = sphi 0, %s291
    %s292 = sphi 0, %s289
    %s293 = sphi 0, %s292
    %s309 = sphi 0, %s293
    %s315 = sphi 0, %s317
    %s318 = sphi 0, %s315
    %s319 = sphi 0, %s318
    %s335 = sphi 0, %s319
    %s341 = sphi 0, %s343
    %s344 = sphi 0, %s341
    %s345 = sphi 0, %s344
    %s361 = sphi 0, %s345
    %s367 = sphi 0, %s369
    %s370 = sphi 0, %s367
    %s371 = sphi 0, %s370
    %s387 = sphi 0, %s371
  $region4: #{dcp_dec_forward.4} parent=0 // loop_header_branch
    %25 = sbr.rel (%p23) target = $region8
  $region5: #{dcp_dec_forward.4} parent=0 // loop_body
    %s27 = ssub.s32 %s22, 1
    %s28 = ssub.s32 %s22, 2
    %s29 = sadd.s32 %s22, 1
    %s30 = ssub.s32 %s22, %s29
    %p31 = scmp.eq.s32.totalorder %s30, 0
    %s33 = sadd.s32 %s32, 1
    %s34 = scalar_select %p31, %s32, %s33
    %p37 = pneg %p31
    %p38 = scmp.eq.s32.totalorder %s22, 2
    %p39 = por %p37, %p38
    %p40 = scmp.ne.s32.totalorder %s32, %s35
    %p41 = scmp.eq.s32.totalorder %s22, 0
    %p42 = por %p40, %p41
    %p43 = scmp.ne.s32.totalorder %s32, %s35
    %p44 = scmp.eq.s32.totalorder %s27, 2
    %p45 = por %p43, %p44
    %p46 = scmp.ne.s32.totalorder %s35, %s36
    %p47 = scmp.eq.s32.totalorder %s27, 0
    %p48 = por %p46, %p47
    %p49 = scmp.ne.s32.totalorder %s35, %s36
    %p50 = scmp.eq.s32.totalorder %s28, 2
    %p51 = por %p49, %p50
    %p53 = scmp.ne.s32.totalorder %s36, %s52
    %p54 = scmp.eq.s32.totalorder %s28, 0
    %p55 = por %p53, %p54
    %s57 = sadd.s32 %s56, 1
    %p60 = scmp.eq.s32.totalorder %s22, 2
    %p61 = scmp.ne.s32.totalorder %s56, %s58
    %p62 = scmp.eq.s32.totalorder %s22, 0
    %p63 = por %p61, %p62
    %p64 = scmp.ne.s32.totalorder %s56, %s58
    %p65 = scmp.eq.s32.totalorder %s27, 2
    %p66 = por %p64, %p65
    %p67 = scmp.ne.s32.totalorder %s58, %s59
    %p68 = scmp.eq.s32.totalorder %s27, 0
    %p69 = por %p67, %p68
    %p70 = scmp.ne.s32.totalorder %s58, %s59
    %p71 = scmp.eq.s32.totalorder %s28, 2
    %p72 = por %p70, %p71
    %p74 = scmp.ne.s32.totalorder %s59, %s73
    %p75 = scmp.eq.s32.totalorder %s28, 0
    %p76 = por %p74, %p75
    %s78 = sadd.s32 %s77, 1
    %p81 = scmp.eq.s32.totalorder %s22, 2
    %p82 = scmp.ne.s32.totalorder %s77, %s79
    %p83 = scmp.eq.s32.totalorder %s22, 0
    %p84 = por %p82, %p83
    %p85 = scmp.ne.s32.totalorder %s77, %s79
    %p86 = scmp.eq.s32.totalorder %s27, 2
    %p87 = por %p85, %p86
    %p88 = scmp.ne.s32.totalorder %s79, %s80
    %p89 = scmp.eq.s32.totalorder %s27, 0
    %p90 = por %p88, %p89
    %p91 = scmp.ne.s32.totalorder %s79, %s80
    %p92 = scmp.eq.s32.totalorder %s28, 2
    %p93 = por %p91, %p92
    %p95 = scmp.ne.s32.totalorder %s80, %s94
    %p96 = scmp.eq.s32.totalorder %s28, 0
    %p97 = por %p95, %p96
    %s99 = sadd.s32 %s98, 1
    %p102 = scmp.eq.s32.totalorder %s22, 2
    %p103 = scmp.ne.s32.totalorder %s98, %s100
    %p104 = scmp.eq.s32.totalorder %s22, 0
    %p105 = por %p103, %p104
    %p106 = scmp.ne.s32.totalorder %s98, %s100
    %p107 = scmp.eq.s32.totalorder %s27, 2
    %p108 = por %p106, %p107
    %p109 = scmp.ne.s32.totalorder %s100, %s101
    %p110 = scmp.eq.s32.totalorder %s27, 0
    %p111 = por %p109, %p110
    %p112 = scmp.ne.s32.totalorder %s100, %s101
    %p113 = scmp.eq.s32.totalorder %s28, 2
    %p114 = por %p112, %p113
    %p116 = scmp.ne.s32.totalorder %s101, %s115
    %p117 = scmp.eq.s32.totalorder %s28, 0
    %p118 = por %p116, %p117
    %s120 = sadd.s32 %s119, 1
    %p123 = scmp.eq.s32.totalorder %s22, 2
    %p124 = scmp.ne.s32.totalorder %s119, %s121
    %p125 = scmp.eq.s32.totalorder %s22, 0
    %p126 = por %p124, %p125
    %p127 = scmp.ne.s32.totalorder %s119, %s121
    %p128 = scmp.eq.s32.totalorder %s27, 2
    %p129 = por %p127, %p128
    %p130 = scmp.ne.s32.totalorder %s121, %s122
    %p131 = scmp.eq.s32.totalorder %s27, 0
    %p132 = por %p130, %p131
    %p133 = scmp.ne.s32.totalorder %s121, %s122
    %p134 = scmp.eq.s32.totalorder %s28, 2
    %p135 = por %p133, %p134
    %p137 = scmp.ne.s32.totalorder %s122, %s136
    %p138 = scmp.eq.s32.totalorder %s28, 0
    %p139 = por %p137, %p138
    %s141 = sadd.s32 %s140, 1
    %p144 = scmp.eq.s32.totalorder %s22, 2
    %p145 = scmp.ne.s32.totalorder %s140, %s142
    %p146 = scmp.eq.s32.totalorder %s22, 0
    %p147 = por %p145, %p146
    %p148 = scmp.ne.s32.totalorder %s140, %s142
    %p149 = scmp.eq.s32.totalorder %s27, 2
    %p150 = por %p148, %p149
    %p151 = scmp.ne.s32.totalorder %s142, %s143
    %p152 = scmp.eq.s32.totalorder %s27, 0
    %p153 = por %p151, %p152
    %p154 = scmp.ne.s32.totalorder %s142, %s143
    %p155 = scmp.eq.s32.totalorder %s28, 2
    %p156 = por %p154, %p155
    %p158 = scmp.ne.s32.totalorder %s143, %s157
    %p159 = scmp.eq.s32.totalorder %s28, 0
    %p160 = por %p158, %p159
    %s162 = sadd.s32 %s161, 1
    %p165 = scmp.eq.s32.totalorder %s22, 2
    %p166 = scmp.ne.s32.totalorder %s161, %s163
    %p167 = scmp.eq.s32.totalorder %s22, 0
    %p168 = por %p166, %p167
    %p169 = scmp.ne.s32.totalorder %s161, %s163
    %p170 = scmp.eq.s32.totalorder %s27, 2
    %p171 = por %p169, %p170
    %p172 = scmp.ne.s32.totalorder %s163, %s164
    %p173 = scmp.eq.s32.totalorder %s27, 0
    %p174 = por %p172, %p173
    %p175 = scmp.ne.s32.totalorder %s163, %s164
    %p176 = scmp.eq.s32.totalorder %s28, 2
    %p177 = por %p175, %p176
    %p179 = scmp.ne.s32.totalorder %s164, %s178
    %p180 = scmp.eq.s32.totalorder %s28, 0
    %p181 = por %p179, %p180
    %s183 = sadd.s32 %s182, 1
    %p186 = scmp.eq.s32.totalorder %s22, 2
    %p187 = scmp.ne.s32.totalorder %s182, %s184
    %p188 = scmp.eq.s32.totalorder %s22, 0
    %p189 = por %p187, %p188
    %p190 = scmp.ne.s32.totalorder %s182, %s184
    %p191 = scmp.eq.s32.totalorder %s27, 2
    %p192 = por %p190, %p191
    %p193 = scmp.ne.s32.totalorder %s184, %s185
    %p194 = scmp.eq.s32.totalorder %s27, 0
    %p195 = por %p193, %p194
    %p196 = scmp.ne.s32.totalorder %s184, %s185
    %p197 = scmp.eq.s32.totalorder %s28, 2
    %p198 = por %p196, %p197
    %p200 = scmp.ne.s32.totalorder %s185, %s199
    %p201 = scmp.eq.s32.totalorder %s28, 0
    %p202 = por %p200, %p201
    %s204 = sadd.s32 %s203, 1
    %p207 = scmp.eq.s32.totalorder %s22, 2
    %p208 = scmp.ne.s32.totalorder %s203, %s205
    %p209 = scmp.eq.s32.totalorder %s22, 0
    %p210 = por %p208, %p209
    %p211 = scmp.ne.s32.totalorder %s203, %s205
    %p212 = scmp.eq.s32.totalorder %s27, 2
    %p213 = por %p211, %p212
    %p214 = scmp.ne.s32.totalorder %s205, %s206
    %p215 = scmp.eq.s32.totalorder %s27, 0
    %p216 = por %p214, %p215
    %p217 = scmp.ne.s32.totalorder %s205, %s206
    %p218 = scmp.eq.s32.totalorder %s28, 2
    %p219 = por %p217, %p218
    %p221 = scmp.ne.s32.totalorder %s206, %s220
    %p222 = scmp.eq.s32.totalorder %s28, 0
    %p223 = por %p221, %p222
    %s225 = sadd.s32 %s224, 1
    %p228 = scmp.eq.s32.totalorder %s22, 2
    %p229 = scmp.ne.s32.totalorder %s224, %s226
    %p230 = scmp.eq.s32.totalorder %s22, 0
    %p231 = por %p229, %p230
    %p232 = scmp.ne.s32.totalorder %s224, %s226
    %p233 = scmp.eq.s32.totalorder %s27, 2
    %p234 = por %p232, %p233
    %p235 = scmp.ne.s32.totalorder %s226, %s227
    %p236 = scmp.eq.s32.totalorder %s27, 0
    %p237 = por %p235, %p236
    %p238 = scmp.ne.s32.totalorder %s226, %s227
    %p239 = scmp.eq.s32.totalorder %s28, 2
    %p240 = por %p238, %p239
    %p242 = scmp.ne.s32.totalorder %s227, %s241
    %p243 = scmp.eq.s32.totalorder %s28, 0
    %p244 = por %p242, %p243
    %s246 = sadd.s32 %s245, 1
    %p249 = scmp.eq.s32.totalorder %s22, 2
    %p250 = scmp.ne.s32.totalorder %s245, %s247
    %p251 = scmp.eq.s32.totalorder %s22, 0
    %p252 = por %p250, %p251
    %p253 = scmp.ne.s32.totalorder %s245, %s247
    %p254 = scmp.eq.s32.totalorder %s27, 2
    %p255 = por %p253, %p254
    %p256 = scmp.ne.s32.totalorder %s247, %s248
    %p257 = scmp.eq.s32.totalorder %s27, 0
    %p258 = por %p256, %p257
    %p259 = scmp.ne.s32.totalorder %s247, %s248
    %p260 = scmp.eq.s32.totalorder %s28, 2
    %p261 = por %p259, %p260
    %p263 = scmp.ne.s32.totalorder %s248, %s262
    %p264 = scmp.eq.s32.totalorder %s28, 0
    %p265 = por %p263, %p264
    %s267 = sadd.s32 %s266, 1
    %p270 = scmp.eq.s32.totalorder %s22, 2
    %p271 = scmp.ne.s32.totalorder %s266, %s268
    %p272 = scmp.eq.s32.totalorder %s22, 0
    %p273 = por %p271, %p272
    %p274 = scmp.ne.s32.totalorder %s266, %s268
    %p275 = scmp.eq.s32.totalorder %s27, 2
    %p276 = por %p274, %p275
    %p277 = scmp.ne.s32.totalorder %s268, %s269
    %p278 = scmp.eq.s32.totalorder %s27, 0
    %p279 = por %p277, %p278
    %p280 = scmp.ne.s32.totalorder %s268, %s269
    %p281 = scmp.eq.s32.totalorder %s28, 2
    %p282 = por %p280, %p281
    %p284 = scmp.ne.s32.totalorder %s269, %s283
    %p285 = scmp.eq.s32.totalorder %s28, 0
    %p286 = por %p284, %p285
    %s287 = ssub.s32 %s22, %s29
    %p288 = scmp.eq.s32.totalorder %s287, 0
    %s290 = sadd.s32 %s289, 1
    %s291 = scalar_select %p288, %s289, %s290
    %p294 = pneg %p288
    %p295 = scmp.eq.s32.totalorder %s22, 2
    %p296 = por %p294, %p295
    %p297 = scmp.ne.s32.totalorder %s289, %s292
    %p298 = scmp.eq.s32.totalorder %s22, 0
    %p299 = por %p297, %p298
    %p300 = scmp.ne.s32.totalorder %s289, %s292
    %p301 = scmp.eq.s32.totalorder %s27, 2
    %p302 = por %p300, %p301
    %p303 = scmp.ne.s32.totalorder %s292, %s293
    %p304 = scmp.eq.s32.totalorder %s27, 0
    %p305 = por %p303, %p304
    %p306 = scmp.ne.s32.totalorder %s292, %s293
    %p307 = scmp.eq.s32.totalorder %s28, 2
    %p308 = por %p306, %p307
    %p310 = scmp.ne.s32.totalorder %s293, %s309
    %p311 = scmp.eq.s32.totalorder %s28, 0
    %p312 = por %p310, %p311
    %s313 = ssub.s32 %s22, %s29
    %p314 = scmp.eq.s32.totalorder %s313, 0
    %s316 = sadd.s32 %s315, 1
    %s317 = scalar_select %p314, %s315, %s316
    %p320 = pneg %p314
    %p321 = scmp.eq.s32.totalorder %s22, 2
    %p322 = por %p320, %p321
    %p323 = scmp.ne.s32.totalorder %s315, %s318
    %p324 = scmp.eq.s32.totalorder %s22, 0
    %p325 = por %p323, %p324
    %p326 = scmp.ne.s32.totalorder %s315, %s318
    %p327 = scmp.eq.s32.totalorder %s27, 2
    %p328 = por %p326, %p327
    %p329 = scmp.ne.s32.totalorder %s318, %s319
    %p330 = scmp.eq.s32.totalorder %s27, 0
    %p331 = por %p329, %p330
    %p332 = scmp.ne.s32.totalorder %s318, %s319
    %p333 = scmp.eq.s32.totalorder %s28, 2
    %p334 = por %p332, %p333
    %p336 = scmp.ne.s32.totalorder %s319, %s335
    %p337 = scmp.eq.s32.totalorder %s28, 0
    %p338 = por %p336, %p337
    %s339 = ssub.s32 %s22, %s29
    %p340 = scmp.eq.s32.totalorder %s339, 0
    %s342 = sadd.s32 %s341, 1
    %s343 = scalar_select %p340, %s341, %s342
    %p346 = pneg %p340
    %p347 = scmp.eq.s32.totalorder %s22, 2
    %p348 = por %p346, %p347
    %p349 = scmp.ne.s32.totalorder %s341, %s344
    %p350 = scmp.eq.s32.totalorder %s22, 0
    %p351 = por %p349, %p350
    %p352 = scmp.ne.s32.totalorder %s341, %s344
    %p353 = scmp.eq.s32.totalorder %s27, 2
    %p354 = por %p352, %p353
    %p355 = scmp.ne.s32.totalorder %s344, %s345
    %p356 = scmp.eq.s32.totalorder %s27, 0
    %p357 = por %p355, %p356
    %p358 = scmp.ne.s32.totalorder %s344, %s345
    %p359 = scmp.eq.s32.totalorder %s28, 2
    %p360 = por %p358, %p359
    %p362 = scmp.ne.s32.totalorder %s345, %s361
    %p363 = scmp.eq.s32.totalorder %s28, 0
    %p364 = por %p362, %p363
    %s365 = ssub.s32 %s22, %s29
    %p366 = scmp.eq.s32.totalorder %s365, 0
    %s368 = sadd.s32 %s367, 1
    %s369 = scalar_select %p366, %s367, %s368
    %p372 = pneg %p366
    %p373 = scmp.eq.s32.totalorder %s22, 2
    %p374 = por %p372, %p373
    %p375 = scmp.ne.s32.totalorder %s367, %s370
    %p376 = scmp.eq.s32.totalorder %s22, 0
    %p377 = por %p375, %p376
    %p378 = scmp.ne.s32.totalorder %s367, %s370
    %p379 = scmp.eq.s32.totalorder %s27, 2
    %p380 = por %p378, %p379
    %p381 = scmp.ne.s32.totalorder %s370, %s371
    %p382 = scmp.eq.s32.totalorder %s27, 0
    %p383 = por %p381, %p382
    %p384 = scmp.ne.s32.totalorder %s370, %s371
    %p385 = scmp.eq.s32.totalorder %s28, 2
    %p386 = por %p384, %p385
    %p388 = scmp.ne.s32.totalorder %s371, %s387
    %p389 = scmp.eq.s32.totalorder %s28, 0
    %p390 = por %p388, %p389
    %p391 = scmp.le.s32.totalorder 1, %s22
    %p392 = scmp.lt.s32.totalorder %s22, 4
    %p393 = pnand %p391, %p392
    %p394 = pneg %p393
    // Predicated region
    $region9: #{dcp_dec_forward.4} parent=5 // pred_check
      _
    $region10: #{dcp_dec_forward.4} parent=5 // pred_check_branch
      %396 = sbr.rel (%p393) target = $region12
    $region11: #{dcp_dec_forward.4} parent=5 // pred_region
      %s397 = ssub.s32 %s22, 1
      // Predicated region
      $region13: #{dcp_dec_forward.4} parent=11 // pred_check
        %p398 = pneg %p69
      $region14: #{dcp_dec_forward.4} parent=11 // pred_check_branch
        %400 = sbr.rel (%p398) target = $region16
      $region15: #{dcp_dec_forward.4} parent=11 // pred_region
        _
      $region16: #{dcp_dec_forward.4} parent=11 // pred_fallthru
        _
      // Predicated region
      $region17: #{dcp_dec_forward.4} parent=11 // pred_check
        %p401 = pneg %p90
      $region18: #{dcp_dec_forward.4} parent=11 // pred_check_branch
        %403 = sbr.rel (%p401) target = $region20
      $region19: #{dcp_dec_forward.4} parent=11 // pred_region
        _
      $region20: #{dcp_dec_forward.4} parent=11 // pred_fallthru
        _
      // Predicated region
      $region21: #{dcp_dec_forward.4} parent=11 // pred_check
        %p404 = pneg %p111
      $region22: #{dcp_dec_forward.4} parent=11 // pred_check_branch
        %406 = sbr.rel (%p404) target = $region24
      $region23: #{dcp_dec_forward.4} parent=11 // pred_region
        _
      $region24: #{dcp_dec_forward.4} parent=11 // pred_fallthru
        _
      // Predicated region
      $region25: #{dcp_dec_forward.4} parent=11 // pred_check
        %p407 = pneg %p132
      $region26: #{dcp_dec_forward.4} parent=11 // pred_check_branch
        %409 = sbr.rel (%p407) target = $region28
      $region27: #{dcp_dec_forward.4} parent=11 // pred_region
        _
      $region28: #{dcp_dec_forward.4} parent=11 // pred_fallthru
        _
      // Predicated region
      $region29: #{dcp_dec_forward.4} parent=11 // pred_check
        %p410 = pneg %p153
      $region30: #{dcp_dec_forward.4} parent=11 // pred_check_branch
        %412 = sbr.rel (%p410) target = $region32
      $region31: #{dcp_dec_forward.4} parent=11 // pred_region
        _
      $region32: #{dcp_dec_forward.4} parent=11 // pred_fallthru
        _
      // Predicated region
      $region33: #{dcp_dec_forward.4} parent=11 // pred_check
        %p413 = pneg %p174
      $region34: #{dcp_dec_forward.4} parent=11 // pred_check_branch
        %415 = sbr.rel (%p413) target = $region36
      $region35: #{dcp_dec_forward.4} parent=11 // pred_region
        _
      $region36: #{dcp_dec_forward.4} parent=11 // pred_fallthru
        _
      // Predicated region
      $region37: #{dcp_dec_forward.4} parent=11 // pred_check
        %p416 = pneg %p195
      $region38: #{dcp_dec_forward.4} parent=11 // pred_check_branch
        %418 = sbr.rel (%p416) target = $region40
      $region39: #{dcp_dec_forward.4} parent=11 // pred_region
        _
      $region40: #{dcp_dec_forward.4} parent=11 // pred_fallthru
        _
      // Predicated region
      $region41: #{dcp_dec_forward.4} parent=11 // pred_check
        %p419 = pneg %p216
      $region42: #{dcp_dec_forward.4} parent=11 // pred_check_branch
        %421 = sbr.rel (%p419) target = $region44
      $region43: #{dcp_dec_forward.4} parent=11 // pred_region
        _
      $region44: #{dcp_dec_forward.4} parent=11 // pred_fallthru
        _
      // Predicated region
      $region45: #{dcp_dec_forward.4} parent=11 // pred_check
        %p422 = pneg %p237
      $region46: #{dcp_dec_forward.4} parent=11 // pred_check_branch
        %424 = sbr.rel (%p422) target = $region48
      $region47: #{dcp_dec_forward.4} parent=11 // pred_region
        _
      $region48: #{dcp_dec_forward.4} parent=11 // pred_fallthru
        _
      // Predicated region
      $region49: #{dcp_dec_forward.4} parent=11 // pred_check
        %p425 = pneg %p258
      $region50: #{dcp_dec_forward.4} parent=11 // pred_check_branch
        %427 = sbr.rel (%p425) target = $region52
      $region51: #{dcp_dec_forward.4} parent=11 // pred_region
        _
      $region52: #{dcp_dec_forward.4} parent=11 // pred_fallthru
        _
      // Predicated region
      $region53: #{dcp_dec_forward.4} parent=11 // pred_check
        %p428 = pneg %p279
      $region54: #{dcp_dec_forward.4} parent=11 // pred_check_branch
        %430 = sbr.rel (%p428) target = $region56
      $region55: #{dcp_dec_forward.4} parent=11 // pred_region
        _
      $region56: #{dcp_dec_forward.4} parent=11 // pred_fallthru
        _
    $region12: #{dcp_dec_forward.4} parent=5 // pred_fallthru
      _
    %p431 = scmp.lt.s32.totalorder %s22, 3
    // Predicated region
    $region57: #{dcp_dec_forward.4} parent=5 // pred_check
      %p432 = pneg %p431
    $region58: #{dcp_dec_forward.4} parent=5 // pred_check_branch
      %434 = sbr.rel (%p432) target = $region60
    $region59: #{dcp_dec_forward.4} parent=5 // pred_region
      // Predicated region
      $region61: #{dcp_dec_forward.4} parent=59 // pred_check
        %p435 = pneg %p42
      $region62: #{dcp_dec_forward.4} parent=59 // pred_check_branch
        %437 = sbr.rel (%p435) target = $region64
      $region63: #{dcp_dec_forward.4} parent=59 // pred_region
        %s438 = smul.u32 16, %s22
        %p439 = scmp.lt.s32.totalorder %s438, 47
        %s440 = scalar_select %p439, %s438, 47
        %s441 = smul.addr %s440, 8
        %s442 = scalar_lea.vmem %s0, %s441
        %s443 = smul.u32 16, %s22
      $region64: #{dcp_dec_forward.4} parent=59 // pred_fallthru
        _
    $region60: #{dcp_dec_forward.4} parent=5 // pred_fallthru
      _
    %p444 = scmp.le.s32.totalorder 1, %s22
    %p445 = scmp.lt.s32.totalorder %s22, 4
    %p446 = pnand %p444, %p445
    %p447 = pneg %p446
    // Predicated region
    $region65: #{dcp_dec_forward.4} parent=5 // pred_check
      _
    $region66: #{dcp_dec_forward.4} parent=5 // pred_check_branch
      %449 = sbr.rel (%p446) target = $region68
    $region67: #{dcp_dec_forward.4} parent=5 // pred_region
      %s450 = ssub.s32 %s22, 1
      %s451 = smul.u32 16, %s27
      %p452 = scmp.lt.s32.totalorder %s451, 47
      %s453 = scalar_select %p452, %s451, 47
      %s454 = smul.addr %s453, 8
      %s455 = scalar_lea.vmem %s0, %s454
      %p456 = pneg %p48
      %p457 = pneg %p45
      %p458 = pneg %p69
      %p459 = pneg %p66
      %p460 = pneg %p90
      %p461 = pneg %p87
      %p462 = pneg %p111
      %p463 = pneg %p108
      %p464 = pneg %p132
      %p465 = pneg %p129
      %p466 = pneg %p153
      %p467 = pneg %p150
      %p468 = pneg %p174
      %p469 = pneg %p171
      %p470 = pneg %p195
      %p471 = pneg %p192
      %p472 = pneg %p216
      %p473 = pneg %p213
      %p474 = pneg %p237
      %p475 = pneg %p234
      %p476 = pneg %p258
      %p477 = pneg %p255
      %p478 = pneg %p279
      %p479 = pneg %p276
      %p480 = pneg %p305
      %p481 = pneg %p302
      %s482 = smul.u32 16, %s27
      %p483 = scmp.lt.s32.totalorder %s482, 47
      %s484 = scalar_select %p483, %s482, 47
      %s485 = smul.addr %s484, 8
      %s486 = scalar_lea.vmem %s12, %s485
      %p487 = pneg %p331
      %p488 = pneg %p328
      %s489 = smul.u32 16, %s27
      %p490 = scmp.lt.s32.totalorder %s489, 47
      %s491 = scalar_select %p490, %s489, 47
      %s492 = smul.addr %s491, 8
      %s493 = scalar_lea.vmem %s13, %s492
      %p494 = pneg %p357
      %p495 = pneg %p354
      %s496 = smul.u32 16, %s27
      %p497 = scmp.lt.s32.totalorder %s496, 47
      %s498 = scalar_select %p497, %s496, 47
      %s499 = smul.addr %s498, 8
      %s500 = scalar_lea.vmem %s14, %s499
      %p501 = pneg %p383
      %p502 = pneg %p380
      %s503 = smul.u32 16, %s27
      %p504 = scmp.lt.s32.totalorder %s503, 47
      %s505 = scalar_select %p504, %s503, 47
      %s506 = smul.addr %s505, 4
      %s507 = scalar_lea.vmem %s15, %s506
      %s508 = smul.u32 16, %s27
      %p509 = scmp.lt.s32.totalorder %s508, 47
      %s510 = scalar_select %p509, %s508, 47
      %s511 = smul.addr %s510, 8
      %s512 = scalar_lea.vmem %s0, %s511
      %s513 = smul.u32 16, %s27
      %s514 = smul.u32 16, %s27
      %p515 = scmp.lt.s32.totalorder %s514, 47
      %s516 = scalar_select %p515, %s514, 47
      %s517 = smul.addr %s516, 8
      %s518 = scalar_lea.vmem %s12, %s517
      %s519 = smul.u32 16, %s27
      %s520 = smul.u32 16, %s27
      %p521 = scmp.lt.s32.totalorder %s520, 47
      %s522 = scalar_select %p521, %s520, 47
      %s523 = smul.addr %s522, 8
      %s524 = scalar_lea.vmem %s13, %s523
      %s525 = smul.u32 16, %s27
      %s526 = smul.u32 16, %s27
      %p527 = scmp.lt.s32.totalorder %s526, 47
      %s528 = scalar_select %p527, %s526, 47
      %s529 = smul.addr %s528, 8
      %s530 = scalar_lea.vmem %s14, %s529
      %s531 = smul.u32 16, %s27
      %s532 = smul.u32 16, %s27
      %p533 = scmp.lt.s32.totalorder %s532, 47
      %s534 = scalar_select %p533, %s532, 47
      %s535 = smul.addr %s534, 4
      %s536 = scalar_lea.vmem %s15, %s535
      %s537 = smul.u32 16, %s27
      %v538 = vld [vmem:[%s512] sm:$0xff]
      %v539 = vld [vmem:[%s512 + $0x8] sm:$0xff]
      %v540 = vld [vmem:[%s512 + $0x10] sm:$0xff]
      %v541 = vld [vmem:[%s512 + $0x18] sm:$0xff]
      %v542 = vld [vmem:[%s512 + $0x20] sm:$0xff]
      %v543 = vld [vmem:[%s512 + $0x28] sm:$0xff]
      %v544 = vld [vmem:[%s512 + $0x30] sm:$0xff]
      %v545 = vld [vmem:[%s512 + $0x38] sm:$0xff]
      %v546 = vld [vmem:[%s512 + $0x40] sm:$0xff]
      %v547 = vld [vmem:[%s512 + $0x48] sm:$0xff]
      %v548 = vld [vmem:[%s512 + $0x50] sm:$0xff]
      %v549 = vld [vmem:[%s512 + $0x58] sm:$0xff]
      %v550 = vld [vmem:[%s512 + $0x60] sm:$0xff]
      %v551 = vld [vmem:[%s512 + $0x68] sm:$0xff]
      %v552 = vld [vmem:[%s512 + $0x70] sm:$0xff]
      %v553 = vld [vmem:[%s512 + $0x78] sm:$0xff]
      %v554 = vld [vmem:[%s1] sm:$0xff]
      %v555 = vld [vmem:[%s1 + $0x8] sm:$0xff]
      %v556 = vld [vmem:[%s1 + $0x10] sm:$0xff]
      %v557 = vld [vmem:[%s1 + $0x18] sm:$0xff]
      %v558 = vld [vmem:[%s1 + $0x20] sm:$0xff]
      %v559 = vld [vmem:[%s1 + $0x28] sm:$0xff]
      %v560 = vld [vmem:[%s2] sm:$0x1]
      %v562 = vperm.slane %v560, 0
      %vm564 = vcmask 392192
      %v566 = vsel %vm564, %v538, 0
      %v569 = vsel %vm564, %v539, 0
      %v572 = vsel %vm564, %v540, 0
      %v575 = vsel %vm564, %v541, 0
      %v578 = vsel %vm564, %v542, 0
      %v581 = vsel %vm564, %v543, 0
      %v584 = vsel %vm564, %v544, 0
      %v587 = vsel %vm564, %v545, 0
      %v590 = vsel %vm564, %v546, 0
      %v593 = vsel %vm564, %v547, 0
      %v596 = vsel %vm564, %v548, 0
      %v599 = vsel %vm564, %v549, 0
      %v602 = vsel %vm564, %v550, 0
      %v605 = vsel %vm564, %v551, 0
      %v608 = vsel %vm564, %v552, 0
      %v611 = vsel %vm564, %v553, 0
      %613 = vmatpush.msra.mxu0 0.0
      %614 = vmatpush.msra.mxu0 0.0
      %615 = vmatpush.msra.mxu0 0.0
      %616 = vmatpush.msra.mxu0 0.0
      %617 = vmatpush.msra.mxu0 0.0
      %618 = vmatpush.msra.mxu0 0.0
      %619 = vmatpush.msra.mxu0 0.0
      %620 = vmatpush.msra.mxu0 0.0
      %621 = vmatpush.msra.mxu0 0.0
      %622 = vmatpush.msra.mxu0 0.0
      %623 = vmatpush.msra.mxu0 %v559
      %624 = vmatpush.msra.mxu0 %v558
      %625 = vmatpush.msra.mxu0 %v557
      %626 = vmatpush.msra.mxu0 %v556
      %627 = vmatpush.msra.mxu0 %v555
      %628 = vmatpush.msra.mxu0 %v554
      %629 = vmatmul.f32.gmra.mxu0 %v566
      %v630 = vpop.f32.mrf.mxu0
      %v631 = vadd.f32 %v562, %v630
      %632 = vmatmul.f32.gmra.mxu0 %v569
      %v633 = vpop.f32.mrf.mxu0
      %v634 = vadd.f32 %v562, %v633
      %635 = vmatmul.f32.gmra.mxu0 %v572
      %v636 = vpop.f32.mrf.mxu0
      %v637 = vadd.f32 %v562, %v636
      %638 = vmatmul.f32.gmra.mxu0 %v575
      %v639 = vpop.f32.mrf.mxu0
      %v640 = vadd.f32 %v562, %v639
      %641 = vmatmul.f32.gmra.mxu0 %v578
      %v642 = vpop.f32.mrf.mxu0
      %v643 = vadd.f32 %v562, %v642
      %644 = vmatmul.f32.gmra.mxu0 %v581
      %v645 = vpop.f32.mrf.mxu0
      %v646 = vadd.f32 %v562, %v645
      %647 = vmatmul.f32.gmra.mxu0 %v584
      %v648 = vpop.f32.mrf.mxu0
      %v649 = vadd.f32 %v562, %v648
      %650 = vmatmul.f32.gmra.mxu0 %v587
      %v651 = vpop.f32.mrf.mxu0
      %v652 = vadd.f32 %v562, %v651
      %653 = vmatmul.f32.gmra.mxu0 %v590
      %v654 = vpop.f32.mrf.mxu0
      %v655 = vadd.f32 %v562, %v654
      %656 = vmatmul.f32.gmra.mxu0 %v593
      %v657 = vpop.f32.mrf.mxu0
      %v658 = vadd.f32 %v562, %v657
      %659 = vmatmul.f32.gmra.mxu0 %v596
      %v660 = vpop.f32.mrf.mxu0
      %v661 = vadd.f32 %v562, %v660
      %662 = vmatmul.f32.gmra.mxu0 %v599
      %v663 = vpop.f32.mrf.mxu0
      %v664 = vadd.f32 %v562, %v663
      %665 = vmatmul.f32.gmra.mxu0 %v602
      %v666 = vpop.f32.mrf.mxu0
      %v667 = vadd.f32 %v562, %v666
      %668 = vmatmul.f32.gmra.mxu0 %v605
      %v669 = vpop.f32.mrf.mxu0
      %v670 = vadd.f32 %v562, %v669
      %671 = vmatmul.f32.gmra.mxu0 %v608
      %v672 = vpop.f32.mrf.mxu0
      %v673 = vadd.f32 %v562, %v672
      %674 = vmatmul.f32.gmra.mxu0 %v611
      %v675 = vpop.f32.mrf.mxu0
      %v676 = vadd.f32 %v562, %v675
      %677 = vdwg.mxu0
      %v678 = vmax.f32 %v631, 0.0
      %v679 = vmax.f32 %v634, 0.0
      %v680 = vmax.f32 %v637, 0.0
      %v681 = vmax.f32 %v640, 0.0
      %v682 = vmax.f32 %v643, 0.0
      %v683 = vmax.f32 %v646, 0.0
      %v684 = vmax.f32 %v649, 0.0
      %v685 = vmax.f32 %v652, 0.0
      %v686 = vmax.f32 %v655, 0.0
      %v687 = vmax.f32 %v658, 0.0
      %v688 = vmax.f32 %v661, 0.0
      %v689 = vmax.f32 %v664, 0.0
      %v690 = vmax.f32 %v667, 0.0
      %v691 = vmax.f32 %v670, 0.0
      %v692 = vmax.f32 %v673, 0.0
      %v693 = vmax.f32 %v676, 0.0
      %v694 = vld [vmem:[%s3] sm:$0xff]
      %v695 = vld [vmem:[%s3 + $0x8] sm:$0xff]
      %v696 = vld [vmem:[%s3 + $0x10] sm:$0xff]
      %v697 = vld [vmem:[%s3 + $0x18] sm:$0xff]
      %v698 = vld [vmem:[%s3 + $0x20] sm:$0xff]
      %v699 = vld [vmem:[%s3 + $0x28] sm:$0xff]
      %v700 = vld [vmem:[%s3 + $0x30] sm:$0xff]
      %v701 = vld [vmem:[%s3 + $0x38] sm:$0xff]
      %v702 = vld [vmem:[%s4] sm:$0x1]
      %v704 = vperm.slane %v702, 0
      %vm706 = vcmask 523264
      %v708 = vsel %vm706, %v678, 0
      %v711 = vsel %vm706, %v679, 0
      %v714 = vsel %vm706, %v680, 0
      %v717 = vsel %vm706, %v681, 0
      %v720 = vsel %vm706, %v682, 0
      %v723 = vsel %vm706, %v683, 0
      %v726 = vsel %vm706, %v684, 0
      %v729 = vsel %vm706, %v685, 0
      %v732 = vsel %vm706, %v686, 0
      %v735 = vsel %vm706, %v687, 0
      %v738 = vsel %vm706, %v688, 0
      %v741 = vsel %vm706, %v689, 0
      %v744 = vsel %vm706, %v690, 0
      %v747 = vsel %vm706, %v691, 0
      %v750 = vsel %vm706, %v692, 0
      %v753 = vsel %vm706, %v693, 0
      %755 = vmatpush.msra.mxu0 0.0
      %756 = vmatpush.msra.mxu0 0.0
      %757 = vmatpush.msra.mxu0 0.0
      %758 = vmatpush.msra.mxu0 0.0
      %759 = vmatpush.msra.mxu0 0.0
      %760 = vmatpush.msra.mxu0 0.0
      %761 = vmatpush.msra.mxu0 0.0
      %762 = vmatpush.msra.mxu0 0.0
      %763 = vmatpush.msra.mxu0 %v701
      %764 = vmatpush.msra.mxu0 %v700
      %765 = vmatpush.msra.mxu0 %v699
      %766 = vmatpush.msra.mxu0 %v698
      %767 = vmatpush.msra.mxu0 %v697
      %768 = vmatpush.msra.mxu0 %v696
      %769 = vmatpush.msra.mxu0 %v695
      %770 = vmatpush.msra.mxu0 %v694
      %771 = vmatmul.f32.gmra.mxu0 %v708
      %v772 = vpop.f32.mrf.mxu0
      %v773 = vadd.f32 %v704, %v772
      %774 = vmatmul.f32.gmra.mxu0 %v711
      %v775 = vpop.f32.mrf.mxu0
      %v776 = vadd.f32 %v704, %v775
      %777 = vmatmul.f32.gmra.mxu0 %v714
      %v778 = vpop.f32.mrf.mxu0
      %v779 = vadd.f32 %v704, %v778
      %780 = vmatmul.f32.gmra.mxu0 %v717
      %v781 = vpop.f32.mrf.mxu0
      %v782 = vadd.f32 %v704, %v781
      %783 = vmatmul.f32.gmra.mxu0 %v720
      %v784 = vpop.f32.mrf.mxu0
      %v785 = vadd.f32 %v704, %v784
      %786 = vmatmul.f32.gmra.mxu0 %v723
      %v787 = vpop.f32.mrf.mxu0
      %v788 = vadd.f32 %v704, %v787
      %789 = vmatmul.f32.gmra.mxu0 %v726
      %v790 = vpop.f32.mrf.mxu0
      %v791 = vadd.f32 %v704, %v790
      %792 = vmatmul.f32.gmra.mxu0 %v729
      %v793 = vpop.f32.mrf.mxu0
      %v794 = vadd.f32 %v704, %v793
      %795 = vmatmul.f32.gmra.mxu0 %v732
      %v796 = vpop.f32.mrf.mxu0
      %v797 = vadd.f32 %v704, %v796
      %798 = vmatmul.f32.gmra.mxu0 %v735
      %v799 = vpop.f32.mrf.mxu0
      %v800 = vadd.f32 %v704, %v799
      %801 = vmatmul.f32.gmra.mxu0 %v738
      %v802 = vpop.f32.mrf.mxu0
      %v803 = vadd.f32 %v704, %v802
      %804 = vmatmul.f32.gmra.mxu0 %v741
      %v805 = vpop.f32.mrf.mxu0
      %v806 = vadd.f32 %v704, %v805
      %807 = vmatmul.f32.gmra.mxu0 %v744
      %v808 = vpop.f32.mrf.mxu0
      %v809 = vadd.f32 %v704, %v808
      %810 = vmatmul.f32.gmra.mxu0 %v747
      %v811 = vpop.f32.mrf.mxu0
      %v812 = vadd.f32 %v704, %v811
      %813 = vmatmul.f32.gmra.mxu0 %v750
      %v814 = vpop.f32.mrf.mxu0
      %v815 = vadd.f32 %v704, %v814
      %816 = vmatmul.f32.gmra.mxu0 %v753
      %v817 = vpop.f32.mrf.mxu0
      %v818 = vadd.f32 %v704, %v817
      %819 = vdwg.mxu0
      %v820 = vld [vmem:[%s5] sm:$0xff]
      %v821 = vld [vmem:[%s5 + $0x8] sm:$0xff]
      %v822 = vld [vmem:[%s5 + $0x10] sm:$0xff]
      %v823 = vld [vmem:[%s5 + $0x18] sm:$0xff]
      %v824 = vld [vmem:[%s5 + $0x20] sm:$0xff]
      %v825 = vld [vmem:[%s5 + $0x28] sm:$0xff]
      %v826 = vld [vmem:[%s5 + $0x30] sm:$0xff]
      %v827 = vld [vmem:[%s5 + $0x38] sm:$0xff]
      %v828 = vld [vmem:[%s5 + $0x40] sm:$0xff]
      %v829 = vld [vmem:[%s5 + $0x48] sm:$0xff]
      %v830 = vld [vmem:[%s5 + $0x50] sm:$0xff]
      %v831 = vld [vmem:[%s5 + $0x58] sm:$0xff]
      %v832 = vld [vmem:[%s5 + $0x60] sm:$0xff]
      %v833 = vld [vmem:[%s5 + $0x68] sm:$0xff]
      %v834 = vld [vmem:[%s5 + $0x70] sm:$0xff]
      %v835 = vld [vmem:[%s5 + $0x78] sm:$0xff]
      %v836 = vld [vmem:[%s6] sm:$0x1]
      %v838 = vperm.slane %v836, 0
      %840 = vmatpush.msra.mxu0 %v835
      %841 = vmatpush.msra.mxu0 %v834
      %842 = vmatpush.msra.mxu0 %v833
      %843 = vmatpush.msra.mxu0 %v832
      %844 = vmatpush.msra.mxu0 %v831
      %845 = vmatpush.msra.mxu0 %v830
      %846 = vmatpush.msra.mxu0 %v829
      %847 = vmatpush.msra.mxu0 %v828
      %848 = vmatpush.msra.mxu0 %v827
      %849 = vmatpush.msra.mxu0 %v826
      %850 = vmatpush.msra.mxu0 %v825
      %851 = vmatpush.msra.mxu0 %v824
      %852 = vmatpush.msra.mxu0 %v823
      %853 = vmatpush.msra.mxu0 %v822
      %854 = vmatpush.msra.mxu0 %v821
      %855 = vmatpush.msra.mxu0 %v820
      %856 = vmatmul.f32.gmra.mxu0 %v773
      %v857 = vpop.f32.mrf.mxu0
      %v858 = vadd.f32 %v838, %v857
      %859 = vmatmul.f32.gmra.mxu0 %v776
      %v860 = vpop.f32.mrf.mxu0
      %v861 = vadd.f32 %v838, %v860
      %862 = vmatmul.f32.gmra.mxu0 %v779
      %v863 = vpop.f32.mrf.mxu0
      %v864 = vadd.f32 %v838, %v863
      %865 = vmatmul.f32.gmra.mxu0 %v782
      %v866 = vpop.f32.mrf.mxu0
      %v867 = vadd.f32 %v838, %v866
      %868 = vmatmul.f32.gmra.mxu0 %v785
      %v869 = vpop.f32.mrf.mxu0
      %v870 = vadd.f32 %v838, %v869
      %871 = vmatmul.f32.gmra.mxu0 %v788
      %v872 = vpop.f32.mrf.mxu0
      %v873 = vadd.f32 %v838, %v872
      %874 = vmatmul.f32.gmra.mxu0 %v791
      %v875 = vpop.f32.mrf.mxu0
      %v876 = vadd.f32 %v838, %v875
      %877 = vmatmul.f32.gmra.mxu0 %v794
      %v878 = vpop.f32.mrf.mxu0
      %v879 = vadd.f32 %v838, %v878
      %880 = vmatmul.f32.gmra.mxu0 %v797
      %v881 = vpop.f32.mrf.mxu0
      %v882 = vadd.f32 %v838, %v881
      %883 = vmatmul.f32.gmra.mxu0 %v800
      %v884 = vpop.f32.mrf.mxu0
      %v885 = vadd.f32 %v838, %v884
      %886 = vmatmul.f32.gmra.mxu0 %v803
      %v887 = vpop.f32.mrf.mxu0
      %v888 = vadd.f32 %v838, %v887
      %889 = vmatmul.f32.gmra.mxu0 %v806
      %v890 = vpop.f32.mrf.mxu0
      %v891 = vadd.f32 %v838, %v890
      %892 = vmatmul.f32.gmra.mxu0 %v809
      %v893 = vpop.f32.mrf.mxu0
      %v894 = vadd.f32 %v838, %v893
      %895 = vmatmul.f32.gmra.mxu0 %v812
      %v896 = vpop.f32.mrf.mxu0
      %v897 = vadd.f32 %v838, %v896
      %898 = vmatmul.f32.gmra.mxu0 %v815
      %v899 = vpop.f32.mrf.mxu0
      %v900 = vadd.f32 %v838, %v899
      %901 = vmatmul.f32.gmra.mxu0 %v818
      %v902 = vpop.f32.mrf.mxu0
      %v903 = vadd.f32 %v838, %v902
      %904 = vdwg.mxu0
      %v905 = vmax.f32 %v858, 0.0
      %v906 = vmax.f32 %v861, 0.0
      %v907 = vmax.f32 %v864, 0.0
      %v908 = vmax.f32 %v867, 0.0
      %v909 = vmax.f32 %v870, 0.0
      %v910 = vmax.f32 %v873, 0.0
      %v911 = vmax.f32 %v876, 0.0
      %v912 = vmax.f32 %v879, 0.0
      %v913 = vmax.f32 %v882, 0.0
      %v914 = vmax.f32 %v885, 0.0
      %v915 = vmax.f32 %v888, 0.0
      %v916 = vmax.f32 %v891, 0.0
      %v917 = vmax.f32 %v894, 0.0
      %v918 = vmax.f32 %v897, 0.0
      %v919 = vmax.f32 %v900, 0.0
      %v920 = vmax.f32 %v903, 0.0
      %v921 = vld [vmem:[%s7] sm:$0xff]
      %v922 = vld [vmem:[%s7 + $0x8] sm:$0xff]
      %v923 = vld [vmem:[%s7 + $0x10] sm:$0xff]
      %v924 = vld [vmem:[%s7 + $0x18] sm:$0xff]
      %v925 = vld [vmem:[%s7 + $0x20] sm:$0xff]
      %v926 = vld [vmem:[%s7 + $0x28] sm:$0xff]
      %v927 = vld [vmem:[%s7 + $0x30] sm:$0xff]
      %v928 = vld [vmem:[%s7 + $0x38] sm:$0xff]
      %v929 = vld [vmem:[%s8] sm:$0x1]
      %v931 = vperm.slane %v929, 0
      %v934 = vsel %vm706, %v905, 0
      %v937 = vsel %vm706, %v906, 0
      %v940 = vsel %vm706, %v907, 0
      %v943 = vsel %vm706, %v908, 0
      %v946 = vsel %vm706, %v909, 0
      %v949 = vsel %vm706, %v910, 0
      %v952 = vsel %vm706, %v911, 0
      %v955 = vsel %vm706, %v912, 0
      %v958 = vsel %vm706, %v913, 0
      %v961 = vsel %vm706, %v914, 0
      %v964 = vsel %vm706, %v915, 0
      %v967 = vsel %vm706, %v916, 0
      %v970 = vsel %vm706, %v917, 0
      %v973 = vsel %vm706, %v918, 0
      %v976 = vsel %vm706, %v919, 0
      %v979 = vsel %vm706, %v920, 0
      %981 = vmatpush.msra.mxu0 0.0
      %982 = vmatpush.msra.mxu0 0.0
      %983 = vmatpush.msra.mxu0 0.0
      %984 = vmatpush.msra.mxu0 0.0
      %985 = vmatpush.msra.mxu0 0.0
      %986 = vmatpush.msra.mxu0 0.0
      %987 = vmatpush.msra.mxu0 0.0
      %988 = vmatpush.msra.mxu0 0.0
      %989 = vmatpush.msra.mxu0 %v928
      %990 = vmatpush.msra.mxu0 %v927
      %991 = vmatpush.msra.mxu0 %v926
      %992 = vmatpush.msra.mxu0 %v925
      %993 = vmatpush.msra.mxu0 %v924
      %994 = vmatpush.msra.mxu0 %v923
      %995 = vmatpush.msra.mxu0 %v922
      %996 = vmatpush.msra.mxu0 %v921
      %997 = vmatmul.f32.gmra.mxu0 %v934
      %v998 = vpop.f32.mrf.mxu0
      %v999 = vadd.f32 %v931, %v998
      %1000 = vmatmul.f32.gmra.mxu0 %v937
      %v1001 = vpop.f32.mrf.mxu0
      %v1002 = vadd.f32 %v931, %v1001
      %1003 = vmatmul.f32.gmra.mxu0 %v940
      %v1004 = vpop.f32.mrf.mxu0
      %v1005 = vadd.f32 %v931, %v1004
      %1006 = vmatmul.f32.gmra.mxu0 %v943
      %v1007 = vpop.f32.mrf.mxu0
      %v1008 = vadd.f32 %v931, %v1007
      %1009 = vmatmul.f32.gmra.mxu0 %v946
      %v1010 = vpop.f32.mrf.mxu0
      %v1011 = vadd.f32 %v931, %v1010
      %1012 = vmatmul.f32.gmra.mxu0 %v949
      %v1013 = vpop.f32.mrf.mxu0
      %v1014 = vadd.f32 %v931, %v1013
      %1015 = vmatmul.f32.gmra.mxu0 %v952
      %v1016 = vpop.f32.mrf.mxu0
      %v1017 = vadd.f32 %v931, %v1016
      %1018 = vmatmul.f32.gmra.mxu0 %v955
      %v1019 = vpop.f32.mrf.mxu0
      %v1020 = vadd.f32 %v931, %v1019
      %1021 = vmatmul.f32.gmra.mxu0 %v958
      %v1022 = vpop.f32.mrf.mxu0
      %v1023 = vadd.f32 %v931, %v1022
      %1024 = vmatmul.f32.gmra.mxu0 %v961
      %v1025 = vpop.f32.mrf.mxu0
      %v1026 = vadd.f32 %v931, %v1025
      %1027 = vmatmul.f32.gmra.mxu0 %v964
      %v1028 = vpop.f32.mrf.mxu0
      %v1029 = vadd.f32 %v931, %v1028
      %1030 = vmatmul.f32.gmra.mxu0 %v967
      %v1031 = vpop.f32.mrf.mxu0
      %v1032 = vadd.f32 %v931, %v1031
      %1033 = vmatmul.f32.gmra.mxu0 %v970
      %v1034 = vpop.f32.mrf.mxu0
      %v1035 = vadd.f32 %v931, %v1034
      %1036 = vmatmul.f32.gmra.mxu0 %v973
      %v1037 = vpop.f32.mrf.mxu0
      %v1038 = vadd.f32 %v931, %v1037
      %1039 = vmatmul.f32.gmra.mxu0 %v976
      %v1040 = vpop.f32.mrf.mxu0
      %v1041 = vadd.f32 %v931, %v1040
      %1042 = vmatmul.f32.gmra.mxu0 %v979
      %v1043 = vpop.f32.mrf.mxu0
      %v1044 = vadd.f32 %v931, %v1043
      %1045 = vdwg.mxu0
      %1046 = vst [vmem:[%s518] sm:$0xff] %v999
      %1047 = vst [vmem:[%s518 + $0x8] sm:$0xff] %v1002
      %1048 = vst [vmem:[%s518 + $0x10] sm:$0xff] %v1005
      %1049 = vst [vmem:[%s518 + $0x18] sm:$0xff] %v1008
      %1050 = vst [vmem:[%s518 + $0x20] sm:$0xff] %v1011
      %1051 = vst [vmem:[%s518 + $0x28] sm:$0xff] %v1014
      %1052 = vst [vmem:[%s518 + $0x30] sm:$0xff] %v1017
      %1053 = vst [vmem:[%s518 + $0x38] sm:$0xff] %v1020
      %1054 = vst [vmem:[%s518 + $0x40] sm:$0xff] %v1023
      %1055 = vst [vmem:[%s518 + $0x48] sm:$0xff] %v1026
      %1056 = vst [vmem:[%s518 + $0x50] sm:$0xff] %v1029
      %1057 = vst [vmem:[%s518 + $0x58] sm:$0xff] %v1032
      %1058 = vst [vmem:[%s518 + $0x60] sm:$0xff] %v1035
      %1059 = vst [vmem:[%s518 + $0x68] sm:$0xff] %v1038
      %1060 = vst [vmem:[%s518 + $0x70] sm:$0xff] %v1041
      %1061 = vst [vmem:[%s518 + $0x78] sm:$0xff] %v1044
      %1062 = vst [vmem:[%s524] sm:$0xff] %v773
      %1063 = vst [vmem:[%s524 + $0x8] sm:$0xff] %v776
      %1064 = vst [vmem:[%s524 + $0x10] sm:$0xff] %v779
      %1065 = vst [vmem:[%s524 + $0x18] sm:$0xff] %v782
      %1066 = vst [vmem:[%s524 + $0x20] sm:$0xff] %v785
      %1067 = vst [vmem:[%s524 + $0x28] sm:$0xff] %v788
      %1068 = vst [vmem:[%s524 + $0x30] sm:$0xff] %v791
      %1069 = vst [vmem:[%s524 + $0x38] sm:$0xff] %v794
      %1070 = vst [vmem:[%s524 + $0x40] sm:$0xff] %v797
      %1071 = vst [vmem:[%s524 + $0x48] sm:$0xff] %v800
      %1072 = vst [vmem:[%s524 + $0x50] sm:$0xff] %v803
      %1073 = vst [vmem:[%s524 + $0x58] sm:$0xff] %v806
      %1074 = vst [vmem:[%s524 + $0x60] sm:$0xff] %v809
      %1075 = vst [vmem:[%s524 + $0x68] sm:$0xff] %v812
      %1076 = vst [vmem:[%s524 + $0x70] sm:$0xff] %v815
      %1077 = vst [vmem:[%s524 + $0x78] sm:$0xff] %v818
      %v1078 = vld [vmem:[%s9] sm:$0xff]
      %v1079 = vld [vmem:[%s9 + $0x8] sm:$0xff]
      %v1080 = vld [vmem:[%s9 + $0x10] sm:$0xff]
      %v1081 = vld [vmem:[%s9 + $0x18] sm:$0xff]
      %v1082 = vld [vmem:[%s9 + $0x20] sm:$0xff]
      %v1083 = vld [vmem:[%s9 + $0x28] sm:$0xff]
      %v1084 = vld [vmem:[%s9 + $0x30] sm:$0xff]
      %v1085 = vld [vmem:[%s9 + $0x38] sm:$0xff]
      %v1086 = vld [vmem:[%s9 + $0x40] sm:$0xff]
      %v1087 = vld [vmem:[%s9 + $0x48] sm:$0xff]
      %v1088 = vld [vmem:[%s9 + $0x50] sm:$0xff]
      %v1089 = vld [vmem:[%s9 + $0x58] sm:$0xff]
      %v1090 = vld [vmem:[%s9 + $0x60] sm:$0xff]
      %v1091 = vld [vmem:[%s9 + $0x68] sm:$0xff]
      %v1092 = vld [vmem:[%s9 + $0x70] sm:$0xff]
      %v1093 = vld [vmem:[%s9 + $0x78] sm:$0xff]
      %v1094 = vld [vmem:[%s10] sm:$0x1]
      %1095 = vmatpush.xpose.msra.mxu0 %v1093
      %1096 = vmatpush.xpose.msra.mxu0 %v1092
      %1097 = vmatpush.xpose.msra.mxu0 %v1091
      %1098 = vmatpush.xpose.msra.mxu0 %v1090
      %1099 = vmatpush.xpose.msra.mxu0 %v1089
      %1100 = vmatpush.xpose.msra.mxu0 %v1088
      %1101 = vmatpush.xpose.msra.mxu0 %v1087
      %1102 = vmatpush.xpose.msra.mxu0 %v1086
      %1103 = vmatpush.xpose.msra.mxu0 %v1085
      %1104 = vmatpush.xpose.msra.mxu0 %v1084
      %1105 = vmatpush.xpose.msra.mxu0 %v1083
      %1106 = vmatpush.xpose.msra.mxu0 %v1082
      %1107 = vmatpush.xpose.msra.mxu0 %v1081
      %1108 = vmatpush.xpose.msra.mxu0 %v1080
      %1109 = vmatpush.xpose.msra.mxu0 %v1079
      %1110 = vmatpush.xpose.msra.mxu0 %v1078
      %1111 = vmatmul.f32.gmra.mxu0 %v773
      %v1112 = vpop.f32.mrf.mxu0
      %v1113 = vadd.f32 0.0, %v1112
      %1114 = vmatmul.f32.gmra.mxu0 %v776
      %v1115 = vpop.f32.mrf.mxu0
      %v1116 = vadd.f32 0.0, %v1115
      %1117 = vmatmul.f32.gmra.mxu0 %v779
      %v1118 = vpop.f32.mrf.mxu0
      %v1119 = vadd.f32 0.0, %v1118
      %1120 = vmatmul.f32.gmra.mxu0 %v782
      %v1121 = vpop.f32.mrf.mxu0
      %v1122 = vadd.f32 0.0, %v1121
      %1123 = vmatmul.f32.gmra.mxu0 %v785
      %v1124 = vpop.f32.mrf.mxu0
      %v1125 = vadd.f32 0.0, %v1124
      %1126 = vmatmul.f32.gmra.mxu0 %v788
      %v1127 = vpop.f32.mrf.mxu0
      %v1128 = vadd.f32 0.0, %v1127
      %1129 = vmatmul.f32.gmra.mxu0 %v791
      %v1130 = vpop.f32.mrf.mxu0
      %v1131 = vadd.f32 0.0, %v1130
      %1132 = vmatmul.f32.gmra.mxu0 %v794
      %v1133 = vpop.f32.mrf.mxu0
      %v1134 = vadd.f32 0.0, %v1133
      %1135 = vmatmul.f32.gmra.mxu0 %v797
      %v1136 = vpop.f32.mrf.mxu0
      %v1137 = vadd.f32 0.0, %v1136
      %1138 = vmatmul.f32.gmra.mxu0 %v800
      %v1139 = vpop.f32.mrf.mxu0
      %v1140 = vadd.f32 0.0, %v1139
      %1141 = vmatmul.f32.gmra.mxu0 %v803
      %v1142 = vpop.f32.mrf.mxu0
      %v1143 = vadd.f32 0.0, %v1142
      %1144 = vmatmul.f32.gmra.mxu0 %v806
      %v1145 = vpop.f32.mrf.mxu0
      %v1146 = vadd.f32 0.0, %v1145
      %1147 = vmatmul.f32.gmra.mxu0 %v809
      %v1148 = vpop.f32.mrf.mxu0
      %v1149 = vadd.f32 0.0, %v1148
      %1150 = vmatmul.f32.gmra.mxu0 %v812
      %v1151 = vpop.f32.mrf.mxu0
      %v1152 = vadd.f32 0.0, %v1151
      %1153 = vmatmul.f32.gmra.mxu0 %v815
      %v1154 = vpop.f32.mrf.mxu0
      %v1155 = vadd.f32 0.0, %v1154
      %1156 = vmatmul.f32.gmra.mxu0 %v818
      %v1157 = vpop.f32.mrf.mxu0
      %v1158 = vadd.f32 0.0, %v1157
      %1159 = vdwg.mxu0
      %v1160 = vmul.f32 %v773, %v773
      %v1161 = vmul.f32 %v776, %v776
      %v1162 = vmul.f32 %v779, %v779
      %v1163 = vmul.f32 %v782, %v782
      %v1164 = vmul.f32 %v785, %v785
      %v1165 = vmul.f32 %v788, %v788
      %v1166 = vmul.f32 %v791, %v791
      %v1167 = vmul.f32 %v794, %v794
      %v1168 = vmul.f32 %v797, %v797
      %v1169 = vmul.f32 %v800, %v800
      %v1170 = vmul.f32 %v803, %v803
      %v1171 = vmul.f32 %v806, %v806
      %v1172 = vmul.f32 %v809, %v809
      %v1173 = vmul.f32 %v812, %v812
      %v1174 = vmul.f32 %v815, %v815
      %v1175 = vmul.f32 %v818, %v818
      %1176 = vadd.xlane.f32.xlu0 %v1160
      %v1177 = vpop.xlane.xlu0 %1176
      %1178 = vadd.xlane.f32.xlu0 %v1161
      %v1179 = vpop.xlane.xlu0 %1178
      %1180 = vadd.xlane.f32.xlu0 %v1162
      %v1181 = vpop.xlane.xlu0 %1180
      %1182 = vadd.xlane.f32.xlu0 %v1163
      %v1183 = vpop.xlane.xlu0 %1182
      %1184 = vadd.xlane.f32.xlu0 %v1164
      %v1185 = vpop.xlane.xlu0 %1184
      %1186 = vadd.xlane.f32.xlu0 %v1165
      %v1187 = vpop.xlane.xlu0 %1186
      %1188 = vadd.xlane.f32.xlu0 %v1166
      %v1189 = vpop.xlane.xlu0 %1188
      %1190 = vadd.xlane.f32.xlu0 %v1167
      %v1191 = vpop.xlane.xlu0 %1190
      %1192 = vadd.xlane.f32.xlu0 %v1168
      %v1193 = vpop.xlane.xlu0 %1192
      %1194 = vadd.xlane.f32.xlu0 %v1169
      %v1195 = vpop.xlane.xlu0 %1194
      %1196 = vadd.xlane.f32.xlu0 %v1170
      %v1197 = vpop.xlane.xlu0 %1196
      %1198 = vadd.xlane.f32.xlu0 %v1171
      %v1199 = vpop.xlane.xlu0 %1198
      %1200 = vadd.xlane.f32.xlu0 %v1172
      %v1201 = vpop.xlane.xlu0 %1200
      %1202 = vadd.xlane.f32.xlu0 %v1173
      %v1203 = vpop.xlane.xlu0 %1202
      %1204 = vadd.xlane.f32.xlu0 %v1174
      %v1205 = vpop.xlane.xlu0 %1204
      %1206 = vadd.xlane.f32.xlu0 %v1175
      %v1207 = vpop.xlane.xlu0 %1206
      %v1209 = vperm.slane %v1094, 0
      %v1211 = vadd.f32 %v1177, %v1209
      %v1212 = vadd.f32 %v1179, %v1209
      %v1213 = vadd.f32 %v1181, %v1209
      %v1214 = vadd.f32 %v1183, %v1209
      %v1215 = vadd.f32 %v1185, %v1209
      %v1216 = vadd.f32 %v1187, %v1209
      %v1217 = vadd.f32 %v1189, %v1209
      %v1218 = vadd.f32 %v1191, %v1209
      %v1219 = vadd.f32 %v1193, %v1209
      %v1220 = vadd.f32 %v1195, %v1209
      %v1221 = vadd.f32 %v1197, %v1209
      %v1222 = vadd.f32 %v1199, %v1209
      %v1223 = vadd.f32 %v1201, %v1209
      %v1224 = vadd.f32 %v1203, %v1209
      %v1225 = vadd.f32 %v1205, %v1209
      %v1226 = vadd.f32 %v1207, %v1209
      %v1227 = vmul.f32 %v1113, 2.0
      %v1228 = vmul.f32 %v1116, 2.0
      %v1229 = vmul.f32 %v1119, 2.0
      %v1230 = vmul.f32 %v1122, 2.0
      %v1231 = vmul.f32 %v1125, 2.0
      %v1232 = vmul.f32 %v1128, 2.0
      %v1233 = vmul.f32 %v1131, 2.0
      %v1234 = vmul.f32 %v1134, 2.0
      %v1235 = vmul.f32 %v1137, 2.0
      %v1236 = vmul.f32 %v1140, 2.0
      %v1237 = vmul.f32 %v1143, 2.0
      %v1238 = vmul.f32 %v1146, 2.0
      %v1239 = vmul.f32 %v1149, 2.0
      %v1240 = vmul.f32 %v1152, 2.0
      %v1241 = vmul.f32 %v1155, 2.0
      %v1242 = vmul.f32 %v1158, 2.0
      %v1243 = vsub.f32 %v1211, %v1227
      %v1244 = vsub.f32 %v1212, %v1228
      %v1245 = vsub.f32 %v1213, %v1229
      %v1246 = vsub.f32 %v1214, %v1230
      %v1247 = vsub.f32 %v1215, %v1231
      %v1248 = vsub.f32 %v1216, %v1232
      %v1249 = vsub.f32 %v1217, %v1233
      %v1250 = vsub.f32 %v1218, %v1234
      %v1251 = vsub.f32 %v1219, %v1235
      %v1252 = vsub.f32 %v1220, %v1236
      %v1253 = vsub.f32 %v1221, %v1237
      %v1254 = vsub.f32 %v1222, %v1238
      %v1255 = vsub.f32 %v1223, %v1239
      %v1256 = vsub.f32 %v1224, %v1240
      %v1257 = vsub.f32 %v1225, %v1241
      %v1258 = vsub.f32 %v1226, %v1242
      %v1259 = vmax.f32 %v1243, 0.0
      %v1260 = vmax.f32 %v1244, 0.0
      %v1261 = vmax.f32 %v1245, 0.0
      %v1262 = vmax.f32 %v1246, 0.0
      %v1263 = vmax.f32 %v1247, 0.0
      %v1264 = vmax.f32 %v1248, 0.0
      %v1265 = vmax.f32 %v1249, 0.0
      %v1266 = vmax.f32 %v1250, 0.0
      %v1267 = vmax.f32 %v1251, 0.0
      %v1268 = vmax.f32 %v1252, 0.0
      %v1269 = vmax.f32 %v1253, 0.0
      %v1270 = vmax.f32 %v1254, 0.0
      %v1271 = vmax.f32 %v1255, 0.0
      %v1272 = vmax.f32 %v1256, 0.0
      %v1273 = vmax.f32 %v1257, 0.0
      %v1274 = vmax.f32 %v1258, 0.0
      %v1275 = vadd.f32 %v1259, 1.0
      %v1276 = vadd.f32 %v1260, 1.0
      %v1277 = vadd.f32 %v1261, 1.0
      %v1278 = vadd.f32 %v1262, 1.0
      %v1279 = vadd.f32 %v1263, 1.0
      %v1280 = vadd.f32 %v1264, 1.0
      %v1281 = vadd.f32 %v1265, 1.0
      %v1282 = vadd.f32 %v1266, 1.0
      %v1283 = vadd.f32 %v1267, 1.0
      %v1284 = vadd.f32 %v1268, 1.0
      %v1285 = vadd.f32 %v1269, 1.0
      %v1286 = vadd.f32 %v1270, 1.0
      %v1287 = vadd.f32 %v1271, 1.0
      %v1288 = vadd.f32 %v1272, 1.0
      %v1289 = vadd.f32 %v1273, 1.0
      %v1290 = vadd.f32 %v1274, 1.0
      %v1291 = vrcp.pop %v1275
      %v1292 = vrcp.pop %v1276
      %v1293 = vrcp.pop %v1277
      %v1294 = vrcp.pop %v1278
      %v1295 = vrcp.pop %v1279
      %v1296 = vrcp.pop %v1280
      %v1297 = vrcp.pop %v1281
      %v1298 = vrcp.pop %v1282
      %v1299 = vrcp.pop %v1283
      %v1300 = vrcp.pop %v1284
      %v1301 = vrcp.pop %v1285
      %v1302 = vrcp.pop %v1286
      %v1303 = vrcp.pop %v1287
      %v1304 = vrcp.pop %v1288
      %v1305 = vrcp.pop %v1289
      %v1306 = vrcp.pop %v1290
      %v1307 = vlaneseq
      %v1308 = vand.u32 %v1307, 127
      %vm1309 = vcmp.lt.s32.totalorder %v1308, 4
      %v1310 = vsel %vm1309, %v1291, 0.0
      %v1311 = vsel %vm1309, %v1292, 0.0
      %v1312 = vsel %vm1309, %v1293, 0.0
      %v1313 = vsel %vm1309, %v1294, 0.0
      %v1314 = vsel %vm1309, %v1295, 0.0
      %v1315 = vsel %vm1309, %v1296, 0.0
      %v1316 = vsel %vm1309, %v1297, 0.0
      %v1317 = vsel %vm1309, %v1298, 0.0
      %v1318 = vsel %vm1309, %v1299, 0.0
      %v1319 = vsel %vm1309, %v1300, 0.0
      %v1320 = vsel %vm1309, %v1301, 0.0
      %v1321 = vsel %vm1309, %v1302, 0.0
      %v1322 = vsel %vm1309, %v1303, 0.0
      %v1323 = vsel %vm1309, %v1304, 0.0
      %v1324 = vsel %vm1309, %v1305, 0.0
      %v1325 = vsel %vm1309, %v1306, 0.0
      %1326 = vadd.xlane.f32.xlu0 %v1310
      %v1327 = vpop.xlane.xlu0 %1326
      %1328 = vadd.xlane.f32.xlu0 %v1311
      %v1329 = vpop.xlane.xlu0 %1328
      %1330 = vadd.xlane.f32.xlu0 %v1312
      %v1331 = vpop.xlane.xlu0 %1330
      %1332 = vadd.xlane.f32.xlu0 %v1313
      %v1333 = vpop.xlane.xlu0 %1332
      %1334 = vadd.xlane.f32.xlu0 %v1314
      %v1335 = vpop.xlane.xlu0 %1334
      %1336 = vadd.xlane.f32.xlu0 %v1315
      %v1337 = vpop.xlane.xlu0 %1336
      %1338 = vadd.xlane.f32.xlu0 %v1316
      %v1339 = vpop.xlane.xlu0 %1338
      %1340 = vadd.xlane.f32.xlu0 %v1317
      %v1341 = vpop.xlane.xlu0 %1340
      %1342 = vadd.xlane.f32.xlu0 %v1318
      %v1343 = vpop.xlane.xlu0 %1342
      %1344 = vadd.xlane.f32.xlu0 %v1319
      %v1345 = vpop.xlane.xlu0 %1344
      %1346 = vadd.xlane.f32.xlu0 %v1320
      %v1347 = vpop.xlane.xlu0 %1346
      %1348 = vadd.xlane.f32.xlu0 %v1321
      %v1349 = vpop.xlane.xlu0 %1348
      %1350 = vadd.xlane.f32.xlu0 %v1322
      %v1351 = vpop.xlane.xlu0 %1350
      %1352 = vadd.xlane.f32.xlu0 %v1323
      %v1353 = vpop.xlane.xlu0 %1352
      %1354 = vadd.xlane.f32.xlu0 %v1324
      %v1355 = vpop.xlane.xlu0 %1354
      %1356 = vadd.xlane.f32.xlu0 %v1325
      %v1357 = vpop.xlane.xlu0 %1356
      %v1358 = vrcp.pop %v1327
      %v1359 = vmul.f32 %v1327, %v1358
      %v1360 = vsub.f32 1.0, %v1359
      %v1361 = vmul.f32 %v1358, %v1360
      %v1362 = vadd.f32 %v1358, %v1361
      %vm1363 = vweird.f32 %v1327
      %vm1364 = vweird.f32 %v1358
      %vm1365 = vmor %vm1363, %vm1364
      %v1366 = vsel %vm1365, %v1358, %v1362
      %v1367 = vand.u32 2147483647, %v1327
      %vm1368 = vcmp.eq.f32.partialorder %v1367, 8.507059e+37
      %v1369 = vand.u32 %v1327, 2147483648
      %v1370 = vor.u32 1.1754944e-38, %v1369
      %v1371 = vsel %vm1368, %v1370, %v1366
      %v1372 = vmul.f32 %v1310, %v1371
      %v1373 = vrcp.pop %v1329
      %v1374 = vmul.f32 %v1329, %v1373
      %v1375 = vsub.f32 1.0, %v1374
      %v1376 = vmul.f32 %v1373, %v1375
      %v1377 = vadd.f32 %v1373, %v1376
      %vm1378 = vweird.f32 %v1329
      %vm1379 = vweird.f32 %v1373
      %vm1380 = vmor %vm1378, %vm1379
      %v1381 = vsel %vm1380, %v1373, %v1377
      %v1382 = vand.u32 2147483647, %v1329
      %vm1383 = vcmp.eq.f32.partialorder %v1382, 8.507059e+37
      %v1384 = vand.u32 %v1329, 2147483648
      %v1385 = vor.u32 1.1754944e-38, %v1384
      %v1386 = vsel %vm1383, %v1385, %v1381
      %v1387 = vmul.f32 %v1311, %v1386
      %v1388 = vrcp.pop %v1331
      %v1389 = vmul.f32 %v1331, %v1388
      %v1390 = vsub.f32 1.0, %v1389
      %v1391 = vmul.f32 %v1388, %v1390
      %v1392 = vadd.f32 %v1388, %v1391
      %vm1393 = vweird.f32 %v1331
      %vm1394 = vweird.f32 %v1388
      %vm1395 = vmor %vm1393, %vm1394
      %v1396 = vsel %vm1395, %v1388, %v1392
      %v1397 = vand.u32 2147483647, %v1331
      %vm1398 = vcmp.eq.f32.partialorder %v1397, 8.507059e+37
      %v1399 = vand.u32 %v1331, 2147483648
      %v1400 = vor.u32 1.1754944e-38, %v1399
      %v1401 = vsel %vm1398, %v1400, %v1396
      %v1402 = vmul.f32 %v1312, %v1401
      %v1403 = vrcp.pop %v1333
      %v1404 = vmul.f32 %v1333, %v1403
      %v1405 = vsub.f32 1.0, %v1404
      %v1406 = vmul.f32 %v1403, %v1405
      %v1407 = vadd.f32 %v1403, %v1406
      %vm1408 = vweird.f32 %v1333
      %vm1409 = vweird.f32 %v1403
      %vm1410 = vmor %vm1408, %vm1409
      %v1411 = vsel %vm1410, %v1403, %v1407
      %v1412 = vand.u32 2147483647, %v1333
      %vm1413 = vcmp.eq.f32.partialorder %v1412, 8.507059e+37
      %v1414 = vand.u32 %v1333, 2147483648
      %v1415 = vor.u32 1.1754944e-38, %v1414
      %v1416 = vsel %vm1413, %v1415, %v1411
      %v1417 = vmul.f32 %v1313, %v1416
      %v1418 = vrcp.pop %v1335
      %v1419 = vmul.f32 %v1335, %v1418
      %v1420 = vsub.f32 1.0, %v1419
      %v1421 = vmul.f32 %v1418, %v1420
      %v1422 = vadd.f32 %v1418, %v1421
      %vm1423 = vweird.f32 %v1335
      %vm1424 = vweird.f32 %v1418
      %vm1425 = vmor %vm1423, %vm1424
      %v1426 = vsel %vm1425, %v1418, %v1422
      %v1427 = vand.u32 2147483647, %v1335
      %vm1428 = vcmp.eq.f32.partialorder %v1427, 8.507059e+37
      %v1429 = vand.u32 %v1335, 2147483648
      %v1430 = vor.u32 1.1754944e-38, %v1429
      %v1431 = vsel %vm1428, %v1430, %v1426
      %v1432 = vmul.f32 %v1314, %v1431
      %v1433 = vrcp.pop %v1337
      %v1434 = vmul.f32 %v1337, %v1433
      %v1435 = vsub.f32 1.0, %v1434
      %v1436 = vmul.f32 %v1433, %v1435
      %v1437 = vadd.f32 %v1433, %v1436
      %vm1438 = vweird.f32 %v1337
      %vm1439 = vweird.f32 %v1433
      %vm1440 = vmor %vm1438, %vm1439
      %v1441 = vsel %vm1440, %v1433, %v1437
      %v1442 = vand.u32 2147483647, %v1337
      %vm1443 = vcmp.eq.f32.partialorder %v1442, 8.507059e+37
      %v1444 = vand.u32 %v1337, 2147483648
      %v1445 = vor.u32 1.1754944e-38, %v1444
      %v1446 = vsel %vm1443, %v1445, %v1441
      %v1447 = vmul.f32 %v1315, %v1446
      %v1448 = vrcp.pop %v1339
      %v1449 = vmul.f32 %v1339, %v1448
      %v1450 = vsub.f32 1.0, %v1449
      %v1451 = vmul.f32 %v1448, %v1450
      %v1452 = vadd.f32 %v1448, %v1451
      %vm1453 = vweird.f32 %v1339
      %vm1454 = vweird.f32 %v1448
      %vm1455 = vmor %vm1453, %vm1454
      %v1456 = vsel %vm1455, %v1448, %v1452
      %v1457 = vand.u32 2147483647, %v1339
      %vm1458 = vcmp.eq.f32.partialorder %v1457, 8.507059e+37
      %v1459 = vand.u32 %v1339, 2147483648
      %v1460 = vor.u32 1.1754944e-38, %v1459
      %v1461 = vsel %vm1458, %v1460, %v1456
      %v1462 = vmul.f32 %v1316, %v1461
      %v1463 = vrcp.pop %v1341
      %v1464 = vmul.f32 %v1341, %v1463
      %v1465 = vsub.f32 1.0, %v1464
      %v1466 = vmul.f32 %v1463, %v1465
      %v1467 = vadd.f32 %v1463, %v1466
      %vm1468 = vweird.f32 %v1341
      %vm1469 = vweird.f32 %v1463
      %vm1470 = vmor %vm1468, %vm1469
      %v1471 = vsel %vm1470, %v1463, %v1467
      %v1472 = vand.u32 2147483647, %v1341
      %vm1473 = vcmp.eq.f32.partialorder %v1472, 8.507059e+37
      %v1474 = vand.u32 %v1341, 2147483648
      %v1475 = vor.u32 1.1754944e-38, %v1474
      %v1476 = vsel %vm1473, %v1475, %v1471
      %v1477 = vmul.f32 %v1317, %v1476
      %v1478 = vrcp.pop %v1343
      %v1479 = vmul.f32 %v1343, %v1478
      %v1480 = vsub.f32 1.0, %v1479
      %v1481 = vmul.f32 %v1478, %v1480
      %v1482 = vadd.f32 %v1478, %v1481
      %vm1483 = vweird.f32 %v1343
      %vm1484 = vweird.f32 %v1478
      %vm1485 = vmor %vm1483, %vm1484
      %v1486 = vsel %vm1485, %v1478, %v1482
      %v1487 = vand.u32 2147483647, %v1343
      %vm1488 = vcmp.eq.f32.partialorder %v1487, 8.507059e+37
      %v1489 = vand.u32 %v1343, 2147483648
      %v1490 = vor.u32 1.1754944e-38, %v1489
      %v1491 = vsel %vm1488, %v1490, %v1486
      %v1492 = vmul.f32 %v1318, %v1491
      %v1493 = vrcp.pop %v1345
      %v1494 = vmul.f32 %v1345, %v1493
      %v1495 = vsub.f32 1.0, %v1494
      %v1496 = vmul.f32 %v1493, %v1495
      %v1497 = vadd.f32 %v1493, %v1496
      %vm1498 = vweird.f32 %v1345
      %vm1499 = vweird.f32 %v1493
      %vm1500 = vmor %vm1498, %vm1499
      %v1501 = vsel %vm1500, %v1493, %v1497
      %v1502 = vand.u32 2147483647, %v1345
      %vm1503 = vcmp.eq.f32.partialorder %v1502, 8.507059e+37
      %v1504 = vand.u32 %v1345, 2147483648
      %v1505 = vor.u32 1.1754944e-38, %v1504
      %v1506 = vsel %vm1503, %v1505, %v1501
      %v1507 = vmul.f32 %v1319, %v1506
      %v1508 = vrcp.pop %v1347
      %v1509 = vmul.f32 %v1347, %v1508
      %v1510 = vsub.f32 1.0, %v1509
      %v1511 = vmul.f32 %v1508, %v1510
      %v1512 = vadd.f32 %v1508, %v1511
      %vm1513 = vweird.f32 %v1347
      %vm1514 = vweird.f32 %v1508
      %vm1515 = vmor %vm1513, %vm1514
      %v1516 = vsel %vm1515, %v1508, %v1512
      %v1517 = vand.u32 2147483647, %v1347
      %vm1518 = vcmp.eq.f32.partialorder %v1517, 8.507059e+37
      %v1519 = vand.u32 %v1347, 2147483648
      %v1520 = vor.u32 1.1754944e-38, %v1519
      %v1521 = vsel %vm1518, %v1520, %v1516
      %v1522 = vmul.f32 %v1320, %v1521
      %v1523 = vrcp.pop %v1349
      %v1524 = vmul.f32 %v1349, %v1523
      %v1525 = vsub.f32 1.0, %v1524
      %v1526 = vmul.f32 %v1523, %v1525
      %v1527 = vadd.f32 %v1523, %v1526
      %vm1528 = vweird.f32 %v1349
      %vm1529 = vweird.f32 %v1523
      %vm1530 = vmor %vm1528, %vm1529
      %v1531 = vsel %vm1530, %v1523, %v1527
      %v1532 = vand.u32 2147483647, %v1349
      %vm1533 = vcmp.eq.f32.partialorder %v1532, 8.507059e+37
      %v1534 = vand.u32 %v1349, 2147483648
      %v1535 = vor.u32 1.1754944e-38, %v1534
      %v1536 = vsel %vm1533, %v1535, %v1531
      %v1537 = vmul.f32 %v1321, %v1536
      %v1538 = vrcp.pop %v1351
      %v1539 = vmul.f32 %v1351, %v1538
      %v1540 = vsub.f32 1.0, %v1539
      %v1541 = vmul.f32 %v1538, %v1540
      %v1542 = vadd.f32 %v1538, %v1541
      %vm1543 = vweird.f32 %v1351
      %vm1544 = vweird.f32 %v1538
      %vm1545 = vmor %vm1543, %vm1544
      %v1546 = vsel %vm1545, %v1538, %v1542
      %v1547 = vand.u32 2147483647, %v1351
      %vm1548 = vcmp.eq.f32.partialorder %v1547, 8.507059e+37
      %v1549 = vand.u32 %v1351, 2147483648
      %v1550 = vor.u32 1.1754944e-38, %v1549
      %v1551 = vsel %vm1548, %v1550, %v1546
      %v1552 = vmul.f32 %v1322, %v1551
      %v1553 = vrcp.pop %v1353
      %v1554 = vmul.f32 %v1353, %v1553
      %v1555 = vsub.f32 1.0, %v1554
      %v1556 = vmul.f32 %v1553, %v1555
      %v1557 = vadd.f32 %v1553, %v1556
      %vm1558 = vweird.f32 %v1353
      %vm1559 = vweird.f32 %v1553
      %vm1560 = vmor %vm1558, %vm1559
      %v1561 = vsel %vm1560, %v1553, %v1557
      %v1562 = vand.u32 2147483647, %v1353
      %vm1563 = vcmp.eq.f32.partialorder %v1562, 8.507059e+37
      %v1564 = vand.u32 %v1353, 2147483648
      %v1565 = vor.u32 1.1754944e-38, %v1564
      %v1566 = vsel %vm1563, %v1565, %v1561
      %v1567 = vmul.f32 %v1323, %v1566
      %v1568 = vrcp.pop %v1355
      %v1569 = vmul.f32 %v1355, %v1568
      %v1570 = vsub.f32 1.0, %v1569
      %v1571 = vmul.f32 %v1568, %v1570
      %v1572 = vadd.f32 %v1568, %v1571
      %vm1573 = vweird.f32 %v1355
      %vm1574 = vweird.f32 %v1568
      %vm1575 = vmor %vm1573, %vm1574
      %v1576 = vsel %vm1575, %v1568, %v1572
      %v1577 = vand.u32 2147483647, %v1355
      %vm1578 = vcmp.eq.f32.partialorder %v1577, 8.507059e+37
      %v1579 = vand.u32 %v1355, 2147483648
      %v1580 = vor.u32 1.1754944e-38, %v1579
      %v1581 = vsel %vm1578, %v1580, %v1576
      %v1582 = vmul.f32 %v1324, %v1581
      %v1583 = vrcp.pop %v1357
      %v1584 = vmul.f32 %v1357, %v1583
      %v1585 = vsub.f32 1.0, %v1584
      %v1586 = vmul.f32 %v1583, %v1585
      %v1587 = vadd.f32 %v1583, %v1586
      %vm1588 = vweird.f32 %v1357
      %vm1589 = vweird.f32 %v1583
      %vm1590 = vmor %vm1588, %vm1589
      %v1591 = vsel %vm1590, %v1583, %v1587
      %v1592 = vand.u32 2147483647, %v1357
      %vm1593 = vcmp.eq.f32.partialorder %v1592, 8.507059e+37
      %v1594 = vand.u32 %v1357, 2147483648
      %v1595 = vor.u32 1.1754944e-38, %v1594
      %v1596 = vsel %vm1593, %v1595, %v1591
      %v1597 = vmul.f32 %v1325, %v1596
      %1598 = vst [vmem:[%s530] sm:$0xff] %v1372
      %1599 = vst [vmem:[%s530 + $0x8] sm:$0xff] %v1387
      %1600 = vst [vmem:[%s530 + $0x10] sm:$0xff] %v1402
      %1601 = vst [vmem:[%s530 + $0x18] sm:$0xff] %v1417
      %1602 = vst [vmem:[%s530 + $0x20] sm:$0xff] %v1432
      %1603 = vst [vmem:[%s530 + $0x28] sm:$0xff] %v1447
      %1604 = vst [vmem:[%s530 + $0x30] sm:$0xff] %v1462
      %1605 = vst [vmem:[%s530 + $0x38] sm:$0xff] %v1477
      %1606 = vst [vmem:[%s530 + $0x40] sm:$0xff] %v1492
      %1607 = vst [vmem:[%s530 + $0x48] sm:$0xff] %v1507
      %1608 = vst [vmem:[%s530 + $0x50] sm:$0xff] %v1522
      %1609 = vst [vmem:[%s530 + $0x58] sm:$0xff] %v1537
      %1610 = vst [vmem:[%s530 + $0x60] sm:$0xff] %v1552
      %1611 = vst [vmem:[%s530 + $0x68] sm:$0xff] %v1567
      %1612 = vst [vmem:[%s530 + $0x70] sm:$0xff] %v1582
      %1613 = vst [vmem:[%s530 + $0x78] sm:$0xff] %v1597
      %v1614 = vld [vmem:[%s11] sm:$0xff]
      %v1615 = vld [vmem:[%s11 + $0x8] sm:$0xff]
      %v1616 = vld [vmem:[%s11 + $0x10] sm:$0xff]
      %v1617 = vld [vmem:[%s11 + $0x18] sm:$0xff]
      %v1618 = vld [vmem:[%s11 + $0x20] sm:$0xff]
      %v1619 = vld [vmem:[%s11 + $0x28] sm:$0xff]
      %1620 = vmatpush.msra.mxu0 0.0
      %1621 = vmatpush.msra.mxu0 0.0
      %1622 = vmatpush.msra.mxu0 0.0
      %1623 = vmatpush.msra.mxu0 0.0
      %1624 = vmatpush.msra.mxu0 0.0
      %1625 = vmatpush.msra.mxu0 0.0
      %1626 = vmatpush.msra.mxu0 0.0
      %1627 = vmatpush.msra.mxu0 0.0
      %1628 = vmatpush.msra.mxu0 0.0
      %1629 = vmatpush.msra.mxu0 0.0
      %1630 = vmatpush.msra.mxu0 %v1619
      %1631 = vmatpush.msra.mxu0 %v1618
      %1632 = vmatpush.msra.mxu0 %v1617
      %1633 = vmatpush.msra.mxu0 %v1616
      %1634 = vmatpush.msra.mxu0 %v1615
      %1635 = vmatpush.msra.mxu0 %v1614
      %1636 = vmatmul.f32.gmra.mxu0 %v566
      %v1637 = vpop.f32.mrf.mxu0
      %v1638 = vadd.f32 0.0, %v1637
      %1639 = vmatmul.f32.gmra.mxu0 %v569
      %v1640 = vpop.f32.mrf.mxu0
      %v1641 = vadd.f32 0.0, %v1640
      %1642 = vmatmul.f32.gmra.mxu0 %v572
      %v1643 = vpop.f32.mrf.mxu0
      %v1644 = vadd.f32 0.0, %v1643
      %1645 = vmatmul.f32.gmra.mxu0 %v575
      %v1646 = vpop.f32.mrf.mxu0
      %v1647 = vadd.f32 0.0, %v1646
      %1648 = vmatmul.f32.gmra.mxu0 %v578
      %v1649 = vpop.f32.mrf.mxu0
      %v1650 = vadd.f32 0.0, %v1649
      %1651 = vmatmul.f32.gmra.mxu0 %v581
      %v1652 = vpop.f32.mrf.mxu0
      %v1653 = vadd.f32 0.0, %v1652
      %1654 = vmatmul.f32.gmra.mxu0 %v584
      %v1655 = vpop.f32.mrf.mxu0
      %v1656 = vadd.f32 0.0, %v1655
      %1657 = vmatmul.f32.gmra.mxu0 %v587
      %v1658 = vpop.f32.mrf.mxu0
      %v1659 = vadd.f32 0.0, %v1658
      %1660 = vmatmul.f32.gmra.mxu0 %v590
      %v1661 = vpop.f32.mrf.mxu0
      %v1662 = vadd.f32 0.0, %v1661
      %1663 = vmatmul.f32.gmra.mxu0 %v593
      %v1664 = vpop.f32.mrf.mxu0
      %v1665 = vadd.f32 0.0, %v1664
      %1666 = vmatmul.f32.gmra.mxu0 %v596
      %v1667 = vpop.f32.mrf.mxu0
      %v1668 = vadd.f32 0.0, %v1667
      %1669 = vmatmul.f32.gmra.mxu0 %v599
      %v1670 = vpop.f32.mrf.mxu0
      %v1671 = vadd.f32 0.0, %v1670
      %1672 = vmatmul.f32.gmra.mxu0 %v602
      %v1673 = vpop.f32.mrf.mxu0
      %v1674 = vadd.f32 0.0, %v1673
      %1675 = vmatmul.f32.gmra.mxu0 %v605
      %v1676 = vpop.f32.mrf.mxu0
      %v1677 = vadd.f32 0.0, %v1676
      %1678 = vmatmul.f32.gmra.mxu0 %v608
      %v1679 = vpop.f32.mrf.mxu0
      %v1680 = vadd.f32 0.0, %v1679
      %1681 = vmatmul.f32.gmra.mxu0 %v611
      %v1682 = vpop.f32.mrf.mxu0
      %v1683 = vadd.f32 0.0, %v1682
      %1684 = vdwg.mxu0
      %v1685 = vpack.c.bf16 %v1638, %v1638
      %v1686 = vpack.c.bf16 %v1641, %v1641
      %v1687 = vpack.c.bf16 %v1644, %v1644
      %v1688 = vpack.c.bf16 %v1647, %v1647
      %v1689 = vpack.c.bf16 %v1650, %v1650
      %v1690 = vpack.c.bf16 %v1653, %v1653
      %v1691 = vpack.c.bf16 %v1656, %v1656
      %v1692 = vpack.c.bf16 %v1659, %v1659
      %v1693 = vpack.c.bf16 %v1662, %v1662
      %v1694 = vpack.c.bf16 %v1665, %v1665
      %v1695 = vpack.c.bf16 %v1668, %v1668
      %v1696 = vpack.c.bf16 %v1671, %v1671
      %v1697 = vpack.c.bf16 %v1674, %v1674
      %v1698 = vpack.c.bf16 %v1677, %v1677
      %v1699 = vpack.c.bf16 %v1680, %v1680
      %v1700 = vpack.c.bf16 %v1683, %v1683
      %1701 = vst [vmem:[%s536] sm:$0xf] %v1685
      %1702 = vst [vmem:[%s536 + $0x4] sm:$0xf] %v1686
      %1703 = vst [vmem:[%s536 + $0x8] sm:$0xf] %v1687
      %1704 = vst [vmem:[%s536 + $0xc] sm:$0xf] %v1688
      %1705 = vst [vmem:[%s536 + $0x10] sm:$0xf] %v1689
      %1706 = vst [vmem:[%s536 + $0x14] sm:$0xf] %v1690
      %1707 = vst [vmem:[%s536 + $0x18] sm:$0xf] %v1691
      %1708 = vst [vmem:[%s536 + $0x1c] sm:$0xf] %v1692
      %1709 = vst [vmem:[%s536 + $0x20] sm:$0xf] %v1693
      %1710 = vst [vmem:[%s536 + $0x24] sm:$0xf] %v1694
      %1711 = vst [vmem:[%s536 + $0x28] sm:$0xf] %v1695
      %1712 = vst [vmem:[%s536 + $0x2c] sm:$0xf] %v1696
      %1713 = vst [vmem:[%s536 + $0x30] sm:$0xf] %v1697
      %1714 = vst [vmem:[%s536 + $0x34] sm:$0xf] %v1698
      %1715 = vst [vmem:[%s536 + $0x38] sm:$0xf] %v1699
      %1716 = vst [vmem:[%s536 + $0x3c] sm:$0xf] %v1700
      %s1717 = smul.u32 16, %s27
      %p1718 = scmp.lt.s32.totalorder %s1717, 47
      %s1719 = scalar_select %p1718, %s1717, 47
      %s1720 = smul.addr %s1719, 8
      %s1721 = scalar_lea.vmem %s12, %s1720
      %s1722 = smul.u32 16, %s27
      %p1723 = scmp.lt.s32.totalorder %s1722, 47
      %s1724 = scalar_select %p1723, %s1722, 47
      %s1725 = smul.addr %s1724, 8
      %s1726 = scalar_lea.vmem %s13, %s1725
      %s1727 = smul.u32 16, %s27
      %p1728 = scmp.lt.s32.totalorder %s1727, 47
      %s1729 = scalar_select %p1728, %s1727, 47
      %s1730 = smul.addr %s1729, 8
      %s1731 = scalar_lea.vmem %s14, %s1730
      %s1732 = smul.u32 16, %s27
      %p1733 = scmp.lt.s32.totalorder %s1732, 47
      %s1734 = scalar_select %p1733, %s1732, 47
      %s1735 = smul.addr %s1734, 4
      %s1736 = scalar_lea.vmem %s15, %s1735
      // Predicated region
      $region69: #{dcp_dec_forward.4} parent=67 // pred_check
        %p1737 = pneg %p302
      $region70: #{dcp_dec_forward.4} parent=67 // pred_check_branch
        %1739 = sbr.rel (%p1737) target = $region72
      $region71: #{dcp_dec_forward.4} parent=67 // pred_region
        %s1740 = smul.u32 16, %s27
      $region72: #{dcp_dec_forward.4} parent=67 // pred_fallthru
        _
      // Predicated region
      $region73: #{dcp_dec_forward.4} parent=67 // pred_check
        %p1741 = pneg %p328
      $region74: #{dcp_dec_forward.4} parent=67 // pred_check_branch
        %1743 = sbr.rel (%p1741) target = $region76
      $region75: #{dcp_dec_forward.4} parent=67 // pred_region
        %s1744 = smul.u32 16, %s27
      $region76: #{dcp_dec_forward.4} parent=67 // pred_fallthru
        _
      // Predicated region
      $region77: #{dcp_dec_forward.4} parent=67 // pred_check
        %p1745 = pneg %p354
      $region78: #{dcp_dec_forward.4} parent=67 // pred_check_branch
        %1747 = sbr.rel (%p1745) target = $region80
      $region79: #{dcp_dec_forward.4} parent=67 // pred_region
        %s1748 = smul.u32 16, %s27
      $region80: #{dcp_dec_forward.4} parent=67 // pred_fallthru
        _
      // Predicated region
      $region81: #{dcp_dec_forward.4} parent=67 // pred_check
        %p1749 = pneg %p380
      $region82: #{dcp_dec_forward.4} parent=67 // pred_check_branch
        %1751 = sbr.rel (%p1749) target = $region84
      $region83: #{dcp_dec_forward.4} parent=67 // pred_region
        %s1752 = smul.u32 16, %s27
      $region84: #{dcp_dec_forward.4} parent=67 // pred_fallthru
        _
    $region68: #{dcp_dec_forward.4} parent=5 // pred_fallthru
      _
    %p1753 = scmp.le.s32.totalorder 2, %s22
    // Predicated region
    $region85: #{dcp_dec_forward.4} parent=5 // pred_check
      %p1754 = pneg %p1753
    $region86: #{dcp_dec_forward.4} parent=5 // pred_check_branch
      %1756 = sbr.rel (%p1754) target = $region88
    $region87: #{dcp_dec_forward.4} parent=5 // pred_region
      %s1757 = ssub.s32 %s22, 2
      // Predicated region
      $region89: #{dcp_dec_forward.4} parent=87 // pred_check
        %p1758 = pneg %p308
      $region90: #{dcp_dec_forward.4} parent=87 // pred_check_branch
        %1760 = sbr.rel (%p1758) target = $region92
      $region91: #{dcp_dec_forward.4} parent=87 // pred_region
        %s1761 = smul.u32 16, %s28
        %p1762 = scmp.lt.s32.totalorder %s1761, 47
        %s1763 = scalar_select %p1762, %s1761, 47
        %s1764 = smul.addr %s1763, 8
        %s1765 = scalar_lea.vmem %s12, %s1764
      $region92: #{dcp_dec_forward.4} parent=87 // pred_fallthru
        _
      // Predicated region
      $region93: #{dcp_dec_forward.4} parent=87 // pred_check
        %p1766 = pneg %p334
      $region94: #{dcp_dec_forward.4} parent=87 // pred_check_branch
        %1768 = sbr.rel (%p1766) target = $region96
      $region95: #{dcp_dec_forward.4} parent=87 // pred_region
        %s1769 = smul.u32 16, %s28
        %p1770 = scmp.lt.s32.totalorder %s1769, 47
        %s1771 = scalar_select %p1770, %s1769, 47
        %s1772 = smul.addr %s1771, 8
        %s1773 = scalar_lea.vmem %s13, %s1772
      $region96: #{dcp_dec_forward.4} parent=87 // pred_fallthru
        _
      // Predicated region
      $region97: #{dcp_dec_forward.4} parent=87 // pred_check
        %p1774 = pneg %p360
      $region98: #{dcp_dec_forward.4} parent=87 // pred_check_branch
        %1776 = sbr.rel (%p1774) target = $region100
      $region99: #{dcp_dec_forward.4} parent=87 // pred_region
        %s1777 = smul.u32 16, %s28
        %p1778 = scmp.lt.s32.totalorder %s1777, 47
        %s1779 = scalar_select %p1778, %s1777, 47
        %s1780 = smul.addr %s1779, 8
        %s1781 = scalar_lea.vmem %s14, %s1780
      $region100: #{dcp_dec_forward.4} parent=87 // pred_fallthru
        _
      // Predicated region
      $region101: #{dcp_dec_forward.4} parent=87 // pred_check
        %p1782 = pneg %p386
      $region102: #{dcp_dec_forward.4} parent=87 // pred_check_branch
        %1784 = sbr.rel (%p1782) target = $region104
      $region103: #{dcp_dec_forward.4} parent=87 // pred_region
        %s1785 = smul.u32 16, %s28
        %p1786 = scmp.lt.s32.totalorder %s1785, 47
        %s1787 = scalar_select %p1786, %s1785, 47
        %s1788 = smul.addr %s1787, 4
        %s1789 = scalar_lea.vmem %s15, %s1788
      $region104: #{dcp_dec_forward.4} parent=87 // pred_fallthru
        _
    $region88: #{dcp_dec_forward.4} parent=5 // pred_fallthru
      _
  $region6: #{dcp_dec_forward.4} parent=0 // loop_footer
    %s26 = sadd.s32 1, %s22
  $region7: #{dcp_dec_forward.4} parent=0 // loop_footer_branch
    %21 = sbr.rel target = $region3
  $region8: #{dcp_dec_forward.4} parent=0 // loop_exit
    _

// kernel: dcp_dec_forward.7
$region0: #{dcp_dec_forward.7}
  #allocation0 [shape = 'u32[]', space=smem, size = 0x4, offset = 0x4, fixed_abs, tag = 'smem constant byte address 0x4 - core index']
  #allocation1 [shape = 'u32[72,128]{1,0:T(1,128)}', space=vmem, size = 0x9000, scoped, tag = 'internal scratch']
  %s0 = inlined_call_operand.vmem [shape: f32[384,128], index: 0, kind: input, shape index: {}, may-alias: {0,1}]
  %s1 = inlined_call_operand.vmem [shape: f32[384,128], index: 1, kind: input, shape index: {}, may-alias: {0,1}]
  %s2 = inlined_call_operand.vmem [shape: f32[384,384], index: 2, kind: output, shape index: {}]
  %s3 = sld [smem:[#allocation0]]
  $region75: #{dcp_dec_forward.7} parent=0
    _
  %s5 = ssub.s32 1, %s3
  %s6 = scalar_select 0, %s5, %s3
  $region1: #{dcp_dec_forward.7} parent=0
    #allocation2 [shape = 'u8[131072]{0}', space=vmem, size = 0x20000, scoped, tag = 'output window, operand 0']
    loop: start=0, step=1, limit=11
    $region2: #{dcp_dec_forward.7} parent=1 // loop_pre_header
      _
    $region3: #{dcp_dec_forward.7} parent=1 // loop_header
      %s8 = sphi 0, %s12
      %p9 = scmp.ge.s32.totalorder %s8, 11
      %s15 = sphi 0, %s27
      %s16 = sphi 0, %s23
      %s17 = sphi 0, %s15
      %s18 = sphi 0, %s16
      %s19 = sphi 0, %s17
      %s20 = sphi 0, %s18
      %s30 = sphi 0, %s32
      %s33 = sphi 0, %s30
      %s34 = sphi 0, %s33
      %s50 = sphi 0, %s34
      %s56 = sphi 0, %s58
      %s59 = sphi 0, %s56
      %s60 = sphi 0, %s59
      %s76 = sphi 0, %s60
      %s84 = sphi 0, %s86
      %s87 = sphi 0, %s84
      %s88 = sphi 0, %s87
      %s104 = sphi 0, %s88
    $region4: #{dcp_dec_forward.7} parent=1 // loop_header_branch
      %11 = sbr.rel (%p9) target = $region8
    $region5: #{dcp_dec_forward.7} parent=1 // loop_body
      %s13 = ssub.s32 %s8, 1
      %s14 = ssub.s32 %s8, 2
      %s21 = sadd.s32 1, %s16
      %p22 = scmp.ge.s32.totalorder %s21, 3
      %s23 = scalar_select %p22, 0, %s21
      %s24 = sadd.s32 1, %s15
      %s25 = scalar_select %p22, %s24, %s15
      %p26 = scmp.ge.s32.totalorder %s25, 3
      %s27 = scalar_select %p26, 0, %s25
      %s28 = ssub.s32 %s15, %s27
      %p29 = scmp.eq.s32.totalorder %s28, 0
      %s31 = sadd.s32 %s30, 1
      %s32 = scalar_select %p29, %s30, %s31
      %p35 = pneg %p29
      %p36 = scmp.eq.s32.totalorder %s8, 8
      %p37 = por %p35, %p36
      %p38 = scmp.ne.s32.totalorder %s30, %s33
      %p39 = scmp.eq.s32.totalorder %s8, 0
      %p40 = por %p38, %p39
      %p41 = scmp.ne.s32.totalorder %s30, %s33
      %p42 = scmp.eq.s32.totalorder %s13, 8
      %p43 = por %p41, %p42
      %p44 = scmp.ne.s32.totalorder %s33, %s34
      %p45 = scmp.eq.s32.totalorder %s13, 0
      %p46 = por %p44, %p45
      %p47 = scmp.ne.s32.totalorder %s33, %s34
      %p48 = scmp.eq.s32.totalorder %s14, 8
      %p49 = por %p47, %p48
      %p51 = scmp.ne.s32.totalorder %s34, %s50
      %p52 = scmp.eq.s32.totalorder %s14, 0
      %p53 = por %p51, %p52
      %s54 = ssub.s32 %s16, %s23
      %p55 = scmp.eq.s32.totalorder %s54, 0
      %s57 = sadd.s32 %s56, 1
      %s58 = scalar_select %p55, %s56, %s57
      %p61 = pneg %p55
      %p62 = scmp.eq.s32.totalorder %s8, 8
      %p63 = por %p61, %p62
      %p64 = scmp.ne.s32.totalorder %s56, %s59
      %p65 = scmp.eq.s32.totalorder %s8, 0
      %p66 = por %p64, %p65
      %p67 = scmp.ne.s32.totalorder %s56, %s59
      %p68 = scmp.eq.s32.totalorder %s13, 8
      %p69 = por %p67, %p68
      %p70 = scmp.ne.s32.totalorder %s59, %s60
      %p71 = scmp.eq.s32.totalorder %s13, 0
      %p72 = por %p70, %p71
      %p73 = scmp.ne.s32.totalorder %s59, %s60
      %p74 = scmp.eq.s32.totalorder %s14, 8
      %p75 = por %p73, %p74
      %p77 = scmp.ne.s32.totalorder %s60, %s76
      %p78 = scmp.eq.s32.totalorder %s14, 0
      %p79 = por %p77, %p78
      %s80 = ssub.s32 %s15, %s27
      %s81 = ssub.s32 %s16, %s23
      %s82 = sor.u32 %s80, %s81
      %p83 = scmp.eq.s32.totalorder %s82, 0
      %s85 = sadd.s32 %s84, 1
      %s86 = scalar_select %p83, %s84, %s85
      %p89 = pneg %p83
      %p90 = scmp.eq.s32.totalorder %s8, 8
      %p91 = por %p89, %p90
      %p92 = scmp.ne.s32.totalorder %s84, %s87
      %p93 = scmp.eq.s32.totalorder %s8, 0
      %p94 = por %p92, %p93
      %p95 = scmp.ne.s32.totalorder %s84, %s87
      %p96 = scmp.eq.s32.totalorder %s13, 8
      %p97 = por %p95, %p96
      %p98 = scmp.ne.s32.totalorder %s87, %s88
      %p99 = scmp.eq.s32.totalorder %s13, 0
      %p100 = por %p98, %p99
      %p101 = scmp.ne.s32.totalorder %s87, %s88
      %p102 = scmp.eq.s32.totalorder %s14, 8
      %p103 = por %p101, %p102
      %p105 = scmp.ne.s32.totalorder %s88, %s104
      %p106 = scmp.eq.s32.totalorder %s14, 0
      %p107 = por %p105, %p106
      %p108 = scmp.le.s32.totalorder 1, %s8
      %p109 = scmp.lt.s32.totalorder %s8, 10
      %p110 = pnand %p108, %p109
      %p111 = pneg %p110
      // Predicated region
      $region9: #{dcp_dec_forward.7} parent=5 // pred_check
        _
      $region10: #{dcp_dec_forward.7} parent=5 // pred_check_branch
        %113 = sbr.rel (%p110) target = $region12
      $region11: #{dcp_dec_forward.7} parent=5 // pred_region
        %s114 = ssub.s32 %s8, 1
      $region12: #{dcp_dec_forward.7} parent=5 // pred_fallthru
        _
      %p115 = scmp.lt.s32.totalorder %s8, 9
      // Predicated region
      $region13: #{dcp_dec_forward.7} parent=5 // pred_check
        %p116 = pneg %p115
      $region14: #{dcp_dec_forward.7} parent=5 // pred_check_branch
        %118 = sbr.rel (%p116) target = $region16
      $region15: #{dcp_dec_forward.7} parent=5 // pred_region
        // Predicated region
        $region17: #{dcp_dec_forward.7} parent=15 // pred_check
          %p119 = pneg %p40
        $region18: #{dcp_dec_forward.7} parent=15 // pred_check_branch
          %121 = sbr.rel (%p119) target = $region20
        $region19: #{dcp_dec_forward.7} parent=15 // pred_region
          %s122 = smul.u32 16, %s15
          %p123 = scmp.lt.s32.totalorder %s122, 47
          %s124 = scalar_select %p123, %s122, 47
          %s125 = smul.addr %s124, 8
          %s126 = scalar_lea.vmem %s0, %s125
          %s127 = smul.u32 16, %s15
        $region20: #{dcp_dec_forward.7} parent=15 // pred_fallthru
          _
        // Predicated region
        $region21: #{dcp_dec_forward.7} parent=15 // pred_check
          %p128 = pneg %p66
        $region22: #{dcp_dec_forward.7} parent=15 // pred_check_branch
          %130 = sbr.rel (%p128) target = $region24
        $region23: #{dcp_dec_forward.7} parent=15 // pred_region
          %s131 = smul.u32 16, %s16
          %p132 = scmp.lt.s32.totalorder %s131, 47
          %s133 = scalar_select %p132, %s131, 47
          %s134 = smul.addr %s133, 8
          %s135 = scalar_lea.vmem %s1, %s134
          %s136 = smul.u32 16, %s16
        $region24: #{dcp_dec_forward.7} parent=15 // pred_fallthru
          _
      $region16: #{dcp_dec_forward.7} parent=5 // pred_fallthru
        _
      %p137 = scmp.le.s32.totalorder 1, %s8
      %p138 = scmp.lt.s32.totalorder %s8, 10
      %p139 = pnand %p137, %p138
      %p140 = pneg %p139
      // Predicated region
      $region25: #{dcp_dec_forward.7} parent=5 // pred_check
        _
      $region26: #{dcp_dec_forward.7} parent=5 // pred_check_branch
        %142 = sbr.rel (%p139) target = $region28
      $region27: #{dcp_dec_forward.7} parent=5 // pred_region
        %s143 = ssub.s32 %s8, 1
        %s144 = smul.u32 16, %s17
        %p145 = scmp.lt.s32.totalorder %s144, 47
        %s146 = scalar_select %p145, %s144, 47
        %s147 = smul.addr %s146, 8
        %s148 = scalar_lea.vmem %s0, %s147
        %p149 = pneg %p46
        %p150 = pneg %p43
        %s151 = smul.u32 16, %s18
        %p152 = scmp.lt.s32.totalorder %s151, 47
        %s153 = scalar_select %p152, %s151, 47
        %s154 = smul.addr %s153, 8
        %s155 = scalar_lea.vmem %s1, %s154
        %p156 = pneg %p72
        %p157 = pneg %p69
        %p158 = pneg %p100
        %p159 = pneg %p97
        %s160 = sand.u32 %s87, 1
        %s161 = sand.u32 %s87, 1
        %s162 = smul.addr %s161, 128
        %s163 = scalar_lea.vmem [#allocation2], %s162
        %s164 = smul.u32 16, %s17
        %p165 = scmp.lt.s32.totalorder %s164, 47
        %s166 = scalar_select %p165, %s164, 47
        %s167 = smul.addr %s166, 8
        %s168 = scalar_lea.vmem %s0, %s167
        %s169 = smul.u32 16, %s17
        %s170 = smul.u32 16, %s18
        %p171 = scmp.lt.s32.totalorder %s170, 47
        %s172 = scalar_select %p171, %s170, 47
        %s173 = smul.addr %s172, 8
        %s174 = scalar_lea.vmem %s1, %s173
        %s175 = smul.u32 16, %s18
        %s176 = smul.u32 16, %s17
        %v177 = vld [vmem:[%s168] sm:$0xff]
        %v178 = vld [vmem:[%s168 + $0x8] sm:$0xff]
        %v179 = vld [vmem:[%s168 + $0x10] sm:$0xff]
        %v180 = vld [vmem:[%s168 + $0x18] sm:$0xff]
        %v181 = vld [vmem:[%s168 + $0x20] sm:$0xff]
        %v182 = vld [vmem:[%s168 + $0x28] sm:$0xff]
        %v183 = vld [vmem:[%s168 + $0x30] sm:$0xff]
        %v184 = vld [vmem:[%s168 + $0x38] sm:$0xff]
        %v185 = vld [vmem:[%s168 + $0x40] sm:$0xff]
        %v186 = vld [vmem:[%s168 + $0x48] sm:$0xff]
        %v187 = vld [vmem:[%s168 + $0x50] sm:$0xff]
        %v188 = vld [vmem:[%s168 + $0x58] sm:$0xff]
        %v189 = vld [vmem:[%s168 + $0x60] sm:$0xff]
        %v190 = vld [vmem:[%s168 + $0x68] sm:$0xff]
        %v191 = vld [vmem:[%s168 + $0x70] sm:$0xff]
        %v192 = vld [vmem:[%s168 + $0x78] sm:$0xff]
        %v193 = vld [vmem:[%s174] sm:$0xff]
        %v194 = vld [vmem:[%s174 + $0x8] sm:$0xff]
        %v195 = vld [vmem:[%s174 + $0x10] sm:$0xff]
        %v196 = vld [vmem:[%s174 + $0x18] sm:$0xff]
        %v197 = vld [vmem:[%s174 + $0x20] sm:$0xff]
        %v198 = vld [vmem:[%s174 + $0x28] sm:$0xff]
        %v199 = vld [vmem:[%s174 + $0x30] sm:$0xff]
        %v200 = vld [vmem:[%s174 + $0x38] sm:$0xff]
        %v201 = vld [vmem:[%s174 + $0x40] sm:$0xff]
        %v202 = vld [vmem:[%s174 + $0x48] sm:$0xff]
        %v203 = vld [vmem:[%s174 + $0x50] sm:$0xff]
        %v204 = vld [vmem:[%s174 + $0x58] sm:$0xff]
        %v205 = vld [vmem:[%s174 + $0x60] sm:$0xff]
        %v206 = vld [vmem:[%s174 + $0x68] sm:$0xff]
        %v207 = vld [vmem:[%s174 + $0x70] sm:$0xff]
        %v208 = vld [vmem:[%s174 + $0x78] sm:$0xff]
        %209 = vmatpush.xpose.msra.mxu0 %v208
        %210 = vmatpush.xpose.msra.mxu0 %v207
        %211 = vmatpush.xpose.msra.mxu0 %v206
        %212 = vmatpush.xpose.msra.mxu0 %v205
        %213 = vmatpush.xpose.msra.mxu0 %v204
        %214 = vmatpush.xpose.msra.mxu0 %v203
        %215 = vmatpush.xpose.msra.mxu0 %v202
        %216 = vmatpush.xpose.msra.mxu0 %v201
        %217 = vmatpush.xpose.msra.mxu0 %v200
        %218 = vmatpush.xpose.msra.mxu0 %v199
        %219 = vmatpush.xpose.msra.mxu0 %v198
        %220 = vmatpush.xpose.msra.mxu0 %v197
        %221 = vmatpush.xpose.msra.mxu0 %v196
        %222 = vmatpush.xpose.msra.mxu0 %v195
        %223 = vmatpush.xpose.msra.mxu0 %v194
        %224 = vmatpush.xpose.msra.mxu0 %v193
        %225 = vmatmul.f32.gmra.mxu0 %v177
        %v226 = vpop.f32.mrf.mxu0
        %v227 = vadd.f32 0.0, %v226
        %228 = vmatmul.f32.gmra.mxu0 %v178
        %v229 = vpop.f32.mrf.mxu0
        %v230 = vadd.f32 0.0, %v229
        %231 = vmatmul.f32.gmra.mxu0 %v179
        %v232 = vpop.f32.mrf.mxu0
        %v233 = vadd.f32 0.0, %v232
        %234 = vmatmul.f32.gmra.mxu0 %v180
        %v235 = vpop.f32.mrf.mxu0
        %v236 = vadd.f32 0.0, %v235
        %237 = vmatmul.f32.gmra.mxu0 %v181
        %v238 = vpop.f32.mrf.mxu0
        %v239 = vadd.f32 0.0, %v238
        %240 = vmatmul.f32.gmra.mxu0 %v182
        %v241 = vpop.f32.mrf.mxu0
        %v242 = vadd.f32 0.0, %v241
        %243 = vmatmul.f32.gmra.mxu0 %v183
        %v244 = vpop.f32.mrf.mxu0
        %v245 = vadd.f32 0.0, %v244
        %246 = vmatmul.f32.gmra.mxu0 %v184
        %v247 = vpop.f32.mrf.mxu0
        %v248 = vadd.f32 0.0, %v247
        %249 = vmatmul.f32.gmra.mxu0 %v185
        %v250 = vpop.f32.mrf.mxu0
        %v251 = vadd.f32 0.0, %v250
        %252 = vmatmul.f32.gmra.mxu0 %v186
        %v253 = vpop.f32.mrf.mxu0
        %v254 = vadd.f32 0.0, %v253
        %255 = vmatmul.f32.gmra.mxu0 %v187
        %v256 = vpop.f32.mrf.mxu0
        %v257 = vadd.f32 0.0, %v256
        %258 = vmatmul.f32.gmra.mxu0 %v188
        %v259 = vpop.f32.mrf.mxu0
        %v260 = vadd.f32 0.0, %v259
        %261 = vmatmul.f32.gmra.mxu0 %v189
        %v262 = vpop.f32.mrf.mxu0
        %v263 = vadd.f32 0.0, %v262
        %264 = vmatmul.f32.gmra.mxu0 %v190
        %v265 = vpop.f32.mrf.mxu0
        %v266 = vadd.f32 0.0, %v265
        %267 = vmatmul.f32.gmra.mxu0 %v191
        %v268 = vpop.f32.mrf.mxu0
        %v269 = vadd.f32 0.0, %v268
        %270 = vmatmul.f32.gmra.mxu0 %v192
        %v271 = vpop.f32.mrf.mxu0
        %v272 = vadd.f32 0.0, %v271
        %273 = vdwg.mxu0
        %v274 = vxor.u32 %v227, 2147483648
        %v275 = vxor.u32 %v230, 2147483648
        %v276 = vxor.u32 %v233, 2147483648
        %v277 = vxor.u32 %v236, 2147483648
        %v278 = vxor.u32 %v239, 2147483648
        %v279 = vxor.u32 %v242, 2147483648
        %v280 = vxor.u32 %v245, 2147483648
        %v281 = vxor.u32 %v248, 2147483648
        %v282 = vxor.u32 %v251, 2147483648
        %v283 = vxor.u32 %v254, 2147483648
        %v284 = vxor.u32 %v257, 2147483648
        %v285 = vxor.u32 %v260, 2147483648
        %v286 = vxor.u32 %v263, 2147483648
        %v287 = vxor.u32 %v266, 2147483648
        %v288 = vxor.u32 %v269, 2147483648
        %v289 = vxor.u32 %v272, 2147483648
        %v290 = vmul.f32 %v274, 1.442695
        %v291 = vpow.pop %v290
        %v292 = vmul.f32 %v275, 1.442695
        %v293 = vpow.pop %v292
        %v294 = vmul.f32 %v276, 1.442695
        %v295 = vpow.pop %v294
        %v296 = vmul.f32 %v277, 1.442695
        %v297 = vpow.pop %v296
        %v298 = vmul.f32 %v278, 1.442695
        %v299 = vpow.pop %v298
        %v300 = vmul.f32 %v279, 1.442695
        %v301 = vpow.pop %v300
        %v302 = vmul.f32 %v280, 1.442695
        %v303 = vpow.pop %v302
        %v304 = vmul.f32 %v281, 1.442695
        %v305 = vpow.pop %v304
        %v306 = vmul.f32 %v282, 1.442695
        %v307 = vpow.pop %v306
        %v308 = vmul.f32 %v283, 1.442695
        %v309 = vpow.pop %v308
        %v310 = vmul.f32 %v284, 1.442695
        %v311 = vpow.pop %v310
        %v312 = vmul.f32 %v285, 1.442695
        %v313 = vpow.pop %v312
        %v314 = vmul.f32 %v286, 1.442695
        %v315 = vpow.pop %v314
        %v316 = vmul.f32 %v287, 1.442695
        %v317 = vpow.pop %v316
        %v318 = vmul.f32 %v288, 1.442695
        %v319 = vpow.pop %v318
        %v320 = vmul.f32 %v289, 1.442695
        %v321 = vpow.pop %v320
        %v322 = vadd.f32 %v291, 1.0
        %v323 = vadd.f32 %v293, 1.0
        %v324 = vadd.f32 %v295, 1.0
        %v325 = vadd.f32 %v297, 1.0
        %v326 = vadd.f32 %v299, 1.0
        %v327 = vadd.f32 %v301, 1.0
        %v328 = vadd.f32 %v303, 1.0
        %v329 = vadd.f32 %v305, 1.0
        %v330 = vadd.f32 %v307, 1.0
        %v331 = vadd.f32 %v309, 1.0
        %v332 = vadd.f32 %v311, 1.0
        %v333 = vadd.f32 %v313, 1.0
        %v334 = vadd.f32 %v315, 1.0
        %v335 = vadd.f32 %v317, 1.0
        %v336 = vadd.f32 %v319, 1.0
        %v337 = vadd.f32 %v321, 1.0
        %v338 = vrcp.pop %v322
        %v339 = vmul.f32 %v322, %v338
        %v340 = vsub.f32 1.0, %v339
        %v341 = vmul.f32 %v338, %v340
        %v342 = vadd.f32 %v338, %v341
        %vm343 = vweird.f32 %v322
        %vm344 = vweird.f32 %v338
        %vm345 = vmor %vm343, %vm344
        %v346 = vsel %vm345, %v338, %v342
        %v347 = vand.u32 2147483647, %v322
        %vm348 = vcmp.eq.f32.partialorder %v347, 8.507059e+37
        %v349 = vand.u32 %v322, 2147483648
        %v350 = vor.u32 1.1754944e-38, %v349
        %v351 = vsel %vm348, %v350, %v346
        %v352 = vmul.f32 1.0, %v351
        %v353 = vrcp.pop %v323
        %v354 = vmul.f32 %v323, %v353
        %v355 = vsub.f32 1.0, %v354
        %v356 = vmul.f32 %v353, %v355
        %v357 = vadd.f32 %v353, %v356
        %vm358 = vweird.f32 %v323
        %vm359 = vweird.f32 %v353
        %vm360 = vmor %vm358, %vm359
        %v361 = vsel %vm360, %v353, %v357
        %v362 = vand.u32 2147483647, %v323
        %vm363 = vcmp.eq.f32.partialorder %v362, 8.507059e+37
        %v364 = vand.u32 %v323, 2147483648
        %v365 = vor.u32 1.1754944e-38, %v364
        %v366 = vsel %vm363, %v365, %v361
        %v367 = vmul.f32 1.0, %v366
        %v368 = vrcp.pop %v324
        %v369 = vmul.f32 %v324, %v368
        %v370 = vsub.f32 1.0, %v369
        %v371 = vmul.f32 %v368, %v370
        %v372 = vadd.f32 %v368, %v371
        %vm373 = vweird.f32 %v324
        %vm374 = vweird.f32 %v368
        %vm375 = vmor %vm373, %vm374
        %v376 = vsel %vm375, %v368, %v372
        %v377 = vand.u32 2147483647, %v324
        %vm378 = vcmp.eq.f32.partialorder %v377, 8.507059e+37
        %v379 = vand.u32 %v324, 2147483648
        %v380 = vor.u32 1.1754944e-38, %v379
        %v381 = vsel %vm378, %v380, %v376
        %v382 = vmul.f32 1.0, %v381
        %v383 = vrcp.pop %v325
        %v384 = vmul.f32 %v325, %v383
        %v385 = vsub.f32 1.0, %v384
        %v386 = vmul.f32 %v383, %v385
        %v387 = vadd.f32 %v383, %v386
        %vm388 = vweird.f32 %v325
        %vm389 = vweird.f32 %v383
        %vm390 = vmor %vm388, %vm389
        %v391 = vsel %vm390, %v383, %v387
        %v392 = vand.u32 2147483647, %v325
        %vm393 = vcmp.eq.f32.partialorder %v392, 8.507059e+37
        %v394 = vand.u32 %v325, 2147483648
        %v395 = vor.u32 1.1754944e-38, %v394
        %v396 = vsel %vm393, %v395, %v391
        %v397 = vmul.f32 1.0, %v396
        %v398 = vrcp.pop %v326
        %v399 = vmul.f32 %v326, %v398
        %v400 = vsub.f32 1.0, %v399
        %v401 = vmul.f32 %v398, %v400
        %v402 = vadd.f32 %v398, %v401
        %vm403 = vweird.f32 %v326
        %vm404 = vweird.f32 %v398
        %vm405 = vmor %vm403, %vm404
        %v406 = vsel %vm405, %v398, %v402
        %v407 = vand.u32 2147483647, %v326
        %vm408 = vcmp.eq.f32.partialorder %v407, 8.507059e+37
        %v409 = vand.u32 %v326, 2147483648
        %v410 = vor.u32 1.1754944e-38, %v409
        %v411 = vsel %vm408, %v410, %v406
        %v412 = vmul.f32 1.0, %v411
        %v413 = vrcp.pop %v327
        %v414 = vmul.f32 %v327, %v413
        %v415 = vsub.f32 1.0, %v414
        %v416 = vmul.f32 %v413, %v415
        %v417 = vadd.f32 %v413, %v416
        %vm418 = vweird.f32 %v327
        %vm419 = vweird.f32 %v413
        %vm420 = vmor %vm418, %vm419
        %v421 = vsel %vm420, %v413, %v417
        %v422 = vand.u32 2147483647, %v327
        %vm423 = vcmp.eq.f32.partialorder %v422, 8.507059e+37
        %v424 = vand.u32 %v327, 2147483648
        %v425 = vor.u32 1.1754944e-38, %v424
        %v426 = vsel %vm423, %v425, %v421
        %v427 = vmul.f32 1.0, %v426
        %v428 = vrcp.pop %v328
        %v429 = vmul.f32 %v328, %v428
        %v430 = vsub.f32 1.0, %v429
        %v431 = vmul.f32 %v428, %v430
        %v432 = vadd.f32 %v428, %v431
        %vm433 = vweird.f32 %v328
        %vm434 = vweird.f32 %v428
        %vm435 = vmor %vm433, %vm434
        %v436 = vsel %vm435, %v428, %v432
        %v437 = vand.u32 2147483647, %v328
        %vm438 = vcmp.eq.f32.partialorder %v437, 8.507059e+37
        %v439 = vand.u32 %v328, 2147483648
        %v440 = vor.u32 1.1754944e-38, %v439
        %v441 = vsel %vm438, %v440, %v436
        %v442 = vmul.f32 1.0, %v441
        %v443 = vrcp.pop %v329
        %v444 = vmul.f32 %v329, %v443
        %v445 = vsub.f32 1.0, %v444
        %v446 = vmul.f32 %v443, %v445
        %v447 = vadd.f32 %v443, %v446
        %vm448 = vweird.f32 %v329
        %vm449 = vweird.f32 %v443
        %vm450 = vmor %vm448, %vm449
        %v451 = vsel %vm450, %v443, %v447
        %v452 = vand.u32 2147483647, %v329
        %vm453 = vcmp.eq.f32.partialorder %v452, 8.507059e+37
        %v454 = vand.u32 %v329, 2147483648
        %v455 = vor.u32 1.1754944e-38, %v454
        %v456 = vsel %vm453, %v455, %v451
        %v457 = vmul.f32 1.0, %v456
        %v458 = vrcp.pop %v330
        %v459 = vmul.f32 %v330, %v458
        %v460 = vsub.f32 1.0, %v459
        %v461 = vmul.f32 %v458, %v460
        %v462 = vadd.f32 %v458, %v461
        %vm463 = vweird.f32 %v330
        %vm464 = vweird.f32 %v458
        %vm465 = vmor %vm463, %vm464
        %v466 = vsel %vm465, %v458, %v462
        %v467 = vand.u32 2147483647, %v330
        %vm468 = vcmp.eq.f32.partialorder %v467, 8.507059e+37
        %v469 = vand.u32 %v330, 2147483648
        %v470 = vor.u32 1.1754944e-38, %v469
        %v471 = vsel %vm468, %v470, %v466
        %v472 = vmul.f32 1.0, %v471
        %v473 = vrcp.pop %v331
        %v474 = vmul.f32 %v331, %v473
        %v475 = vsub.f32 1.0, %v474
        %v476 = vmul.f32 %v473, %v475
        %v477 = vadd.f32 %v473, %v476
        %vm478 = vweird.f32 %v331
        %vm479 = vweird.f32 %v473
        %vm480 = vmor %vm478, %vm479
        %v481 = vsel %vm480, %v473, %v477
        %v482 = vand.u32 2147483647, %v331
        %vm483 = vcmp.eq.f32.partialorder %v482, 8.507059e+37
        %v484 = vand.u32 %v331, 2147483648
        %v485 = vor.u32 1.1754944e-38, %v484
        %v486 = vsel %vm483, %v485, %v481
        %v487 = vmul.f32 1.0, %v486
        %v488 = vrcp.pop %v332
        %v489 = vmul.f32 %v332, %v488
        %v490 = vsub.f32 1.0, %v489
        %v491 = vmul.f32 %v488, %v490
        %v492 = vadd.f32 %v488, %v491
        %vm493 = vweird.f32 %v332
        %vm494 = vweird.f32 %v488
        %vm495 = vmor %vm493, %vm494
        %v496 = vsel %vm495, %v488, %v492
        %v497 = vand.u32 2147483647, %v332
        %vm498 = vcmp.eq.f32.partialorder %v497, 8.507059e+37
        %v499 = vand.u32 %v332, 2147483648
        %v500 = vor.u32 1.1754944e-38, %v499
        %v501 = vsel %vm498, %v500, %v496
        %v502 = vmul.f32 1.0, %v501
        %v503 = vrcp.pop %v333
        %v504 = vmul.f32 %v333, %v503
        %v505 = vsub.f32 1.0, %v504
        %v506 = vmul.f32 %v503, %v505
        %v507 = vadd.f32 %v503, %v506
        %vm508 = vweird.f32 %v333
        %vm509 = vweird.f32 %v503
        %vm510 = vmor %vm508, %vm509
        %v511 = vsel %vm510, %v503, %v507
        %v512 = vand.u32 2147483647, %v333
        %vm513 = vcmp.eq.f32.partialorder %v512, 8.507059e+37
        %v514 = vand.u32 %v333, 2147483648
        %v515 = vor.u32 1.1754944e-38, %v514
        %v516 = vsel %vm513, %v515, %v511
        %v517 = vmul.f32 1.0, %v516
        %v518 = vrcp.pop %v334
        %v519 = vmul.f32 %v334, %v518
        %v520 = vsub.f32 1.0, %v519
        %v521 = vmul.f32 %v518, %v520
        %v522 = vadd.f32 %v518, %v521
        %vm523 = vweird.f32 %v334
        %vm524 = vweird.f32 %v518
        %vm525 = vmor %vm523, %vm524
        %v526 = vsel %vm525, %v518, %v522
        %v527 = vand.u32 2147483647, %v334
        %vm528 = vcmp.eq.f32.partialorder %v527, 8.507059e+37
        %v529 = vand.u32 %v334, 2147483648
        %v530 = vor.u32 1.1754944e-38, %v529
        %v531 = vsel %vm528, %v530, %v526
        %v532 = vmul.f32 1.0, %v531
        %v533 = vrcp.pop %v335
        %v534 = vmul.f32 %v335, %v533
        %v535 = vsub.f32 1.0, %v534
        %v536 = vmul.f32 %v533, %v535
        %v537 = vadd.f32 %v533, %v536
        %vm538 = vweird.f32 %v335
        %vm539 = vweird.f32 %v533
        %vm540 = vmor %vm538, %vm539
        %v541 = vsel %vm540, %v533, %v537
        %v542 = vand.u32 2147483647, %v335
        %vm543 = vcmp.eq.f32.partialorder %v542, 8.507059e+37
        %v544 = vand.u32 %v335, 2147483648
        %v545 = vor.u32 1.1754944e-38, %v544
        %v546 = vsel %vm543, %v545, %v541
        %v547 = vmul.f32 1.0, %v546
        %v548 = vrcp.pop %v336
        %v549 = vmul.f32 %v336, %v548
        %v550 = vsub.f32 1.0, %v549
        %v551 = vmul.f32 %v548, %v550
        %v552 = vadd.f32 %v548, %v551
        %vm553 = vweird.f32 %v336
        %vm554 = vweird.f32 %v548
        %vm555 = vmor %vm553, %vm554
        %v556 = vsel %vm555, %v548, %v552
        %v557 = vand.u32 2147483647, %v336
        %vm558 = vcmp.eq.f32.partialorder %v557, 8.507059e+37
        %v559 = vand.u32 %v336, 2147483648
        %v560 = vor.u32 1.1754944e-38, %v559
        %v561 = vsel %vm558, %v560, %v556
        %v562 = vmul.f32 1.0, %v561
        %v563 = vrcp.pop %v337
        %v564 = vmul.f32 %v337, %v563
        %v565 = vsub.f32 1.0, %v564
        %v566 = vmul.f32 %v563, %v565
        %v567 = vadd.f32 %v563, %v566
        %vm568 = vweird.f32 %v337
        %vm569 = vweird.f32 %v563
        %vm570 = vmor %vm568, %vm569
        %v571 = vsel %vm570, %v563, %v567
        %v572 = vand.u32 2147483647, %v337
        %vm573 = vcmp.eq.f32.partialorder %v572, 8.507059e+37
        %v574 = vand.u32 %v337, 2147483648
        %v575 = vor.u32 1.1754944e-38, %v574
        %v576 = vsel %vm573, %v575, %v571
        %v577 = vmul.f32 1.0, %v576
        %578 = vst [vmem:[%s163] sm:$0xff] %v352
        %579 = vst [vmem:[%s163 + $0x8] sm:$0xff] %v367
        %580 = vst [vmem:[%s163 + $0x10] sm:$0xff] %v382
        %581 = vst [vmem:[%s163 + $0x18] sm:$0xff] %v397
        %582 = vst [vmem:[%s163 + $0x20] sm:$0xff] %v412
        %583 = vst [vmem:[%s163 + $0x28] sm:$0xff] %v427
        %584 = vst [vmem:[%s163 + $0x30] sm:$0xff] %v442
        %585 = vst [vmem:[%s163 + $0x38] sm:$0xff] %v457
        %586 = vst [vmem:[%s163 + $0x40] sm:$0xff] %v472
        %587 = vst [vmem:[%s163 + $0x48] sm:$0xff] %v487
        %588 = vst [vmem:[%s163 + $0x50] sm:$0xff] %v502
        %589 = vst [vmem:[%s163 + $0x58] sm:$0xff] %v517
        %590 = vst [vmem:[%s163 + $0x60] sm:$0xff] %v532
        %591 = vst [vmem:[%s163 + $0x68] sm:$0xff] %v547
        %592 = vst [vmem:[%s163 + $0x70] sm:$0xff] %v562
        %593 = vst [vmem:[%s163 + $0x78] sm:$0xff] %v577
        %s594 = sand.u32 %s87, 1
        %s595 = sand.u32 %s87, 1
        %s596 = smul.addr %s595, 128
        %s597 = scalar_lea.vmem [#allocation2], %s596
        // Predicated region
        $region29: #{dcp_dec_forward.7} parent=27 // pred_check
          %p598 = pneg %p97
        $region30: #{dcp_dec_forward.7} parent=27 // pred_check_branch
          %600 = sbr.rel (%p598) target = $region32
        $region31: #{dcp_dec_forward.7} parent=27 // pred_region
          %s601 = smul.u32 16, %s17
          %s602 = smul.addr %s601, 3
          %s603 = sadd.s32 %s18, %s602
          %s604 = smul.addr %s603, 8
          %s605 = scalar_lea.vmem %s2, %s604
          // Predicated region
          $region33: #{dcp_dec_forward.7} parent=31 // pred_check
            _
          $region34: #{dcp_dec_forward.7} parent=31 // pred_check_branch
            %607 = sbr.rel (0) target = $region36
          $region35: #{dcp_dec_forward.7} parent=31 // pred_region
            // Predicated region
            $region37: #{dcp_dec_forward.7} parent=35 // pred_check
              _
            $region38: #{dcp_dec_forward.7} parent=35 // pred_check_branch
              %609 = sbr.rel (0) target = $region40
            $region39: #{dcp_dec_forward.7} parent=35 // pred_region
              // Predicated region
              $region52: #{dcp_dec_forward.7} parent=39 // pred_check
                _
              $region53: #{dcp_dec_forward.7} parent=39 // pred_check_branch
                %655 = sbr.rel (0) target = $region55
              $region54: #{dcp_dec_forward.7} parent=39 // pred_region
                loop: start=0, step=1, limit=1
                $region56: #{dcp_dec_forward.7} parent=54 // loop_pre_header
                  _
                $region57: #{dcp_dec_forward.7} parent=54 // loop_header
                  %s657 = sphi 0, %s661
                  %p658 = scmp.ge.s32.totalorder %s657, 1
                  %s662 = sphi %s597, %s597
                  %s663 = sphi %s605, %s605
                $region58: #{dcp_dec_forward.7} parent=54 // loop_header_branch
                  %660 = sbr.rel (%p658) target = $region62
                $region59: #{dcp_dec_forward.7} parent=54 // loop_body
                  %v664 = vld [vmem:[%s662] sm:$0xff]
                  %665 = vst [vmem:[%s663] sm:$0xff] %v664
                  %v666 = vld [vmem:[%s662 + $0x8] sm:$0xff]
                  %667 = vst [vmem:[%s663 + $0x18] sm:$0xff] %v666
                  %v668 = vld [vmem:[%s662 + $0x10] sm:$0xff]
                  %669 = vst [vmem:[%s663 + $0x30] sm:$0xff] %v668
                  %v670 = vld [vmem:[%s662 + $0x18] sm:$0xff]
                  %671 = vst [vmem:[%s663 + $0x48] sm:$0xff] %v670
                  %v672 = vld [vmem:[%s662 + $0x20] sm:$0xff]
                  %673 = vst [vmem:[%s663 + $0x60] sm:$0xff] %v672
                  %v674 = vld [vmem:[%s662 + $0x28] sm:$0xff]
                  %675 = vst [vmem:[%s663 + $0x78] sm:$0xff] %v674
                  %v676 = vld [vmem:[%s662 + $0x30] sm:$0xff]
                  %677 = vst [vmem:[%s663 + $0x90] sm:$0xff] %v676
                  %v678 = vld [vmem:[%s662 + $0x38] sm:$0xff]
                  %679 = vst [vmem:[%s663 + $0xa8] sm:$0xff] %v678
                  %v680 = vld [vmem:[%s662 + $0x40] sm:$0xff]
                  %681 = vst [vmem:[%s663 + $0xc0] sm:$0xff] %v680
                  %v682 = vld [vmem:[%s662 + $0x48] sm:$0xff]
                  %683 = vst [vmem:[%s663 + $0xd8] sm:$0xff] %v682
                  %v684 = vld [vmem:[%s662 + $0x50] sm:$0xff]
                  %685 = vst [vmem:[%s663 + $0xf0] sm:$0xff] %v684
                  %v686 = vld [vmem:[%s662 + $0x58] sm:$0xff]
                  %687 = vst [vmem:[%s663 + $0x108] sm:$0xff] %v686
                  %v688 = vld [vmem:[%s662 + $0x60] sm:$0xff]
                  %689 = vst [vmem:[%s663 + $0x120] sm:$0xff] %v688
                  %v690 = vld [vmem:[%s662 + $0x68] sm:$0xff]
                  %691 = vst [vmem:[%s663 + $0x138] sm:$0xff] %v690
                  %v692 = vld [vmem:[%s662 + $0x70] sm:$0xff]
                  %693 = vst [vmem:[%s663 + $0x150] sm:$0xff] %v692
                  %v694 = vld [vmem:[%s662 + $0x78] sm:$0xff]
                  %695 = vst [vmem:[%s663 + $0x168] sm:$0xff] %v694
                $region60: #{dcp_dec_forward.7} parent=54 // loop_footer
                  %s661 = sadd.s32 1, %s657
                $region61: #{dcp_dec_forward.7} parent=54 // loop_footer_branch
                  %656 = sbr.rel target = $region57
                $region62: #{dcp_dec_forward.7} parent=54 // loop_exit
                  _
              $region55: #{dcp_dec_forward.7} parent=39 // pred_fallthru
                _
              // Predicated region
              $region63: #{dcp_dec_forward.7} parent=39 // pred_check
                _
              $region64: #{dcp_dec_forward.7} parent=39 // pred_check_branch
                %697 = sbr.rel target = $region66
              $region65: #{dcp_dec_forward.7} parent=39 // pred_region
                _
              $region66: #{dcp_dec_forward.7} parent=39 // pred_fallthru
                _
            $region40: #{dcp_dec_forward.7} parent=35 // pred_fallthru
              _
            // Predicated region
            $region41: #{dcp_dec_forward.7} parent=35 // pred_check
              _
            $region42: #{dcp_dec_forward.7} parent=35 // pred_check_branch
              %611 = sbr.rel target = $region44
            $region43: #{dcp_dec_forward.7} parent=35 // pred_region
              %s613 = ssub.s32 256, 1
              loop: start=0, step=1, limit=1
              $region45: #{dcp_dec_forward.7} parent=43 // loop_pre_header
                _
              $region46: #{dcp_dec_forward.7} parent=43 // loop_header
                %s615 = sphi 0, %s619
                %p616 = scmp.ge.s32.totalorder %s615, 1
                %s620 = sphi %s597, %s597
                %s621 = sphi %s605, %s605
              $region47: #{dcp_dec_forward.7} parent=43 // loop_header_branch
                %618 = sbr.rel (%p616) target = $region51
              $region48: #{dcp_dec_forward.7} parent=43 // loop_body
                %v622 = vld [vmem:[%s620] sm:%s613]
                %623 = vst [vmem:[%s621] sm:%s613] %v622
                %v624 = vld [vmem:[%s620 + $0x8] sm:%s613]
                %625 = vst [vmem:[%s621 + $0x18] sm:%s613] %v624
                %v626 = vld [vmem:[%s620 + $0x10] sm:%s613]
                %627 = vst [vmem:[%s621 + $0x30] sm:%s613] %v626
                %v628 = vld [vmem:[%s620 + $0x18] sm:%s613]
                %629 = vst [vmem:[%s621 + $0x48] sm:%s613] %v628
                %v630 = vld [vmem:[%s620 + $0x20] sm:%s613]
                %631 = vst [vmem:[%s621 + $0x60] sm:%s613] %v630
                %v632 = vld [vmem:[%s620 + $0x28] sm:%s613]
                %633 = vst [vmem:[%s621 + $0x78] sm:%s613] %v632
                %v634 = vld [vmem:[%s620 + $0x30] sm:%s613]
                %635 = vst [vmem:[%s621 + $0x90] sm:%s613] %v634
                %v636 = vld [vmem:[%s620 + $0x38] sm:%s613]
                %637 = vst [vmem:[%s621 + $0xa8] sm:%s613] %v636
                %v638 = vld [vmem:[%s620 + $0x40] sm:%s613]
                %639 = vst [vmem:[%s621 + $0xc0] sm:%s613] %v638
                %v640 = vld [vmem:[%s620 + $0x48] sm:%s613]
                %641 = vst [vmem:[%s621 + $0xd8] sm:%s613] %v640
                %v642 = vld [vmem:[%s620 + $0x50] sm:%s613]
                %643 = vst [vmem:[%s621 + $0xf0] sm:%s613] %v642
                %v644 = vld [vmem:[%s620 + $0x58] sm:%s613]
                %645 = vst [vmem:[%s621 + $0x108] sm:%s613] %v644
                %v646 = vld [vmem:[%s620 + $0x60] sm:%s613]
                %647 = vst [vmem:[%s621 + $0x120] sm:%s613] %v646
                %v648 = vld [vmem:[%s620 + $0x68] sm:%s613]
                %649 = vst [vmem:[%s621 + $0x138] sm:%s613] %v648
                %v650 = vld [vmem:[%s620 + $0x70] sm:%s613]
                %651 = vst [vmem:[%s621 + $0x150] sm:%s613] %v650
                %v652 = vld [vmem:[%s620 + $0x78] sm:%s613]
                %653 = vst [vmem:[%s621 + $0x168] sm:%s613] %v652
              $region49: #{dcp_dec_forward.7} parent=43 // loop_footer
                %s619 = sadd.s32 1, %s615
              $region50: #{dcp_dec_forward.7} parent=43 // loop_footer_branch
                %614 = sbr.rel target = $region46
              $region51: #{dcp_dec_forward.7} parent=43 // loop_exit
                _
            $region44: #{dcp_dec_forward.7} parent=35 // pred_fallthru
              _
          $region36: #{dcp_dec_forward.7} parent=31 // pred_fallthru
            _
          %698 = vnop
        $region32: #{dcp_dec_forward.7} parent=27 // pred_fallthru
          _
      $region28: #{dcp_dec_forward.7} parent=5 // pred_fallthru
        _
      %p699 = scmp.le.s32.totalorder 2, %s8
      // Predicated region
      $region67: #{dcp_dec_forward.7} parent=5 // pred_check
        %p700 = pneg %p699
      $region68: #{dcp_dec_forward.7} parent=5 // pred_check_branch
        %702 = sbr.rel (%p700) target = $region70
      $region69: #{dcp_dec_forward.7} parent=5 // pred_region
        %s703 = ssub.s32 %s8, 2
        // Predicated region
        $region71: #{dcp_dec_forward.7} parent=69 // pred_check
          %p704 = pneg %p103
        $region72: #{dcp_dec_forward.7} parent=69 // pred_check_branch
          %706 = sbr.rel (%p704) target = $region74
        $region73: #{dcp_dec_forward.7} parent=69 // pred_region
          %s707 = sand.u32 %s88, 1
          %s708 = sand.u32 %s88, 1
          %s709 = smul.addr %s708, 128
          %s710 = scalar_lea.vmem [#allocation2], %s709
        $region74: #{dcp_dec_forward.7} parent=69 // pred_fallthru
          _
      $region70: #{dcp_dec_forward.7} parent=5 // pred_fallthru
        _
    $region6: #{dcp_dec_forward.7} parent=1 // loop_footer
      %s12 = sadd.s32 1, %s8
    $region7: #{dcp_dec_forward.7} parent=1 // loop_footer_branch
      %7 = sbr.rel target = $region3
    $region8: #{dcp_dec_forward.7} parent=1 // loop_exit
      _

</llo_original>
